<compile_context>
chip_gen: v7x
topology: tpu7x:2x2x1
jax: 0.10.0
libtpu: 0.0.40
codegen_flags: <defaults>
</compile_context>

<pallas_src>
import numpy as np

import jax
import jax.numpy as jnp
from jax import lax
from jax.experimental import pallas as pl
from jax.experimental.pallas import tpu as pltpu

FILTER_SIZES = (1, 2, 4, 8)
EPS = 1e-6


# --------------------------------------------------------------------------
# Pallas kernel: one (batch, depth) slice per grid step.
# --------------------------------------------------------------------------
def _psp_kernel(x_ref, p2_ref, p4_ref, p8_ref,
                m2_ref, m4_ref, m8_ref,
                wbr_ref, bbr_ref,
                wfx_ref, wfb_ref, bias_ref, gf_ref, betaf_ref,
                out_ref):
    f32 = jnp.float32
    bf16 = jnp.bfloat16

    x = x_ref[0]                                      # (HW, C) bf16

    def channel_norm(t):                              # LN over channels, no affine
        u = jnp.mean(t, axis=-1, keepdims=True)
        d = t - u
        var = jnp.mean(d * d, axis=-1, keepdims=True)
        return d * lax.rsqrt(var + EPS)

    # Fused "concat + final 1x1 conv": raw-x slice of the final weight plus the
    # pre-folded bias (out_b + sum_k beta_k @ Wf_k).
    acc = jnp.dot(x, wfx_ref[...], preferred_element_type=f32) + bias_ref[0]   # (HW, Cout)

    def branch(pooled, m_ref, k):
        # 1x1 conv on the *pooled* tensor (conv and bilinear upsample commute).
        t = jnp.dot(pooled, wbr_ref[k], preferred_element_type=f32) + bbr_ref[k]   # (P, C4)
        if m_ref is not None:
            # bilinear align_corners=True upsample == one constant matmul
            t = jnp.dot(m_ref[...], t.astype(bf16), preferred_element_type=f32)    # (HW, C4)
        t = channel_norm(t)                           # branch-LN affine folded into wfb/bias
        # this concat-part's slice of the fused final conv (gamma pre-scaled)
        return jnp.dot(t.astype(bf16), wfb_ref[k], preferred_element_type=f32)     # (HW, Cout)

    acc = acc + branch(x, None, 0)              # filter 1: pool/upsample = identity
    acc = acc + branch(p2_ref[0], m2_ref, 1)    # filter 2
    acc = acc + branch(p4_ref[0], m4_ref, 2)    # filter 4
    acc = acc + branch(p8_ref[0], m8_ref, 3)    # filter 8

    # final channels-first LayerNorm over Cout (affine kept).
    u = jnp.mean(acc, axis=-1, keepdims=True)
    d = acc - u
    var = jnp.mean(d * d, axis=-1, keepdims=True)
    out = d * lax.rsqrt(var + EPS) * gf_ref[0] + betaf_ref[0]
    out_ref[0] = out.astype(out_ref.dtype)


# --------------------------------------------------------------------------
# Host-side constant interpolation matrices (align_corners=True bilinear).
# --------------------------------------------------------------------------
def _interp_matrix(out_size, in_size):
    U = np.zeros((out_size, in_size), np.float64)
    if in_size == 1:
        U[:, 0] = 1.0
        return U
    for o in range(out_size):
        src = o * (in_size - 1) / (out_size - 1) if out_size > 1 else 0.0
        lo = min(int(np.floor(src)), in_size - 1)
        hi = min(lo + 1, in_size - 1)
        f = src - lo
        U[o, lo] += 1.0 - f
        U[o, hi] += f
    return U


def _upsample_matrix(H, W, i):
    # rows indexed h*W + w, cols indexed hp*(W//i) + wp
    return np.kron(_interp_matrix(H, H // i), _interp_matrix(W, W // i))


# --------------------------------------------------------------------------
# Wrapper: layout glue + pallas_call.
# --------------------------------------------------------------------------
def psp_pooling(x_ncdhw, raw):
    """x_ncdhw: (N, C, D, H, W) float32.  Returns (N, Cout, D, H, W) float32."""
    N, C, D, H, W = x_ncdhw.shape
    n_f = len(FILTER_SIZES)
    C4 = C // n_f
    Cout = raw["out_w"].shape[0]
    HW = H * W
    ND = N * D

    # NCDHW -> NDHWC (channels on the lane axis).
    x = jnp.transpose(x_ncdhw, (0, 2, 3, 4, 1)).astype(jnp.float32)

    # TODO(synk): MaxPool3d window reduction done as JAX glue (see header note).
    def pool(i):
        return x.reshape(N, D, H // i, i, W // i, i, C).max(axis=(3, 5))

    xf = x.reshape(ND, HW, C).astype(jnp.bfloat16)
    p2 = pool(2).reshape(ND, HW // 4, C).astype(jnp.bfloat16)
    p4 = pool(4).reshape(ND, HW // 16, C).astype(jnp.bfloat16)
    p8 = pool(8).reshape(ND, HW // 64, C).astype(jnp.bfloat16)

    m2 = jnp.asarray(_upsample_matrix(H, W, 2), jnp.bfloat16)   # (HW, HW/4)
    m4 = jnp.asarray(_upsample_matrix(H, W, 4), jnp.bfloat16)   # (HW, HW/16)
    m8 = jnp.asarray(_upsample_matrix(H, W, 8), jnp.bfloat16)   # (HW, HW/64)

    # Pack parameters (branch order = filter_size order = concat order).
    wbr = jnp.stack([w.T for w in raw["branch_w"]]).astype(jnp.bfloat16)        # (4, C, C4)
    bbr = jnp.stack(raw["branch_b"]).astype(jnp.float32)                        # (4, C4)
    wfx = raw["out_w"][:, :C].T.astype(jnp.bfloat16)                            # (C, Cout)

    # Fold each branch's LayerNorm affine into its slice of the final conv:
    #   LN(t) @ Wk = norm(t) @ (gamma_k[:,None] * Wk) + beta_k @ Wk
    wfb_list = []
    bias = raw["out_b"].astype(jnp.float32)
    for k in range(n_f):
        wk = raw["out_w"][:, C + k * C4: C + (k + 1) * C4].T.astype(jnp.float32)   # (C4, Cout)
        wfb_list.append(raw["branch_ln_w"][k][:, None].astype(jnp.float32) * wk)
        bias = bias + raw["branch_ln_b"][k].astype(jnp.float32) @ wk
    wfb = jnp.stack(wfb_list).astype(jnp.bfloat16)                               # (4, C4, Cout)
    bias = bias.reshape(1, Cout).astype(jnp.float32)
    gf = raw["out_ln_w"].reshape(1, Cout).astype(jnp.float32)
    betaf = raw["out_ln_b"].reshape(1, Cout).astype(jnp.float32)

    def rep(shape):                    # replicated (parameter) arrays
        nd = len(shape)
        return pl.BlockSpec(shape, lambda g, nd=nd: (0,) * nd)

    def per_step(rows, ch):            # per-(n, d) data slabs
        return pl.BlockSpec((1, rows, ch), lambda g: (g, 0, 0))

    # Advisory cost estimate for XLA's scheduler around the custom call.
    pooled_rows = [HW, HW // 4, HW // 16, HW // 64]
    flops_step = 2 * HW * C * Cout
    for k, P in enumerate(pooled_rows):
        flops_step += 2 * P * C * C4 + 2 * HW * C4 * Cout
        if k > 0:
            flops_step += 2 * HW * P * C4
    bytes_accessed = int(
        2 * ND * (HW + HW // 4 + HW // 16 + HW // 64) * C          # bf16 data in
        + 2 * (m2.size + m4.size + m8.size + wbr.size + wfb.size + wfx.size)
        + 4 * ND * HW * Cout)                                      # f32 out
    cost = pl.CostEstimate(flops=int(ND * flops_step),
                           transcendentals=int(ND * HW * (n_f + 1)),
                           bytes_accessed=bytes_accessed)

    out = pl.pallas_call(
        _psp_kernel,
        out_shape=jax.ShapeDtypeStruct((ND, HW, Cout), jnp.float32),
        grid_spec=pltpu.PrefetchScalarGridSpec(
            num_scalar_prefetch=0,
            grid=(ND,),
            in_specs=[
                per_step(HW, C),            # x
                per_step(HW // 4, C),       # pooled, filter 2
                per_step(HW // 16, C),      # pooled, filter 4
                per_step(HW // 64, C),      # pooled, filter 8
                rep(m2.shape), rep(m4.shape), rep(m8.shape),
                rep(wbr.shape), rep(bbr.shape),
                rep(wfx.shape), rep(wfb.shape), rep(bias.shape),
                rep(gf.shape), rep(betaf.shape),
            ],
            out_specs=pl.BlockSpec((1, HW, Cout), lambda g: (g, 0, 0)),
        ),
        compiler_params=pltpu.CompilerParams(
            dimension_semantics=("parallel",),
            vmem_limit_bytes=32 * 1024 * 1024),
        cost_estimate=cost,
    )(xf, p2, p4, p8, m2, m4, m8, wbr, bbr, wfx, wfb, bias, gf, betaf)

    out = out.reshape(N, D, H, W, Cout)
    return jnp.transpose(out, (0, 4, 1, 2, 3))        # back to NCDHW


# --------------------------------------------------------------------------
# Pure-JAX f32 reference following the original PyTorch op order exactly:
# pool -> upsample -> 1x1 conv -> LN, concat, 1x1 conv -> LN.
# --------------------------------------------------------------------------
def psp_pooling_ref(x_ncdhw, raw):
    x = x_ncdhw.astype(jnp.float32)
    N, C, D, H, W = x.shape
    hi = lax.Precision.HIGHEST

    def channels_first_ln(y, w, b):
        u = y.mean(1, keepdims=True)
        s = ((y - u) ** 2).mean(1, keepdims=True)
        y = (y - u) / jnp.sqrt(s + EPS)
        return w[None, :, None, None, None] * y + b[None, :, None, None, None]

    branches = []
    for k, i in enumerate(FILTER_SIZES):
        p = x.reshape(N, C, D, H // i, i, W // i, i).max(axis=(4, 6))
        Uh = jnp.asarray(_interp_matrix(H, H // i), jnp.float32)
        Uw = jnp.asarray(_interp_matrix(W, W // i), jnp.float32)
        up = jnp.einsum('ha,ncdab,wb->ncdhw', Uh, p, Uw, precision=hi)
        y = jnp.einsum('oc,ncdhw->nodhw', raw["branch_w"][k], up, precision=hi) \
            + raw["branch_b"][k][None, :, None, None, None]
        branches.append(channels_first_ln(y, raw["branch_ln_w"][k], raw["branch_ln_b"][k]))

    total = jnp.concatenate([x] + branches, axis=1)
    y = jnp.einsum('oc,ncdhw->nodhw', raw["out_w"], total, precision=hi) \
        + raw["out_b"][None, :, None, None, None]
    return channels_first_ln(y, raw["out_ln_w"], raw["out_ln_b"])


# --------------------------------------------------------------------------
# Deterministic synthetic parameters matching the module's shapes.
# --------------------------------------------------------------------------
def init_params(key, c_in, c_out):
    c4 = c_in // len(FILTER_SIZES)
    ks = jax.random.split(key, 4 * len(FILTER_SIZES) + 4)
    raw = {"branch_w": [], "branch_b": [], "branch_ln_w": [], "branch_ln_b": []}
    idx = 0
    for _ in FILTER_SIZES:
        raw["branch_w"].append(0.2 * jax.random.normal(ks[idx], (c4, c_in), jnp.float32)); idx += 1
        raw["branch_b"].append(0.05 * jax.random.normal(ks[idx], (c4,), jnp.float32)); idx += 1
        raw["branch_ln_w"].append(1.0 + 0.2 * jax.random.normal(ks[idx], (c4,), jnp.float32)); idx += 1
        raw["branch_ln_b"].append(0.1 * jax.random.normal(ks[idx], (c4,), jnp.float32)); idx += 1
    raw["out_w"] = 0.15 * jax.random.normal(ks[idx], (c_out, 2 * c_in), jnp.float32); idx += 1
    raw["out_b"] = 0.05 * jax.random.normal(ks[idx], (c_out,), jnp.float32); idx += 1
    raw["out_ln_w"] = 1.0 + 0.2 * jax.random.normal(ks[idx], (c_out,), jnp.float32); idx += 1
    raw["out_ln_b"] = 0.1 * jax.random.normal(ks[idx], (c_out,), jnp.float32); idx += 1
    return raw


if __name__ == "__main__":
    key = jax.random.PRNGKey(0)
    kx, kp = jax.random.split(key)
    N, C, D, H, W = 2, 32, 4, 16, 16          # in_channel=32 (div by 4), H,W div by 8
    Cout = 32
    x = jax.random.normal(kx, (N, C, D, H, W), jnp.float32)
    raw = init_params(kp, C, Cout)

    psp = jax.jit(psp_pooling)
    out = jax.block_until_ready(psp(x, raw))
    assert out.shape == (N, Cout, D, H, W)
    assert bool(jnp.all(jnp.isfinite(out)))

    ref = jax.block_until_ready(psp_pooling_ref(x, raw))
    max_err = float(jnp.max(jnp.abs(out - ref)))
    assert bool(jnp.allclose(out, ref, rtol=3e-2, atol=3e-2)), \
        f"mismatch vs JAX reference (max abs err {max_err})"

    print("KERNEL_OK")
</pallas_src>

<mosaic_0001>
module attributes {stable_mosaic.version = 11 : i64} {
  func.func @_psp_kernel(%arg0: i32, %arg1: memref<1x256x32xbf16, #tpu.memory_space<vmem>>, %arg2: memref<1x64x32xbf16, #tpu.memory_space<vmem>>, %arg3: memref<1x16x32xbf16, #tpu.memory_space<vmem>>, %arg4: memref<1x4x32xbf16, #tpu.memory_space<vmem>>, %arg5: memref<256x64xbf16, #tpu.memory_space<vmem>>, %arg6: memref<256x16xbf16, #tpu.memory_space<vmem>>, %arg7: memref<256x4xbf16, #tpu.memory_space<vmem>>, %arg8: memref<4x32x8xbf16, #tpu.memory_space<vmem>>, %arg9: memref<4x8xf32, #tpu.memory_space<vmem>>, %arg10: memref<32x32xbf16, #tpu.memory_space<vmem>>, %arg11: memref<4x8x32xbf16, #tpu.memory_space<vmem>>, %arg12: memref<1x32xf32, #tpu.memory_space<vmem>>, %arg13: memref<1x32xf32, #tpu.memory_space<vmem>>, %arg14: memref<1x32xf32, #tpu.memory_space<vmem>>, %arg15: memref<1x256x32xf32, #tpu.memory_space<vmem>>) attributes {dimension_semantics = [#tpu.dimension_semantics<parallel>], iteration_bounds = array<i64: 8>, scalar_prefetch = 0 : i64, scratch_operands = 0 : i64, tpu.core_type = #tpu.core_type<tc>, window_params = [{transform_indices = @transform_0, window_bounds = array<i64: 1, 256, 32>}, {transform_indices = @transform_1, window_bounds = array<i64: 1, 64, 32>}, {transform_indices = @transform_2, window_bounds = array<i64: 1, 16, 32>}, {transform_indices = @transform_3, window_bounds = array<i64: 1, 4, 32>}, {pipeline_mode = #tpu.pipeline_mode<synchronous>, transform_indices = @transform_4, window_bounds = array<i64: 256, 64>}, {pipeline_mode = #tpu.pipeline_mode<synchronous>, transform_indices = @transform_5, window_bounds = array<i64: 256, 16>}, {pipeline_mode = #tpu.pipeline_mode<synchronous>, transform_indices = @transform_6, window_bounds = array<i64: 256, 4>}, {pipeline_mode = #tpu.pipeline_mode<synchronous>, transform_indices = @transform_7, window_bounds = array<i64: 4, 32, 8>}, {pipeline_mode = #tpu.pipeline_mode<synchronous>, transform_indices = @transform_8, window_bounds = array<i64: 4, 8>}, {pipeline_mode = #tpu.pipeline_mode<synchronous>, transform_indices = @transform_9, window_bounds = array<i64: 32, 32>}, {pipeline_mode = #tpu.pipeline_mode<synchronous>, transform_indices = @transform_10, window_bounds = array<i64: 4, 8, 32>}, {pipeline_mode = #tpu.pipeline_mode<synchronous>, transform_indices = @transform_11, window_bounds = array<i64: 1, 32>}, {pipeline_mode = #tpu.pipeline_mode<synchronous>, transform_indices = @transform_12, window_bounds = array<i64: 1, 32>}, {pipeline_mode = #tpu.pipeline_mode<synchronous>, transform_indices = @transform_13, window_bounds = array<i64: 1, 32>}, {transform_indices = @transform_14, window_bounds = array<i64: 1, 256, 32>}]} {
    %c0 = arith.constant 0 : index
    %c0_0 = arith.constant 0 : index
    %c0_1 = arith.constant 0 : index
    %0 = vector.load %arg1[%c0, %c0_0, %c0_1] : memref<1x256x32xbf16, #tpu.memory_space<vmem>>, vector<1x256x32xbf16>
    %1 = vector.shape_cast %0 : vector<1x256x32xbf16> to vector<256x32xbf16>
    %c0_2 = arith.constant 0 : index
    %c0_3 = arith.constant 0 : index
    %2 = vector.load %arg10[%c0_2, %c0_3] : memref<32x32xbf16, #tpu.memory_space<vmem>>, vector<32x32xbf16>
    %cst = arith.constant dense<0.000000e+00> : vector<256x32xf32>
    %3 = tpu.matmul %1, %2, %cst {dimension_numbers = #tpu.dot_dimension_numbers<[1], [0], [0], [1], [0, 0, 1, 1], [], []>} : vector<256x32xbf16>, vector<32x32xbf16>, vector<256x32xf32> -> vector<256x32xf32>
    %c0_4 = arith.constant 0 : index
    %c0_5 = arith.constant 0 : index
    %4 = vector.load %arg12[%c0_4, %c0_5] : memref<1x32xf32, #tpu.memory_space<vmem>>, vector<1x32xf32>
    %5 = vector.shape_cast %4 : vector<1x32xf32> to vector<32xf32>
    %6 = vector.shape_cast %5 : vector<32xf32> to vector<1x32xf32>
    %7 = vector.broadcast %6 : vector<1x32xf32> to vector<256x32xf32>
    %8 = arith.addf %3, %7 : vector<256x32xf32>
    %c0_6 = arith.constant 0 : index
    %c0_7 = arith.constant 0 : index
    %c0_8 = arith.constant 0 : index
    %9 = vector.load %arg8[%c0_6, %c0_7, %c0_8] : memref<4x32x8xbf16, #tpu.memory_space<vmem>>, vector<1x32x8xbf16>
    %10 = vector.shape_cast %9 : vector<1x32x8xbf16> to vector<32x8xbf16>
    %cst_9 = arith.constant dense<0.000000e+00> : vector<256x8xf32>
    %11 = tpu.matmul %1, %10, %cst_9 {dimension_numbers = #tpu.dot_dimension_numbers<[1], [0], [0], [1], [0, 0, 1, 1], [], []>} : vector<256x32xbf16>, vector<32x8xbf16>, vector<256x8xf32> -> vector<256x8xf32>
    %c0_10 = arith.constant 0 : index
    %c0_11 = arith.constant 0 : index
    %12 = vector.load %arg9[%c0_10, %c0_11] : memref<4x8xf32, #tpu.memory_space<vmem>>, vector<1x8xf32>
    %13 = vector.shape_cast %12 : vector<1x8xf32> to vector<8xf32>
    %14 = vector.shape_cast %13 : vector<8xf32> to vector<1x8xf32>
    %15 = vector.broadcast %14 : vector<1x8xf32> to vector<256x8xf32>
    %16 = arith.addf %11, %15 : vector<256x8xf32>
    %cst_12 = arith.constant dense<0.000000e+00> : vector<256xf32>
    %17 = vector.multi_reduction <add>, %16, %cst_12 [1] : vector<256x8xf32> to vector<256xf32>
    %18 = vector.shape_cast %17 : vector<256xf32> to vector<256x1xf32>
    %cst_13 = arith.constant 8.000000e+00 : f32
    %19 = vector.broadcast %cst_13 : f32 to vector<256x1xf32>
    %20 = arith.divf %18, %19 : vector<256x1xf32>
    %21 = vector.broadcast %20 : vector<256x1xf32> to vector<256x8xf32>
    %22 = arith.subf %16, %21 : vector<256x8xf32>
    %23 = arith.mulf %22, %22 : vector<256x8xf32>
    %cst_14 = arith.constant dense<0.000000e+00> : vector<256xf32>
    %24 = vector.multi_reduction <add>, %23, %cst_14 [1] : vector<256x8xf32> to vector<256xf32>
    %25 = vector.shape_cast %24 : vector<256xf32> to vector<256x1xf32>
    %cst_15 = arith.constant 8.000000e+00 : f32
    %26 = vector.broadcast %cst_15 : f32 to vector<256x1xf32>
    %27 = arith.divf %25, %26 : vector<256x1xf32>
    %cst_16 = arith.constant 9.99999997E-7 : f32
    %28 = vector.broadcast %cst_16 : f32 to vector<256x1xf32>
    %29 = arith.addf %27, %28 : vector<256x1xf32>
    %30 = math.rsqrt %29 : vector<256x1xf32>
    %31 = vector.broadcast %30 : vector<256x1xf32> to vector<256x8xf32>
    %32 = arith.mulf %22, %31 : vector<256x8xf32>
    %33 = arith.truncf %32 : vector<256x8xf32> to vector<256x8xbf16>
    %c0_17 = arith.constant 0 : index
    %c0_18 = arith.constant 0 : index
    %c0_19 = arith.constant 0 : index
    %34 = vector.load %arg11[%c0_17, %c0_18, %c0_19] : memref<4x8x32xbf16, #tpu.memory_space<vmem>>, vector<1x8x32xbf16>
    %35 = vector.shape_cast %34 : vector<1x8x32xbf16> to vector<8x32xbf16>
    %cst_20 = arith.constant dense<0.000000e+00> : vector<256x32xf32>
    %36 = tpu.matmul %33, %35, %cst_20 {dimension_numbers = #tpu.dot_dimension_numbers<[1], [0], [0], [1], [0, 0, 1, 1], [], []>} : vector<256x8xbf16>, vector<8x32xbf16>, vector<256x32xf32> -> vector<256x32xf32>
    %37 = arith.addf %8, %36 : vector<256x32xf32>
    %c0_21 = arith.constant 0 : index
    %c0_22 = arith.constant 0 : index
    %c0_23 = arith.constant 0 : index
    %38 = vector.load %arg2[%c0_21, %c0_22, %c0_23] : memref<1x64x32xbf16, #tpu.memory_space<vmem>>, vector<1x64x32xbf16>
    %39 = vector.shape_cast %38 : vector<1x64x32xbf16> to vector<64x32xbf16>
    %c1 = arith.constant 1 : index
    %c0_24 = arith.constant 0 : index
    %c0_25 = arith.constant 0 : index
    %40 = vector.load %arg8[%c1, %c0_24, %c0_25] : memref<4x32x8xbf16, #tpu.memory_space<vmem>>, vector<1x32x8xbf16>
    %41 = vector.shape_cast %40 : vector<1x32x8xbf16> to vector<32x8xbf16>
    %cst_26 = arith.constant dense<0.000000e+00> : vector<64x8xf32>
    %42 = tpu.matmul %39, %41, %cst_26 {dimension_numbers = #tpu.dot_dimension_numbers<[1], [0], [0], [1], [0, 0, 1, 1], [], []>} : vector<64x32xbf16>, vector<32x8xbf16>, vector<64x8xf32> -> vector<64x8xf32>
    %c1_27 = arith.constant 1 : index
    %c0_28 = arith.constant 0 : index
    %43 = vector.load %arg9[%c1_27, %c0_28] : memref<4x8xf32, #tpu.memory_space<vmem>>, vector<1x8xf32>
    %44 = vector.shape_cast %43 : vector<1x8xf32> to vector<8xf32>
    %45 = vector.shape_cast %44 : vector<8xf32> to vector<1x8xf32>
    %46 = vector.broadcast %45 : vector<1x8xf32> to vector<64x8xf32>
    %47 = arith.addf %42, %46 : vector<64x8xf32>
    %c0_29 = arith.constant 0 : index
    %c0_30 = arith.constant 0 : index
    %48 = vector.load %arg5[%c0_29, %c0_30] : memref<256x64xbf16, #tpu.memory_space<vmem>>, vector<256x64xbf16>
    %49 = arith.truncf %47 : vector<64x8xf32> to vector<64x8xbf16>
    %cst_31 = arith.constant dense<0.000000e+00> : vector<256x8xf32>
    %50 = tpu.matmul %48, %49, %cst_31 {dimension_numbers = #tpu.dot_dimension_numbers<[1], [0], [0], [1], [0, 0, 1, 1], [], []>} : vector<256x64xbf16>, vector<64x8xbf16>, vector<256x8xf32> -> vector<256x8xf32>
    %cst_32 = arith.constant dense<0.000000e+00> : vector<256xf32>
    %51 = vector.multi_reduction <add>, %50, %cst_32 [1] : vector<256x8xf32> to vector<256xf32>
    %52 = vector.shape_cast %51 : vector<256xf32> to vector<256x1xf32>
    %cst_33 = arith.constant 8.000000e+00 : f32
    %53 = vector.broadcast %cst_33 : f32 to vector<256x1xf32>
    %54 = arith.divf %52, %53 : vector<256x1xf32>
    %55 = vector.broadcast %54 : vector<256x1xf32> to vector<256x8xf32>
    %56 = arith.subf %50, %55 : vector<256x8xf32>
    %57 = arith.mulf %56, %56 : vector<256x8xf32>
    %cst_34 = arith.constant dense<0.000000e+00> : vector<256xf32>
    %58 = vector.multi_reduction <add>, %57, %cst_34 [1] : vector<256x8xf32> to vector<256xf32>
    %59 = vector.shape_cast %58 : vector<256xf32> to vector<256x1xf32>
    %cst_35 = arith.constant 8.000000e+00 : f32
    %60 = vector.broadcast %cst_35 : f32 to vector<256x1xf32>
    %61 = arith.divf %59, %60 : vector<256x1xf32>
    %cst_36 = arith.constant 9.99999997E-7 : f32
    %62 = vector.broadcast %cst_36 : f32 to vector<256x1xf32>
    %63 = arith.addf %61, %62 : vector<256x1xf32>
    %64 = math.rsqrt %63 : vector<256x1xf32>
    %65 = vector.broadcast %64 : vector<256x1xf32> to vector<256x8xf32>
    %66 = arith.mulf %56, %65 : vector<256x8xf32>
    %67 = arith.truncf %66 : vector<256x8xf32> to vector<256x8xbf16>
    %c1_37 = arith.constant 1 : index
    %c0_38 = arith.constant 0 : index
    %c0_39 = arith.constant 0 : index
    %68 = vector.load %arg11[%c1_37, %c0_38, %c0_39] : memref<4x8x32xbf16, #tpu.memory_space<vmem>>, vector<1x8x32xbf16>
    %69 = vector.shape_cast %68 : vector<1x8x32xbf16> to vector<8x32xbf16>
    %cst_40 = arith.constant dense<0.000000e+00> : vector<256x32xf32>
    %70 = tpu.matmul %67, %69, %cst_40 {dimension_numbers = #tpu.dot_dimension_numbers<[1], [0], [0], [1], [0, 0, 1, 1], [], []>} : vector<256x8xbf16>, vector<8x32xbf16>, vector<256x32xf32> -> vector<256x32xf32>
    %71 = arith.addf %37, %70 : vector<256x32xf32>
    %c0_41 = arith.constant 0 : index
    %c0_42 = arith.constant 0 : index
    %c0_43 = arith.constant 0 : index
    %72 = vector.load %arg3[%c0_41, %c0_42, %c0_43] : memref<1x16x32xbf16, #tpu.memory_space<vmem>>, vector<1x16x32xbf16>
    %73 = vector.shape_cast %72 : vector<1x16x32xbf16> to vector<16x32xbf16>
    %c2 = arith.constant 2 : index
    %c0_44 = arith.constant 0 : index
    %c0_45 = arith.constant 0 : index
    %74 = vector.load %arg8[%c2, %c0_44, %c0_45] : memref<4x32x8xbf16, #tpu.memory_space<vmem>>, vector<1x32x8xbf16>
    %75 = vector.shape_cast %74 : vector<1x32x8xbf16> to vector<32x8xbf16>
    %cst_46 = arith.constant dense<0.000000e+00> : vector<16x8xf32>
    %76 = tpu.matmul %73, %75, %cst_46 {dimension_numbers = #tpu.dot_dimension_numbers<[1], [0], [0], [1], [0, 0, 1, 1], [], []>} : vector<16x32xbf16>, vector<32x8xbf16>, vector<16x8xf32> -> vector<16x8xf32>
    %c2_47 = arith.constant 2 : index
    %c0_48 = arith.constant 0 : index
    %77 = vector.load %arg9[%c2_47, %c0_48] : memref<4x8xf32, #tpu.memory_space<vmem>>, vector<1x8xf32>
    %78 = vector.shape_cast %77 : vector<1x8xf32> to vector<8xf32>
    %79 = vector.shape_cast %78 : vector<8xf32> to vector<1x8xf32>
    %80 = vector.broadcast %79 : vector<1x8xf32> to vector<16x8xf32>
    %81 = arith.addf %76, %80 : vector<16x8xf32>
    %c0_49 = arith.constant 0 : index
    %c0_50 = arith.constant 0 : index
    %82 = vector.load %arg6[%c0_49, %c0_50] : memref<256x16xbf16, #tpu.memory_space<vmem>>, vector<256x16xbf16>
    %83 = arith.truncf %81 : vector<16x8xf32> to vector<16x8xbf16>
    %cst_51 = arith.constant dense<0.000000e+00> : vector<256x8xf32>
    %84 = tpu.matmul %82, %83, %cst_51 {dimension_numbers = #tpu.dot_dimension_numbers<[1], [0], [0], [1], [0, 0, 1, 1], [], []>} : vector<256x16xbf16>, vector<16x8xbf16>, vector<256x8xf32> -> vector<256x8xf32>
    %cst_52 = arith.constant dense<0.000000e+00> : vector<256xf32>
    %85 = vector.multi_reduction <add>, %84, %cst_52 [1] : vector<256x8xf32> to vector<256xf32>
    %86 = vector.shape_cast %85 : vector<256xf32> to vector<256x1xf32>
    %cst_53 = arith.constant 8.000000e+00 : f32
    %87 = vector.broadcast %cst_53 : f32 to vector<256x1xf32>
    %88 = arith.divf %86, %87 : vector<256x1xf32>
    %89 = vector.broadcast %88 : vector<256x1xf32> to vector<256x8xf32>
    %90 = arith.subf %84, %89 : vector<256x8xf32>
    %91 = arith.mulf %90, %90 : vector<256x8xf32>
    %cst_54 = arith.constant dense<0.000000e+00> : vector<256xf32>
    %92 = vector.multi_reduction <add>, %91, %cst_54 [1] : vector<256x8xf32> to vector<256xf32>
    %93 = vector.shape_cast %92 : vector<256xf32> to vector<256x1xf32>
    %cst_55 = arith.constant 8.000000e+00 : f32
    %94 = vector.broadcast %cst_55 : f32 to vector<256x1xf32>
    %95 = arith.divf %93, %94 : vector<256x1xf32>
    %cst_56 = arith.constant 9.99999997E-7 : f32
    %96 = vector.broadcast %cst_56 : f32 to vector<256x1xf32>
    %97 = arith.addf %95, %96 : vector<256x1xf32>
    %98 = math.rsqrt %97 : vector<256x1xf32>
    %99 = vector.broadcast %98 : vector<256x1xf32> to vector<256x8xf32>
    %100 = arith.mulf %90, %99 : vector<256x8xf32>
    %101 = arith.truncf %100 : vector<256x8xf32> to vector<256x8xbf16>
    %c2_57 = arith.constant 2 : index
    %c0_58 = arith.constant 0 : index
    %c0_59 = arith.constant 0 : index
    %102 = vector.load %arg11[%c2_57, %c0_58, %c0_59] : memref<4x8x32xbf16, #tpu.memory_space<vmem>>, vector<1x8x32xbf16>
    %103 = vector.shape_cast %102 : vector<1x8x32xbf16> to vector<8x32xbf16>
    %cst_60 = arith.constant dense<0.000000e+00> : vector<256x32xf32>
    %104 = tpu.matmul %101, %103, %cst_60 {dimension_numbers = #tpu.dot_dimension_numbers<[1], [0], [0], [1], [0, 0, 1, 1], [], []>} : vector<256x8xbf16>, vector<8x32xbf16>, vector<256x32xf32> -> vector<256x32xf32>
    %105 = arith.addf %71, %104 : vector<256x32xf32>
    %c0_61 = arith.constant 0 : index
    %c0_62 = arith.constant 0 : index
    %c0_63 = arith.constant 0 : index
    %106 = vector.load %arg4[%c0_61, %c0_62, %c0_63] : memref<1x4x32xbf16, #tpu.memory_space<vmem>>, vector<1x4x32xbf16>
    %107 = vector.shape_cast %106 : vector<1x4x32xbf16> to vector<4x32xbf16>
    %c3 = arith.constant 3 : index
    %c0_64 = arith.constant 0 : index
    %c0_65 = arith.constant 0 : index
    %108 = vector.load %arg8[%c3, %c0_64, %c0_65] : memref<4x32x8xbf16, #tpu.memory_space<vmem>>, vector<1x32x8xbf16>
    %109 = vector.shape_cast %108 : vector<1x32x8xbf16> to vector<32x8xbf16>
    %cst_66 = arith.constant dense<0.000000e+00> : vector<4x8xf32>
    %110 = tpu.matmul %107, %109, %cst_66 {dimension_numbers = #tpu.dot_dimension_numbers<[1], [0], [0], [1], [0, 0, 1, 1], [], []>} : vector<4x32xbf16>, vector<32x8xbf16>, vector<4x8xf32> -> vector<4x8xf32>
    %c3_67 = arith.constant 3 : index
    %c0_68 = arith.constant 0 : index
    %111 = vector.load %arg9[%c3_67, %c0_68] : memref<4x8xf32, #tpu.memory_space<vmem>>, vector<1x8xf32>
    %112 = vector.shape_cast %111 : vector<1x8xf32> to vector<8xf32>
    %113 = vector.shape_cast %112 : vector<8xf32> to vector<1x8xf32>
    %114 = vector.broadcast %113 : vector<1x8xf32> to vector<4x8xf32>
    %115 = arith.addf %110, %114 : vector<4x8xf32>
    %c0_69 = arith.constant 0 : index
    %c0_70 = arith.constant 0 : index
    %116 = vector.load %arg7[%c0_69, %c0_70] : memref<256x4xbf16, #tpu.memory_space<vmem>>, vector<256x4xbf16>
    %117 = arith.truncf %115 : vector<4x8xf32> to vector<4x8xbf16>
    %cst_71 = arith.constant dense<0.000000e+00> : vector<256x8xf32>
    %118 = tpu.matmul %116, %117, %cst_71 {dimension_numbers = #tpu.dot_dimension_numbers<[1], [0], [0], [1], [0, 0, 1, 1], [], []>} : vector<256x4xbf16>, vector<4x8xbf16>, vector<256x8xf32> -> vector<256x8xf32>
    %cst_72 = arith.constant dense<0.000000e+00> : vector<256xf32>
    %119 = vector.multi_reduction <add>, %118, %cst_72 [1] : vector<256x8xf32> to vector<256xf32>
    %120 = vector.shape_cast %119 : vector<256xf32> to vector<256x1xf32>
    %cst_73 = arith.constant 8.000000e+00 : f32
    %121 = vector.broadcast %cst_73 : f32 to vector<256x1xf32>
    %122 = arith.divf %120, %121 : vector<256x1xf32>
    %123 = vector.broadcast %122 : vector<256x1xf32> to vector<256x8xf32>
    %124 = arith.subf %118, %123 : vector<256x8xf32>
    %125 = arith.mulf %124, %124 : vector<256x8xf32>
    %cst_74 = arith.constant dense<0.000000e+00> : vector<256xf32>
    %126 = vector.multi_reduction <add>, %125, %cst_74 [1] : vector<256x8xf32> to vector<256xf32>
    %127 = vector.shape_cast %126 : vector<256xf32> to vector<256x1xf32>
    %cst_75 = arith.constant 8.000000e+00 : f32
    %128 = vector.broadcast %cst_75 : f32 to vector<256x1xf32>
    %129 = arith.divf %127, %128 : vector<256x1xf32>
    %cst_76 = arith.constant 9.99999997E-7 : f32
    %130 = vector.broadcast %cst_76 : f32 to vector<256x1xf32>
    %131 = arith.addf %129, %130 : vector<256x1xf32>
    %132 = math.rsqrt %131 : vector<256x1xf32>
    %133 = vector.broadcast %132 : vector<256x1xf32> to vector<256x8xf32>
    %134 = arith.mulf %124, %133 : vector<256x8xf32>
    %135 = arith.truncf %134 : vector<256x8xf32> to vector<256x8xbf16>
    %c3_77 = arith.constant 3 : index
    %c0_78 = arith.constant 0 : index
    %c0_79 = arith.constant 0 : index
    %136 = vector.load %arg11[%c3_77, %c0_78, %c0_79] : memref<4x8x32xbf16, #tpu.memory_space<vmem>>, vector<1x8x32xbf16>
    %137 = vector.shape_cast %136 : vector<1x8x32xbf16> to vector<8x32xbf16>
    %cst_80 = arith.constant dense<0.000000e+00> : vector<256x32xf32>
    %138 = tpu.matmul %135, %137, %cst_80 {dimension_numbers = #tpu.dot_dimension_numbers<[1], [0], [0], [1], [0, 0, 1, 1], [], []>} : vector<256x8xbf16>, vector<8x32xbf16>, vector<256x32xf32> -> vector<256x32xf32>
    %139 = arith.addf %105, %138 : vector<256x32xf32>
    %cst_81 = arith.constant dense<0.000000e+00> : vector<256xf32>
    %140 = vector.multi_reduction <add>, %139, %cst_81 [1] : vector<256x32xf32> to vector<256xf32>
    %141 = vector.shape_cast %140 : vector<256xf32> to vector<256x1xf32>
    %cst_82 = arith.constant 3.200000e+01 : f32
    %142 = vector.broadcast %cst_82 : f32 to vector<256x1xf32>
    %143 = arith.divf %141, %142 : vector<256x1xf32>
    %144 = vector.broadcast %143 : vector<256x1xf32> to vector<256x32xf32>
    %145 = arith.subf %139, %144 : vector<256x32xf32>
    %146 = arith.mulf %145, %145 : vector<256x32xf32>
    %cst_83 = arith.constant dense<0.000000e+00> : vector<256xf32>
    %147 = vector.multi_reduction <add>, %146, %cst_83 [1] : vector<256x32xf32> to vector<256xf32>
    %148 = vector.shape_cast %147 : vector<256xf32> to vector<256x1xf32>
    %cst_84 = arith.constant 3.200000e+01 : f32
    %149 = vector.broadcast %cst_84 : f32 to vector<256x1xf32>
    %150 = arith.divf %148, %149 : vector<256x1xf32>
    %cst_85 = arith.constant 9.99999997E-7 : f32
    %151 = vector.broadcast %cst_85 : f32 to vector<256x1xf32>
    %152 = arith.addf %150, %151 : vector<256x1xf32>
    %153 = math.rsqrt %152 : vector<256x1xf32>
    %154 = vector.broadcast %153 : vector<256x1xf32> to vector<256x32xf32>
    %155 = arith.mulf %145, %154 : vector<256x32xf32>
    %c0_86 = arith.constant 0 : index
    %c0_87 = arith.constant 0 : index
    %156 = vector.load %arg13[%c0_86, %c0_87] : memref<1x32xf32, #tpu.memory_space<vmem>>, vector<1x32xf32>
    %157 = vector.shape_cast %156 : vector<1x32xf32> to vector<32xf32>
    %158 = vector.shape_cast %157 : vector<32xf32> to vector<1x32xf32>
    %159 = vector.broadcast %158 : vector<1x32xf32> to vector<256x32xf32>
    %160 = arith.mulf %155, %159 : vector<256x32xf32>
    %c0_88 = arith.constant 0 : index
    %c0_89 = arith.constant 0 : index
    %161 = vector.load %arg14[%c0_88, %c0_89] : memref<1x32xf32, #tpu.memory_space<vmem>>, vector<1x32xf32>
    %162 = vector.shape_cast %161 : vector<1x32xf32> to vector<32xf32>
    %163 = vector.shape_cast %162 : vector<32xf32> to vector<1x32xf32>
    %164 = vector.broadcast %163 : vector<1x32xf32> to vector<256x32xf32>
    %165 = arith.addf %160, %164 : vector<256x32xf32>
    %c0_90 = arith.constant 0 : index
    %c0_91 = arith.constant 0 : index
    %c0_92 = arith.constant 0 : index
    %166 = vector.load %arg15[%c0_90, %c0_91, %c0_92] : memref<1x256x32xf32, #tpu.memory_space<vmem>>, vector<1x256x32xf32>
    %167 = vector.shape_cast %166 : vector<1x256x32xf32> to vector<256x32xf32>
    %168 = vector.shape_cast %165 : vector<256x32xf32> to vector<1x256x32xf32>
    tpu.vector_store %arg15[%c0_90, %c0_91, %c0_92], %168 {strides = array<i32>} : memref<1x256x32xf32, #tpu.memory_space<vmem>>, vector<1x256x32xf32>,
    return
  }
  func.func @transform_0(%arg0: i32) -> (i32, i32, i32) {
    %c0_i32 = arith.constant 0 : i32
    %c0_i32_0 = arith.constant 0 : i32
    %c0_i32_1 = arith.constant 0 : i32
    return %arg0, %c0_i32, %c0_i32_0 : i32, i32, i32
  }
  func.func @transform_1(%arg0: i32) -> (i32, i32, i32) {
    %c0_i32 = arith.constant 0 : i32
    %c0_i32_0 = arith.constant 0 : i32
    %c0_i32_1 = arith.constant 0 : i32
    return %arg0, %c0_i32, %c0_i32_0 : i32, i32, i32
  }
  func.func @transform_2(%arg0: i32) -> (i32, i32, i32) {
    %c0_i32 = arith.constant 0 : i32
    %c0_i32_0 = arith.constant 0 : i32
    %c0_i32_1 = arith.constant 0 : i32
    return %arg0, %c0_i32, %c0_i32_0 : i32, i32, i32
  }
  func.func @transform_3(%arg0: i32) -> (i32, i32, i32) {
    %c0_i32 = arith.constant 0 : i32
    %c0_i32_0 = arith.constant 0 : i32
    %c0_i32_1 = arith.constant 0 : i32
    return %arg0, %c0_i32, %c0_i32_0 : i32, i32, i32
  }
  func.func @transform_4(%arg0: i32) -> (i32, i32) {
    %c0_i32 = arith.constant 0 : i32
    %c0_i32_0 = arith.constant 0 : i32
    %c0_i32_1 = arith.constant 0 : i32
    return %c0_i32, %c0_i32_0 : i32, i32
  }
  func.func @transform_5(%arg0: i32) -> (i32, i32) {
    %c0_i32 = arith.constant 0 : i32
    %c0_i32_0 = arith.constant 0 : i32
    %c0_i32_1 = arith.constant 0 : i32
    return %c0_i32, %c0_i32_0 : i32, i32
  }
  func.func @transform_6(%arg0: i32) -> (i32, i32) {
    %c0_i32 = arith.constant 0 : i32
    %c0_i32_0 = arith.constant 0 : i32
    %c0_i32_1 = arith.constant 0 : i32
    return %c0_i32, %c0_i32_0 : i32, i32
  }
  func.func @transform_7(%arg0: i32) -> (i32, i32, i32) {
    %c0_i32 = arith.constant 0 : i32
    %c0_i32_0 = arith.constant 0 : i32
    %c0_i32_1 = arith.constant 0 : i32
    %c0_i32_2 = arith.constant 0 : i32
    return %c0_i32, %c0_i32_0, %c0_i32_1 : i32, i32, i32
  }
  func.func @transform_8(%arg0: i32) -> (i32, i32) {
    %c0_i32 = arith.constant 0 : i32
    %c0_i32_0 = arith.constant 0 : i32
    %c0_i32_1 = arith.constant 0 : i32
    return %c0_i32, %c0_i32_0 : i32, i32
  }
  func.func @transform_9(%arg0: i32) -> (i32, i32) {
    %c0_i32 = arith.constant 0 : i32
    %c0_i32_0 = arith.constant 0 : i32
    %c0_i32_1 = arith.constant 0 : i32
    return %c0_i32, %c0_i32_0 : i32, i32
  }
  func.func @transform_10(%arg0: i32) -> (i32, i32, i32) {
    %c0_i32 = arith.constant 0 : i32
    %c0_i32_0 = arith.constant 0 : i32
    %c0_i32_1 = arith.constant 0 : i32
    %c0_i32_2 = arith.constant 0 : i32
    return %c0_i32, %c0_i32_0, %c0_i32_1 : i32, i32, i32
  }
  func.func @transform_11(%arg0: i32) -> (i32, i32) {
    %c0_i32 = arith.constant 0 : i32
    %c0_i32_0 = arith.constant 0 : i32
    %c0_i32_1 = arith.constant 0 : i32
    return %c0_i32, %c0_i32_0 : i32, i32
  }
  func.func @transform_12(%arg0: i32) -> (i32, i32) {
    %c0_i32 = arith.constant 0 : i32
    %c0_i32_0 = arith.constant 0 : i32
    %c0_i32_1 = arith.constant 0 : i32
    return %c0_i32, %c0_i32_0 : i32, i32
  }
  func.func @transform_13(%arg0: i32) -> (i32, i32) {
    %c0_i32 = arith.constant 0 : i32
    %c0_i32_0 = arith.constant 0 : i32
    %c0_i32_1 = arith.constant 0 : i32
    return %c0_i32, %c0_i32_0 : i32, i32
  }
  func.func @transform_14(%arg0: i32) -> (i32, i32, i32) {
    %c0_i32 = arith.constant 0 : i32
    %c0_i32_0 = arith.constant 0 : i32
    %c0_i32_1 = arith.constant 0 : i32
    return %arg0, %c0_i32, %c0_i32_0 : i32, i32, i32
  }
}

</mosaic_0001>

<llo_original>
// kernel: psp_pooling.1
$region0: #{psp_pooling.1}
  #allocation0 [shape = 'u32[]', space=smem, size = 0x4, offset = 0x4, fixed_abs, tag = 'smem constant byte address 0x4 - core index']
  #allocation1 [shape = 'u32[144,128]{1,0:T(1,128)}', space=vmem, size = 0x12000, scoped, tag = 'internal scratch']
  %s0 = inlined_call_operand.vmem [shape: bf16[8,256,32], index: 0, kind: input, shape index: {}]
  %s1 = inlined_call_operand.vmem [shape: bf16[8,64,32], index: 1, kind: input, shape index: {}]
  %s2 = inlined_call_operand.vmem [shape: bf16[8,16,32], index: 2, kind: input, shape index: {}]
  %s3 = inlined_call_operand.vmem [shape: bf16[8,4,32], index: 3, kind: input, shape index: {}]
  %s4 = inlined_call_operand.vmem [shape: bf16[256,64], index: 4, kind: input, shape index: {}]
  %s5 = inlined_call_operand.vmem [shape: bf16[256,16], index: 5, kind: input, shape index: {}]
  %s6 = inlined_call_operand.vmem [shape: bf16[256,4], index: 6, kind: input, shape index: {}]
  %s7 = inlined_call_operand.vmem [shape: bf16[4,32,8], index: 7, kind: input, shape index: {}]
  %s8 = inlined_call_operand.vmem [shape: f32[4,8], index: 8, kind: input, shape index: {}]
  %s9 = inlined_call_operand.vmem [shape: bf16[32,32], index: 9, kind: input, shape index: {}]
  %s10 = inlined_call_operand.vmem [shape: bf16[4,8,32], index: 10, kind: input, shape index: {}]
  %s11 = inlined_call_operand.vmem [shape: f32[1,32], index: 11, kind: input, shape index: {}]
  %s12 = inlined_call_operand.vmem [shape: f32[1,32], index: 12, kind: input, shape index: {}]
  %s13 = inlined_call_operand.vmem [shape: f32[1,32], index: 13, kind: input, shape index: {}]
  %s14 = inlined_call_operand.hbm [shape: f32[8,256,32], index: 14, kind: output, shape index: {}]
  %s15 = sld [smem:[#allocation0]]
  $region89: #{psp_pooling.1} parent=0
    _
  %s17 = ssub.s32 1, %s15
  %s18 = scalar_select 0, %s17, %s15
  $region1: #{psp_pooling.1} parent=0
    #allocation2 [shape = 'u8[262144]{0}', space=vmem, size = 0x40000, scoped, tag = 'output window, operand 0']
    #allocation3 [shape = 's32[2]{0}', space=sflag, size = 0x8, scoped, tag = 'scoped memory for psp_pooling.1']
    %19 = vsyncpa [#allocation3], 0
    %s20 = scalar_lea.sflag [#allocation3], 1
    %21 = vsyncpa %s20, 0
    loop: start=0, step=1, limit=10
    $region2: #{psp_pooling.1} parent=1 // loop_pre_header
      _
    $region3: #{psp_pooling.1} parent=1 // loop_header
      %s23 = sphi 0, %s27
      %p24 = scmp.ge.s32.totalorder %s23, 10
      %s33 = sphi 0, %s35
      %s36 = sphi 0, %s33
      %s37 = sphi 0, %s36
      %s53 = sphi 0, %s37
      %s59 = sphi 0, %s61
      %s62 = sphi 0, %s59
      %s63 = sphi 0, %s62
      %s79 = sphi 0, %s63
      %s85 = sphi 0, %s87
      %s88 = sphi 0, %s85
      %s89 = sphi 0, %s88
      %s105 = sphi 0, %s89
      %s111 = sphi 0, %s113
      %s114 = sphi 0, %s111
      %s115 = sphi 0, %s114
      %s131 = sphi 0, %s115
      %s135 = sphi 0, %s135
      %s137 = sphi 0, %s135
      %s138 = sphi 0, %s137
      %s152 = sphi 0, %s138
      %s156 = sphi 0, %s156
      %s158 = sphi 0, %s156
      %s159 = sphi 0, %s158
      %s173 = sphi 0, %s159
      %s177 = sphi 0, %s177
      %s179 = sphi 0, %s177
      %s180 = sphi 0, %s179
      %s194 = sphi 0, %s180
      %s198 = sphi 0, %s198
      %s200 = sphi 0, %s198
      %s201 = sphi 0, %s200
      %s215 = sphi 0, %s201
      %s219 = sphi 0, %s219
      %s221 = sphi 0, %s219
      %s222 = sphi 0, %s221
      %s236 = sphi 0, %s222
      %s240 = sphi 0, %s240
      %s242 = sphi 0, %s240
      %s243 = sphi 0, %s242
      %s257 = sphi 0, %s243
      %s261 = sphi 0, %s261
      %s263 = sphi 0, %s261
      %s264 = sphi 0, %s263
      %s278 = sphi 0, %s264
      %s282 = sphi 0, %s282
      %s284 = sphi 0, %s282
      %s285 = sphi 0, %s284
      %s299 = sphi 0, %s285
      %s303 = sphi 0, %s303
      %s305 = sphi 0, %s303
      %s306 = sphi 0, %s305
      %s320 = sphi 0, %s306
      %s324 = sphi 0, %s324
      %s326 = sphi 0, %s324
      %s327 = sphi 0, %s326
      %s341 = sphi 0, %s327
      %s347 = sphi 0, %s349
      %s350 = sphi 0, %s347
      %s351 = sphi 0, %s350
      %s367 = sphi 0, %s351
    $region4: #{psp_pooling.1} parent=1 // loop_header_branch
      %26 = sbr.rel (%p24) target = $region8
    $region5: #{psp_pooling.1} parent=1 // loop_body
      %s28 = ssub.s32 %s23, 1
      %s29 = ssub.s32 %s23, 2
      %s30 = sadd.s32 %s23, 1
      %s31 = ssub.s32 %s23, %s30
      %p32 = scmp.eq.s32.totalorder %s31, 0
      %s34 = sadd.s32 %s33, 1
      %s35 = scalar_select %p32, %s33, %s34
      %p38 = pneg %p32
      %p39 = scmp.eq.s32.totalorder %s23, 7
      %p40 = por %p38, %p39
      %p41 = scmp.ne.s32.totalorder %s33, %s36
      %p42 = scmp.eq.s32.totalorder %s23, 0
      %p43 = por %p41, %p42
      %p44 = scmp.ne.s32.totalorder %s33, %s36
      %p45 = scmp.eq.s32.totalorder %s28, 7
      %p46 = por %p44, %p45
      %p47 = scmp.ne.s32.totalorder %s36, %s37
      %p48 = scmp.eq.s32.totalorder %s28, 0
      %p49 = por %p47, %p48
      %p50 = scmp.ne.s32.totalorder %s36, %s37
      %p51 = scmp.eq.s32.totalorder %s29, 7
      %p52 = por %p50, %p51
      %p54 = scmp.ne.s32.totalorder %s37, %s53
      %p55 = scmp.eq.s32.totalorder %s29, 0
      %p56 = por %p54, %p55
      %s57 = ssub.s32 %s23, %s30
      %p58 = scmp.eq.s32.totalorder %s57, 0
      %s60 = sadd.s32 %s59, 1
      %s61 = scalar_select %p58, %s59, %s60
      %p64 = pneg %p58
      %p65 = scmp.eq.s32.totalorder %s23, 7
      %p66 = por %p64, %p65
      %p67 = scmp.ne.s32.totalorder %s59, %s62
      %p68 = scmp.eq.s32.totalorder %s23, 0
      %p69 = por %p67, %p68
      %p70 = scmp.ne.s32.totalorder %s59, %s62
      %p71 = scmp.eq.s32.totalorder %s28, 7
      %p72 = por %p70, %p71
      %p73 = scmp.ne.s32.totalorder %s62, %s63
      %p74 = scmp.eq.s32.totalorder %s28, 0
      %p75 = por %p73, %p74
      %p76 = scmp.ne.s32.totalorder %s62, %s63
      %p77 = scmp.eq.s32.totalorder %s29, 7
      %p78 = por %p76, %p77
      %p80 = scmp.ne.s32.totalorder %s63, %s79
      %p81 = scmp.eq.s32.totalorder %s29, 0
      %p82 = por %p80, %p81
      %s83 = ssub.s32 %s23, %s30
      %p84 = scmp.eq.s32.totalorder %s83, 0
      %s86 = sadd.s32 %s85, 1
      %s87 = scalar_select %p84, %s85, %s86
      %p90 = pneg %p84
      %p91 = scmp.eq.s32.totalorder %s23, 7
      %p92 = por %p90, %p91
      %p93 = scmp.ne.s32.totalorder %s85, %s88
      %p94 = scmp.eq.s32.totalorder %s23, 0
      %p95 = por %p93, %p94
      %p96 = scmp.ne.s32.totalorder %s85, %s88
      %p97 = scmp.eq.s32.totalorder %s28, 7
      %p98 = por %p96, %p97
      %p99 = scmp.ne.s32.totalorder %s88, %s89
      %p100 = scmp.eq.s32.totalorder %s28, 0
      %p101 = por %p99, %p100
      %p102 = scmp.ne.s32.totalorder %s88, %s89
      %p103 = scmp.eq.s32.totalorder %s29, 7
      %p104 = por %p102, %p103
      %p106 = scmp.ne.s32.totalorder %s89, %s105
      %p107 = scmp.eq.s32.totalorder %s29, 0
      %p108 = por %p106, %p107
      %s109 = ssub.s32 %s23, %s30
      %p110 = scmp.eq.s32.totalorder %s109, 0
      %s112 = sadd.s32 %s111, 1
      %s113 = scalar_select %p110, %s111, %s112
      %p116 = pneg %p110
      %p117 = scmp.eq.s32.totalorder %s23, 7
      %p118 = por %p116, %p117
      %p119 = scmp.ne.s32.totalorder %s111, %s114
      %p120 = scmp.eq.s32.totalorder %s23, 0
      %p121 = por %p119, %p120
      %p122 = scmp.ne.s32.totalorder %s111, %s114
      %p123 = scmp.eq.s32.totalorder %s28, 7
      %p124 = por %p122, %p123
      %p125 = scmp.ne.s32.totalorder %s114, %s115
      %p126 = scmp.eq.s32.totalorder %s28, 0
      %p127 = por %p125, %p126
      %p128 = scmp.ne.s32.totalorder %s114, %s115
      %p129 = scmp.eq.s32.totalorder %s29, 7
      %p130 = por %p128, %p129
      %p132 = scmp.ne.s32.totalorder %s115, %s131
      %p133 = scmp.eq.s32.totalorder %s29, 0
      %p134 = por %p132, %p133
      %s136 = sadd.s32 %s135, 1
      %p139 = scmp.eq.s32.totalorder %s23, 7
      %p140 = scmp.ne.s32.totalorder %s135, %s137
      %p141 = scmp.eq.s32.totalorder %s23, 0
      %p142 = por %p140, %p141
      %p143 = scmp.ne.s32.totalorder %s135, %s137
      %p144 = scmp.eq.s32.totalorder %s28, 7
      %p145 = por %p143, %p144
      %p146 = scmp.ne.s32.totalorder %s137, %s138
      %p147 = scmp.eq.s32.totalorder %s28, 0
      %p148 = por %p146, %p147
      %p149 = scmp.ne.s32.totalorder %s137, %s138
      %p150 = scmp.eq.s32.totalorder %s29, 7
      %p151 = por %p149, %p150
      %p153 = scmp.ne.s32.totalorder %s138, %s152
      %p154 = scmp.eq.s32.totalorder %s29, 0
      %p155 = por %p153, %p154
      %s157 = sadd.s32 %s156, 1
      %p160 = scmp.eq.s32.totalorder %s23, 7
      %p161 = scmp.ne.s32.totalorder %s156, %s158
      %p162 = scmp.eq.s32.totalorder %s23, 0
      %p163 = por %p161, %p162
      %p164 = scmp.ne.s32.totalorder %s156, %s158
      %p165 = scmp.eq.s32.totalorder %s28, 7
      %p166 = por %p164, %p165
      %p167 = scmp.ne.s32.totalorder %s158, %s159
      %p168 = scmp.eq.s32.totalorder %s28, 0
      %p169 = por %p167, %p168
      %p170 = scmp.ne.s32.totalorder %s158, %s159
      %p171 = scmp.eq.s32.totalorder %s29, 7
      %p172 = por %p170, %p171
      %p174 = scmp.ne.s32.totalorder %s159, %s173
      %p175 = scmp.eq.s32.totalorder %s29, 0
      %p176 = por %p174, %p175
      %s178 = sadd.s32 %s177, 1
      %p181 = scmp.eq.s32.totalorder %s23, 7
      %p182 = scmp.ne.s32.totalorder %s177, %s179
      %p183 = scmp.eq.s32.totalorder %s23, 0
      %p184 = por %p182, %p183
      %p185 = scmp.ne.s32.totalorder %s177, %s179
      %p186 = scmp.eq.s32.totalorder %s28, 7
      %p187 = por %p185, %p186
      %p188 = scmp.ne.s32.totalorder %s179, %s180
      %p189 = scmp.eq.s32.totalorder %s28, 0
      %p190 = por %p188, %p189
      %p191 = scmp.ne.s32.totalorder %s179, %s180
      %p192 = scmp.eq.s32.totalorder %s29, 7
      %p193 = por %p191, %p192
      %p195 = scmp.ne.s32.totalorder %s180, %s194
      %p196 = scmp.eq.s32.totalorder %s29, 0
      %p197 = por %p195, %p196
      %s199 = sadd.s32 %s198, 1
      %p202 = scmp.eq.s32.totalorder %s23, 7
      %p203 = scmp.ne.s32.totalorder %s198, %s200
      %p204 = scmp.eq.s32.totalorder %s23, 0
      %p205 = por %p203, %p204
      %p206 = scmp.ne.s32.totalorder %s198, %s200
      %p207 = scmp.eq.s32.totalorder %s28, 7
      %p208 = por %p206, %p207
      %p209 = scmp.ne.s32.totalorder %s200, %s201
      %p210 = scmp.eq.s32.totalorder %s28, 0
      %p211 = por %p209, %p210
      %p212 = scmp.ne.s32.totalorder %s200, %s201
      %p213 = scmp.eq.s32.totalorder %s29, 7
      %p214 = por %p212, %p213
      %p216 = scmp.ne.s32.totalorder %s201, %s215
      %p217 = scmp.eq.s32.totalorder %s29, 0
      %p218 = por %p216, %p217
      %s220 = sadd.s32 %s219, 1
      %p223 = scmp.eq.s32.totalorder %s23, 7
      %p224 = scmp.ne.s32.totalorder %s219, %s221
      %p225 = scmp.eq.s32.totalorder %s23, 0
      %p226 = por %p224, %p225
      %p227 = scmp.ne.s32.totalorder %s219, %s221
      %p228 = scmp.eq.s32.totalorder %s28, 7
      %p229 = por %p227, %p228
      %p230 = scmp.ne.s32.totalorder %s221, %s222
      %p231 = scmp.eq.s32.totalorder %s28, 0
      %p232 = por %p230, %p231
      %p233 = scmp.ne.s32.totalorder %s221, %s222
      %p234 = scmp.eq.s32.totalorder %s29, 7
      %p235 = por %p233, %p234
      %p237 = scmp.ne.s32.totalorder %s222, %s236
      %p238 = scmp.eq.s32.totalorder %s29, 0
      %p239 = por %p237, %p238
      %s241 = sadd.s32 %s240, 1
      %p244 = scmp.eq.s32.totalorder %s23, 7
      %p245 = scmp.ne.s32.totalorder %s240, %s242
      %p246 = scmp.eq.s32.totalorder %s23, 0
      %p247 = por %p245, %p246
      %p248 = scmp.ne.s32.totalorder %s240, %s242
      %p249 = scmp.eq.s32.totalorder %s28, 7
      %p250 = por %p248, %p249
      %p251 = scmp.ne.s32.totalorder %s242, %s243
      %p252 = scmp.eq.s32.totalorder %s28, 0
      %p253 = por %p251, %p252
      %p254 = scmp.ne.s32.totalorder %s242, %s243
      %p255 = scmp.eq.s32.totalorder %s29, 7
      %p256 = por %p254, %p255
      %p258 = scmp.ne.s32.totalorder %s243, %s257
      %p259 = scmp.eq.s32.totalorder %s29, 0
      %p260 = por %p258, %p259
      %s262 = sadd.s32 %s261, 1
      %p265 = scmp.eq.s32.totalorder %s23, 7
      %p266 = scmp.ne.s32.totalorder %s261, %s263
      %p267 = scmp.eq.s32.totalorder %s23, 0
      %p268 = por %p266, %p267
      %p269 = scmp.ne.s32.totalorder %s261, %s263
      %p270 = scmp.eq.s32.totalorder %s28, 7
      %p271 = por %p269, %p270
      %p272 = scmp.ne.s32.totalorder %s263, %s264
      %p273 = scmp.eq.s32.totalorder %s28, 0
      %p274 = por %p272, %p273
      %p275 = scmp.ne.s32.totalorder %s263, %s264
      %p276 = scmp.eq.s32.totalorder %s29, 7
      %p277 = por %p275, %p276
      %p279 = scmp.ne.s32.totalorder %s264, %s278
      %p280 = scmp.eq.s32.totalorder %s29, 0
      %p281 = por %p279, %p280
      %s283 = sadd.s32 %s282, 1
      %p286 = scmp.eq.s32.totalorder %s23, 7
      %p287 = scmp.ne.s32.totalorder %s282, %s284
      %p288 = scmp.eq.s32.totalorder %s23, 0
      %p289 = por %p287, %p288
      %p290 = scmp.ne.s32.totalorder %s282, %s284
      %p291 = scmp.eq.s32.totalorder %s28, 7
      %p292 = por %p290, %p291
      %p293 = scmp.ne.s32.totalorder %s284, %s285
      %p294 = scmp.eq.s32.totalorder %s28, 0
      %p295 = por %p293, %p294
      %p296 = scmp.ne.s32.totalorder %s284, %s285
      %p297 = scmp.eq.s32.totalorder %s29, 7
      %p298 = por %p296, %p297
      %p300 = scmp.ne.s32.totalorder %s285, %s299
      %p301 = scmp.eq.s32.totalorder %s29, 0
      %p302 = por %p300, %p301
      %s304 = sadd.s32 %s303, 1
      %p307 = scmp.eq.s32.totalorder %s23, 7
      %p308 = scmp.ne.s32.totalorder %s303, %s305
      %p309 = scmp.eq.s32.totalorder %s23, 0
      %p310 = por %p308, %p309
      %p311 = scmp.ne.s32.totalorder %s303, %s305
      %p312 = scmp.eq.s32.totalorder %s28, 7
      %p313 = por %p311, %p312
      %p314 = scmp.ne.s32.totalorder %s305, %s306
      %p315 = scmp.eq.s32.totalorder %s28, 0
      %p316 = por %p314, %p315
      %p317 = scmp.ne.s32.totalorder %s305, %s306
      %p318 = scmp.eq.s32.totalorder %s29, 7
      %p319 = por %p317, %p318
      %p321 = scmp.ne.s32.totalorder %s306, %s320
      %p322 = scmp.eq.s32.totalorder %s29, 0
      %p323 = por %p321, %p322
      %s325 = sadd.s32 %s324, 1
      %p328 = scmp.eq.s32.totalorder %s23, 7
      %p329 = scmp.ne.s32.totalorder %s324, %s326
      %p330 = scmp.eq.s32.totalorder %s23, 0
      %p331 = por %p329, %p330
      %p332 = scmp.ne.s32.totalorder %s324, %s326
      %p333 = scmp.eq.s32.totalorder %s28, 7
      %p334 = por %p332, %p333
      %p335 = scmp.ne.s32.totalorder %s326, %s327
      %p336 = scmp.eq.s32.totalorder %s28, 0
      %p337 = por %p335, %p336
      %p338 = scmp.ne.s32.totalorder %s326, %s327
      %p339 = scmp.eq.s32.totalorder %s29, 7
      %p340 = por %p338, %p339
      %p342 = scmp.ne.s32.totalorder %s327, %s341
      %p343 = scmp.eq.s32.totalorder %s29, 0
      %p344 = por %p342, %p343
      %s345 = ssub.s32 %s23, %s30
      %p346 = scmp.eq.s32.totalorder %s345, 0
      %s348 = sadd.s32 %s347, 1
      %s349 = scalar_select %p346, %s347, %s348
      %p352 = pneg %p346
      %p353 = scmp.eq.s32.totalorder %s23, 7
      %p354 = por %p352, %p353
      %p355 = scmp.ne.s32.totalorder %s347, %s350
      %p356 = scmp.eq.s32.totalorder %s23, 0
      %p357 = por %p355, %p356
      %p358 = scmp.ne.s32.totalorder %s347, %s350
      %p359 = scmp.eq.s32.totalorder %s28, 7
      %p360 = por %p358, %p359
      %p361 = scmp.ne.s32.totalorder %s350, %s351
      %p362 = scmp.eq.s32.totalorder %s28, 0
      %p363 = por %p361, %p362
      %p364 = scmp.ne.s32.totalorder %s350, %s351
      %p365 = scmp.eq.s32.totalorder %s29, 7
      %p366 = por %p364, %p365
      %p368 = scmp.ne.s32.totalorder %s351, %s367
      %p369 = scmp.eq.s32.totalorder %s29, 0
      %p370 = por %p368, %p369
      %p371 = scmp.le.s32.totalorder 1, %s23
      %p372 = scmp.lt.s32.totalorder %s23, 9
      %p373 = pnand %p371, %p372
      %p374 = pneg %p373
      // Predicated region
      $region9: #{psp_pooling.1} parent=5 // pred_check
        _
      $region10: #{psp_pooling.1} parent=5 // pred_check_branch
        %376 = sbr.rel (%p373) target = $region12
      $region11: #{psp_pooling.1} parent=5 // pred_region
        %s377 = ssub.s32 %s23, 1
        // Predicated region
        $region13: #{psp_pooling.1} parent=11 // pred_check
          %p378 = pneg %p148
        $region14: #{psp_pooling.1} parent=11 // pred_check_branch
          %380 = sbr.rel (%p378) target = $region16
        $region15: #{psp_pooling.1} parent=11 // pred_region
          _
        $region16: #{psp_pooling.1} parent=11 // pred_fallthru
          _
        // Predicated region
        $region17: #{psp_pooling.1} parent=11 // pred_check
          %p381 = pneg %p169
        $region18: #{psp_pooling.1} parent=11 // pred_check_branch
          %383 = sbr.rel (%p381) target = $region20
        $region19: #{psp_pooling.1} parent=11 // pred_region
          _
        $region20: #{psp_pooling.1} parent=11 // pred_fallthru
          _
        // Predicated region
        $region21: #{psp_pooling.1} parent=11 // pred_check
          %p384 = pneg %p190
        $region22: #{psp_pooling.1} parent=11 // pred_check_branch
          %386 = sbr.rel (%p384) target = $region24
        $region23: #{psp_pooling.1} parent=11 // pred_region
          _
        $region24: #{psp_pooling.1} parent=11 // pred_fallthru
          _
        // Predicated region
        $region25: #{psp_pooling.1} parent=11 // pred_check
          %p387 = pneg %p211
        $region26: #{psp_pooling.1} parent=11 // pred_check_branch
          %389 = sbr.rel (%p387) target = $region28
        $region27: #{psp_pooling.1} parent=11 // pred_region
          _
        $region28: #{psp_pooling.1} parent=11 // pred_fallthru
          _
        // Predicated region
        $region29: #{psp_pooling.1} parent=11 // pred_check
          %p390 = pneg %p232
        $region30: #{psp_pooling.1} parent=11 // pred_check_branch
          %392 = sbr.rel (%p390) target = $region32
        $region31: #{psp_pooling.1} parent=11 // pred_region
          _
        $region32: #{psp_pooling.1} parent=11 // pred_fallthru
          _
        // Predicated region
        $region33: #{psp_pooling.1} parent=11 // pred_check
          %p393 = pneg %p253
        $region34: #{psp_pooling.1} parent=11 // pred_check_branch
          %395 = sbr.rel (%p393) target = $region36
        $region35: #{psp_pooling.1} parent=11 // pred_region
          _
        $region36: #{psp_pooling.1} parent=11 // pred_fallthru
          _
        // Predicated region
        $region37: #{psp_pooling.1} parent=11 // pred_check
          %p396 = pneg %p274
        $region38: #{psp_pooling.1} parent=11 // pred_check_branch
          %398 = sbr.rel (%p396) target = $region40
        $region39: #{psp_pooling.1} parent=11 // pred_region
          _
        $region40: #{psp_pooling.1} parent=11 // pred_fallthru
          _
        // Predicated region
        $region41: #{psp_pooling.1} parent=11 // pred_check
          %p399 = pneg %p295
        $region42: #{psp_pooling.1} parent=11 // pred_check_branch
          %401 = sbr.rel (%p399) target = $region44
        $region43: #{psp_pooling.1} parent=11 // pred_region
          _
        $region44: #{psp_pooling.1} parent=11 // pred_fallthru
          _
        // Predicated region
        $region45: #{psp_pooling.1} parent=11 // pred_check
          %p402 = pneg %p316
        $region46: #{psp_pooling.1} parent=11 // pred_check_branch
          %404 = sbr.rel (%p402) target = $region48
        $region47: #{psp_pooling.1} parent=11 // pred_region
          _
        $region48: #{psp_pooling.1} parent=11 // pred_fallthru
          _
        // Predicated region
        $region49: #{psp_pooling.1} parent=11 // pred_check
          %p405 = pneg %p337
        $region50: #{psp_pooling.1} parent=11 // pred_check_branch
          %407 = sbr.rel (%p405) target = $region52
        $region51: #{psp_pooling.1} parent=11 // pred_region
          _
        $region52: #{psp_pooling.1} parent=11 // pred_fallthru
          _
      $region12: #{psp_pooling.1} parent=5 // pred_fallthru
        _
      %p408 = scmp.lt.s32.totalorder %s23, 8
      // Predicated region
      $region53: #{psp_pooling.1} parent=5 // pred_check
        %p409 = pneg %p408
      $region54: #{psp_pooling.1} parent=5 // pred_check_branch
        %411 = sbr.rel (%p409) target = $region56
      $region55: #{psp_pooling.1} parent=5 // pred_region
        // Predicated region
        $region57: #{psp_pooling.1} parent=55 // pred_check
          %p412 = pneg %p43
        $region58: #{psp_pooling.1} parent=55 // pred_check_branch
          %414 = sbr.rel (%p412) target = $region60
        $region59: #{psp_pooling.1} parent=55 // pred_region
          %p415 = scmp.lt.s32.totalorder %s23, 7
          %s416 = scalar_select %p415, %s23, 7
          %s417 = smul.addr %s416, 32
          %s418 = smul.addr %s417, 4
          %s419 = scalar_lea.vmem %s0, %s418
        $region60: #{psp_pooling.1} parent=55 // pred_fallthru
          _
        // Predicated region
        $region61: #{psp_pooling.1} parent=55 // pred_check
          %p420 = pneg %p69
        $region62: #{psp_pooling.1} parent=55 // pred_check_branch
          %422 = sbr.rel (%p420) target = $region64
        $region63: #{psp_pooling.1} parent=55 // pred_region
          %p423 = scmp.lt.s32.totalorder %s23, 7
          %s424 = scalar_select %p423, %s23, 7
          %s425 = smul.addr %s424, 8
          %s426 = smul.addr %s425, 4
          %s427 = scalar_lea.vmem %s1, %s426
        $region64: #{psp_pooling.1} parent=55 // pred_fallthru
          _
        // Predicated region
        $region65: #{psp_pooling.1} parent=55 // pred_check
          %p428 = pneg %p95
        $region66: #{psp_pooling.1} parent=55 // pred_check_branch
          %430 = sbr.rel (%p428) target = $region68
        $region67: #{psp_pooling.1} parent=55 // pred_region
          %p431 = scmp.lt.s32.totalorder %s23, 7
          %s432 = scalar_select %p431, %s23, 7
          %s433 = smul.addr %s432, 2
          %s434 = smul.addr %s433, 4
          %s435 = scalar_lea.vmem %s2, %s434
        $region68: #{psp_pooling.1} parent=55 // pred_fallthru
          _
        // Predicated region
        $region69: #{psp_pooling.1} parent=55 // pred_check
          %p436 = pneg %p121
        $region70: #{psp_pooling.1} parent=55 // pred_check_branch
          %438 = sbr.rel (%p436) target = $region72
        $region71: #{psp_pooling.1} parent=55 // pred_region
          %p439 = scmp.lt.s32.totalorder %s23, 7
          %s440 = scalar_select %p439, %s23, 7
          %s441 = smul.addr %s440, 2
          %s442 = scalar_lea.vmem %s3, %s441
        $region72: #{psp_pooling.1} parent=55 // pred_fallthru
          _
      $region56: #{psp_pooling.1} parent=5 // pred_fallthru
        _
      %p443 = scmp.le.s32.totalorder 1, %s23
      %p444 = scmp.lt.s32.totalorder %s23, 9
      %p445 = pnand %p443, %p444
      %p446 = pneg %p445
      // Predicated region
      $region73: #{psp_pooling.1} parent=5 // pred_check
        _
      $region74: #{psp_pooling.1} parent=5 // pred_check_branch
        %448 = sbr.rel (%p445) target = $region76
      $region75: #{psp_pooling.1} parent=5 // pred_region
        %s449 = ssub.s32 %s23, 1
        %p450 = scmp.lt.s32.totalorder %s28, 7
        %s451 = scalar_select %p450, %s28, 7
        %s452 = smul.addr %s451, 32
        %s453 = smul.addr %s452, 4
        %s454 = scalar_lea.vmem %s0, %s453
        %p455 = pneg %p49
        %p456 = pneg %p46
        %p457 = scmp.lt.s32.totalorder %s28, 7
        %s458 = scalar_select %p457, %s28, 7
        %s459 = smul.addr %s458, 8
        %s460 = smul.addr %s459, 4
        %s461 = scalar_lea.vmem %s1, %s460
        %p462 = pneg %p75
        %p463 = pneg %p72
        %p464 = scmp.lt.s32.totalorder %s28, 7
        %s465 = scalar_select %p464, %s28, 7
        %s466 = smul.addr %s465, 2
        %s467 = smul.addr %s466, 4
        %s468 = scalar_lea.vmem %s2, %s467
        %p469 = pneg %p101
        %p470 = pneg %p98
        %p471 = scmp.lt.s32.totalorder %s28, 7
        %s472 = scalar_select %p471, %s28, 7
        %s473 = smul.addr %s472, 2
        %s474 = scalar_lea.vmem %s3, %s473
        %p475 = pneg %p127
        %p476 = pneg %p124
        %p477 = pneg %p148
        %p478 = pneg %p145
        %p479 = pneg %p169
        %p480 = pneg %p166
        %p481 = pneg %p190
        %p482 = pneg %p187
        %p483 = pneg %p211
        %p484 = pneg %p208
        %p485 = pneg %p232
        %p486 = pneg %p229
        %p487 = pneg %p253
        %p488 = pneg %p250
        %p489 = pneg %p274
        %p490 = pneg %p271
        %p491 = pneg %p295
        %p492 = pneg %p292
        %p493 = pneg %p316
        %p494 = pneg %p313
        %p495 = pneg %p337
        %p496 = pneg %p334
        %p497 = pneg %p363
        %p498 = pneg %p360
        %s499 = sand.u32 %s350, 1
        %s500 = scalar_lea.sflag [#allocation3], %s499
        %s501 = sand.u32 %s350, 1
        %s502 = smul.addr %s501, 256
        %s503 = scalar_lea.vmem [#allocation2], %s502
        %p504 = scmp.lt.s32.totalorder %s28, 7
        %s505 = scalar_select %p504, %s28, 7
        %s506 = smul.addr %s505, 32
        %s507 = smul.addr %s506, 4
        %s508 = scalar_lea.vmem %s0, %s507
        %p509 = scmp.lt.s32.totalorder %s28, 7
        %s510 = scalar_select %p509, %s28, 7
        %s511 = smul.addr %s510, 8
        %s512 = smul.addr %s511, 4
        %s513 = scalar_lea.vmem %s1, %s512
        %p514 = scmp.lt.s32.totalorder %s28, 7
        %s515 = scalar_select %p514, %s28, 7
        %s516 = smul.addr %s515, 2
        %s517 = smul.addr %s516, 4
        %s518 = scalar_lea.vmem %s2, %s517
        %p519 = scmp.lt.s32.totalorder %s28, 7
        %s520 = scalar_select %p519, %s28, 7
        %s521 = smul.addr %s520, 2
        %s522 = scalar_lea.vmem %s3, %s521
        %v524 = vld [vmem:[%s508] sm:$0xf]
        %v525 = vld [vmem:[%s508 + $0x4] sm:$0xf]
        %v526 = vld [vmem:[%s508 + $0x8] sm:$0xf]
        %v527 = vld [vmem:[%s508 + $0xc] sm:$0xf]
        %v528 = vld [vmem:[%s508 + $0x10] sm:$0xf]
        %v529 = vld [vmem:[%s508 + $0x14] sm:$0xf]
        %v530 = vld [vmem:[%s508 + $0x18] sm:$0xf]
        %v531 = vld [vmem:[%s508 + $0x1c] sm:$0xf]
        %v532 = vld [vmem:[%s508 + $0x20] sm:$0xf]
        %v533 = vld [vmem:[%s508 + $0x24] sm:$0xf]
        %v534 = vld [vmem:[%s508 + $0x28] sm:$0xf]
        %v535 = vld [vmem:[%s508 + $0x2c] sm:$0xf]
        %v536 = vld [vmem:[%s508 + $0x30] sm:$0xf]
        %v537 = vld [vmem:[%s508 + $0x34] sm:$0xf]
        %v538 = vld [vmem:[%s508 + $0x38] sm:$0xf]
        %v539 = vld [vmem:[%s508 + $0x3c] sm:$0xf]
        %v540 = vld [vmem:[%s508 + $0x40] sm:$0xf]
        %v541 = vld [vmem:[%s508 + $0x44] sm:$0xf]
        %v542 = vld [vmem:[%s508 + $0x48] sm:$0xf]
        %v543 = vld [vmem:[%s508 + $0x4c] sm:$0xf]
        %v544 = vld [vmem:[%s508 + $0x50] sm:$0xf]
        %v545 = vld [vmem:[%s508 + $0x54] sm:$0xf]
        %v546 = vld [vmem:[%s508 + $0x58] sm:$0xf]
        %v547 = vld [vmem:[%s508 + $0x5c] sm:$0xf]
        %v548 = vld [vmem:[%s508 + $0x60] sm:$0xf]
        %v549 = vld [vmem:[%s508 + $0x64] sm:$0xf]
        %v550 = vld [vmem:[%s508 + $0x68] sm:$0xf]
        %v551 = vld [vmem:[%s508 + $0x6c] sm:$0xf]
        %v552 = vld [vmem:[%s508 + $0x70] sm:$0xf]
        %v553 = vld [vmem:[%s508 + $0x74] sm:$0xf]
        %v554 = vld [vmem:[%s508 + $0x78] sm:$0xf]
        %v555 = vld [vmem:[%s508 + $0x7c] sm:$0xf]
        %v556 = vld [vmem:[%s9] sm:$0xf]
        %v557 = vld [vmem:[%s9 + $0x4] sm:$0xf]
        %v558 = vld [vmem:[%s9 + $0x8] sm:$0xf]
        %v559 = vld [vmem:[%s9 + $0xc] sm:$0xf]
        %v560 = vld [vmem:[%s11] sm:$0x1]
        %v562 = vlaneseq
        %v563 = vshrl.u32 %v562, 7
        %v564 = vsub.s32 0, %v563
        %v565 = vrot.slane %v560, %v564
        %v599 = vunpack.c.l.b16 %v524
        %v600 = vunpack.c.l.b16 %v525
        %v601 = vunpack.c.l.b16 %v526
        %v602 = vunpack.c.l.b16 %v527
        %v603 = vunpack.c.l.b16 %v528
        %v604 = vunpack.c.l.b16 %v529
        %v605 = vunpack.c.l.b16 %v530
        %v606 = vunpack.c.l.b16 %v531
        %v607 = vunpack.c.l.b16 %v532
        %v608 = vunpack.c.l.b16 %v533
        %v609 = vunpack.c.l.b16 %v534
        %v610 = vunpack.c.l.b16 %v535
        %v611 = vunpack.c.l.b16 %v536
        %v612 = vunpack.c.l.b16 %v537
        %v613 = vunpack.c.l.b16 %v538
        %v614 = vunpack.c.l.b16 %v539
        %v615 = vunpack.c.l.b16 %v540
        %v616 = vunpack.c.l.b16 %v541
        %v617 = vunpack.c.l.b16 %v542
        %v618 = vunpack.c.l.b16 %v543
        %v619 = vunpack.c.l.b16 %v544
        %v620 = vunpack.c.l.b16 %v545
        %v621 = vunpack.c.l.b16 %v546
        %v622 = vunpack.c.l.b16 %v547
        %v623 = vunpack.c.l.b16 %v548
        %v624 = vunpack.c.l.b16 %v549
        %v625 = vunpack.c.l.b16 %v550
        %v626 = vunpack.c.l.b16 %v551
        %v627 = vunpack.c.l.b16 %v552
        %v628 = vunpack.c.l.b16 %v553
        %v629 = vunpack.c.l.b16 %v554
        %v630 = vunpack.c.l.b16 %v555
        %v631 = vpack.c.b16 %v600, %v599
        %v632 = vpack.c.b16 %v602, %v601
        %v633 = vpack.c.b16 %v604, %v603
        %v634 = vpack.c.b16 %v606, %v605
        %v635 = vpack.c.b16 %v608, %v607
        %v636 = vpack.c.b16 %v610, %v609
        %v637 = vpack.c.b16 %v612, %v611
        %v638 = vpack.c.b16 %v614, %v613
        %v639 = vpack.c.b16 %v616, %v615
        %v640 = vpack.c.b16 %v618, %v617
        %v641 = vpack.c.b16 %v620, %v619
        %v642 = vpack.c.b16 %v622, %v621
        %v643 = vpack.c.b16 %v624, %v623
        %v644 = vpack.c.b16 %v626, %v625
        %v645 = vpack.c.b16 %v628, %v627
        %v646 = vpack.c.b16 %v630, %v629
        %v651 = vunpack.c.l.b16 %v556
        %v652 = vunpack.c.l.b16 %v557
        %v653 = vunpack.c.l.b16 %v558
        %v654 = vunpack.c.l.b16 %v559
        %v655 = vpack.c.b16 %v652, %v651
        %v656 = vpack.c.b16 %v654, %v653
        %vm659 = vcmask 261120
        %v661 = vsel %vm659, %v631, 0
        %v664 = vsel %vm659, %v632, 0
        %v667 = vsel %vm659, %v633, 0
        %v670 = vsel %vm659, %v634, 0
        %v673 = vsel %vm659, %v635, 0
        %v676 = vsel %vm659, %v636, 0
        %v679 = vsel %vm659, %v637, 0
        %v682 = vsel %vm659, %v638, 0
        %v685 = vsel %vm659, %v639, 0
        %v688 = vsel %vm659, %v640, 0
        %v691 = vsel %vm659, %v641, 0
        %v694 = vsel %vm659, %v642, 0
        %v697 = vsel %vm659, %v643, 0
        %v700 = vsel %vm659, %v644, 0
        %v703 = vsel %vm659, %v645, 0
        %v706 = vsel %vm659, %v646, 0
        %708 = vmatprep.subr.bf16.mxu0 0
        %709 = vmatpush1.bf16.msra.mxu0 %v655
        %710 = vmatprep.subr.bf16.mxu0 0
        %711 = vmatpush1.bf16.msra.mxu0 %v656
        %712 = vmatprep.subr.bf16.mxu0 0
        %713 = vmatpush1.bf16.msra.mxu0 0
        %714 = vmatprep.subr.bf16.mxu0 0
        %715 = vmatpush1.bf16.msra.mxu0 0
        %716 = vmatprep.subr.bf16.mxu0 0
        %717 = vmatpush1.bf16.msra.mxu0 0
        %718 = vmatprep.subr.bf16.mxu0 0
        %719 = vmatpush1.bf16.msra.mxu0 0
        %720 = vmatprep.subr.bf16.mxu0 0
        %721 = vmatpush1.bf16.msra.mxu0 0
        %722 = vmatprep.subr.bf16.mxu0 0
        %723 = vmatpush1.bf16.msra.mxu0 0
        %724 = vmatprep.subr.bf16.mxu0 0
        %725 = vmatpush1.bf16.msra.mxu0 0
        %726 = vmatprep.subr.bf16.mxu0 0
        %727 = vmatpush1.bf16.msra.mxu0 0
        %728 = vmatprep.subr.bf16.mxu0 0
        %729 = vmatpush1.bf16.msra.mxu0 0
        %730 = vmatprep.subr.bf16.mxu0 0
        %731 = vmatpush1.bf16.msra.mxu0 0
        %732 = vmatprep.subr.bf16.mxu0 0
        %733 = vmatpush1.bf16.msra.mxu0 0
        %734 = vmatprep.subr.bf16.mxu0 0
        %735 = vmatpush1.bf16.msra.mxu0 0
        %736 = vmatprep.subr.bf16.mxu0 0
        %737 = vmatpush1.bf16.msra.mxu0 0
        %738 = vmatprep.subr.bf16.mxu0 0
        %739 = vmatpush1.bf16.msra.mxu0 0
        %740 = vmatprep.mubr.bf16.mxu0 0
        %741 = vmatmul.mubr.bf16.gmra.mrb[0].mxu0 %v661
        %v742 = vpop.f32.mrb[0].mxu0
        %v743 = vadd.f32 %v565, %v742
        %v744 = vpop.f32.mrb[0].mxu0
        %v745 = vpop.f32.mrb[0].mxu0
        %v746 = vadd.f32 %v565, %v745
        %v747 = vpop.f32.mrb[0].mxu0
        %748 = vmatprep.mubr.bf16.mxu0 0
        %749 = vmatmul.mubr.bf16.gmra.mrb[0].mxu0 %v664
        %v750 = vpop.f32.mrb[0].mxu0
        %v751 = vadd.f32 %v565, %v750
        %v752 = vpop.f32.mrb[0].mxu0
        %v753 = vpop.f32.mrb[0].mxu0
        %v754 = vadd.f32 %v565, %v753
        %v755 = vpop.f32.mrb[0].mxu0
        %756 = vmatprep.mubr.bf16.mxu0 0
        %757 = vmatmul.mubr.bf16.gmra.mrb[0].mxu0 %v667
        %v758 = vpop.f32.mrb[0].mxu0
        %v759 = vadd.f32 %v565, %v758
        %v760 = vpop.f32.mrb[0].mxu0
        %v761 = vpop.f32.mrb[0].mxu0
        %v762 = vadd.f32 %v565, %v761
        %v763 = vpop.f32.mrb[0].mxu0
        %764 = vmatprep.mubr.bf16.mxu0 0
        %765 = vmatmul.mubr.bf16.gmra.mrb[0].mxu0 %v670
        %v766 = vpop.f32.mrb[0].mxu0
        %v767 = vadd.f32 %v565, %v766
        %v768 = vpop.f32.mrb[0].mxu0
        %v769 = vpop.f32.mrb[0].mxu0
        %v770 = vadd.f32 %v565, %v769
        %v771 = vpop.f32.mrb[0].mxu0
        %772 = vmatprep.mubr.bf16.mxu0 0
        %773 = vmatmul.mubr.bf16.gmra.mrb[0].mxu0 %v673
        %v774 = vpop.f32.mrb[0].mxu0
        %v775 = vadd.f32 %v565, %v774
        %v776 = vpop.f32.mrb[0].mxu0
        %v777 = vpop.f32.mrb[0].mxu0
        %v778 = vadd.f32 %v565, %v777
        %v779 = vpop.f32.mrb[0].mxu0
        %780 = vmatprep.mubr.bf16.mxu0 0
        %781 = vmatmul.mubr.bf16.gmra.mrb[0].mxu0 %v676
        %v782 = vpop.f32.mrb[0].mxu0
        %v783 = vadd.f32 %v565, %v782
        %v784 = vpop.f32.mrb[0].mxu0
        %v785 = vpop.f32.mrb[0].mxu0
        %v786 = vadd.f32 %v565, %v785
        %v787 = vpop.f32.mrb[0].mxu0
        %788 = vmatprep.mubr.bf16.mxu0 0
        %789 = vmatmul.mubr.bf16.gmra.mrb[0].mxu0 %v679
        %v790 = vpop.f32.mrb[0].mxu0
        %v791 = vadd.f32 %v565, %v790
        %v792 = vpop.f32.mrb[0].mxu0
        %v793 = vpop.f32.mrb[0].mxu0
        %v794 = vadd.f32 %v565, %v793
        %v795 = vpop.f32.mrb[0].mxu0
        %796 = vmatprep.mubr.bf16.mxu0 0
        %797 = vmatmul.mubr.bf16.gmra.mrb[0].mxu0 %v682
        %v798 = vpop.f32.mrb[0].mxu0
        %v799 = vadd.f32 %v565, %v798
        %v800 = vpop.f32.mrb[0].mxu0
        %v801 = vpop.f32.mrb[0].mxu0
        %v802 = vadd.f32 %v565, %v801
        %v803 = vpop.f32.mrb[0].mxu0
        %804 = vmatprep.mubr.bf16.mxu0 0
        %805 = vmatmul.mubr.bf16.gmra.mrb[0].mxu0 %v685
        %v806 = vpop.f32.mrb[0].mxu0
        %v807 = vadd.f32 %v565, %v806
        %v808 = vpop.f32.mrb[0].mxu0
        %v809 = vpop.f32.mrb[0].mxu0
        %v810 = vadd.f32 %v565, %v809
        %v811 = vpop.f32.mrb[0].mxu0
        %812 = vmatprep.mubr.bf16.mxu0 0
        %813 = vmatmul.mubr.bf16.gmra.mrb[0].mxu0 %v688
        %v814 = vpop.f32.mrb[0].mxu0
        %v815 = vadd.f32 %v565, %v814
        %v816 = vpop.f32.mrb[0].mxu0
        %v817 = vpop.f32.mrb[0].mxu0
        %v818 = vadd.f32 %v565, %v817
        %v819 = vpop.f32.mrb[0].mxu0
        %820 = vmatprep.mubr.bf16.mxu0 0
        %821 = vmatmul.mubr.bf16.gmra.mrb[0].mxu0 %v691
        %v822 = vpop.f32.mrb[0].mxu0
        %v823 = vadd.f32 %v565, %v822
        %v824 = vpop.f32.mrb[0].mxu0
        %v825 = vpop.f32.mrb[0].mxu0
        %v826 = vadd.f32 %v565, %v825
        %v827 = vpop.f32.mrb[0].mxu0
        %828 = vmatprep.mubr.bf16.mxu0 0
        %829 = vmatmul.mubr.bf16.gmra.mrb[0].mxu0 %v694
        %v830 = vpop.f32.mrb[0].mxu0
        %v831 = vadd.f32 %v565, %v830
        %v832 = vpop.f32.mrb[0].mxu0
        %v833 = vpop.f32.mrb[0].mxu0
        %v834 = vadd.f32 %v565, %v833
        %v835 = vpop.f32.mrb[0].mxu0
        %836 = vmatprep.mubr.bf16.mxu0 0
        %837 = vmatmul.mubr.bf16.gmra.mrb[0].mxu0 %v697
        %v838 = vpop.f32.mrb[0].mxu0
        %v839 = vadd.f32 %v565, %v838
        %v840 = vpop.f32.mrb[0].mxu0
        %v841 = vpop.f32.mrb[0].mxu0
        %v842 = vadd.f32 %v565, %v841
        %v843 = vpop.f32.mrb[0].mxu0
        %844 = vmatprep.mubr.bf16.mxu0 0
        %845 = vmatmul.mubr.bf16.gmra.mrb[0].mxu0 %v700
        %v846 = vpop.f32.mrb[0].mxu0
        %v847 = vadd.f32 %v565, %v846
        %v848 = vpop.f32.mrb[0].mxu0
        %v849 = vpop.f32.mrb[0].mxu0
        %v850 = vadd.f32 %v565, %v849
        %v851 = vpop.f32.mrb[0].mxu0
        %852 = vmatprep.mubr.bf16.mxu0 0
        %853 = vmatmul.mubr.bf16.gmra.mrb[0].mxu0 %v703
        %v854 = vpop.f32.mrb[0].mxu0
        %v855 = vadd.f32 %v565, %v854
        %v856 = vpop.f32.mrb[0].mxu0
        %v857 = vpop.f32.mrb[0].mxu0
        %v858 = vadd.f32 %v565, %v857
        %v859 = vpop.f32.mrb[0].mxu0
        %860 = vmatprep.mubr.bf16.mxu0 0
        %861 = vmatmul.mubr.bf16.gmra.mrb[0].mxu0 %v706
        %v862 = vpop.f32.mrb[0].mxu0
        %v863 = vadd.f32 %v565, %v862
        %v864 = vpop.f32.mrb[0].mxu0
        %v865 = vpop.f32.mrb[0].mxu0
        %v866 = vadd.f32 %v565, %v865
        %v867 = vpop.f32.mrb[0].mxu0
        %868 = vdwg.mxu0
        %v869 = vld [vmem:[%s7] sm:$0xf]
        %v870 = vld [vmem:[%s7 + $0x4] sm:$0xf]
        %v871 = vld [vmem:[%s7 + $0x8] sm:$0xf]
        %v872 = vld [vmem:[%s7 + $0xc] sm:$0xf]
        %v873 = vld [vmem:[%s8] sm:$0x1]
        %v874 = vlaneseq
        %v875 = vshrl.u32 %v874, 7
        %v876 = vsub.s32 0, %v875
        %v877 = vrot.slane %v873, %v876
        %v882 = vunpack.c.l.b16 %v869
        %v883 = vunpack.c.l.b16 %v870
        %v884 = vunpack.c.l.b16 %v871
        %v885 = vunpack.c.l.b16 %v872
        %v886 = vpack.c.b16 %v883, %v882
        %v887 = vpack.c.b16 %v885, %v884
        %890 = vmatprep.subr.bf16.mxu0 0
        %891 = vmatpush1.bf16.msra.mxu0 %v886
        %892 = vmatprep.subr.bf16.mxu0 0
        %893 = vmatpush1.bf16.msra.mxu0 %v887
        %894 = vmatprep.subr.bf16.mxu0 0
        %895 = vmatpush1.bf16.msra.mxu0 0
        %896 = vmatprep.subr.bf16.mxu0 0
        %897 = vmatpush1.bf16.msra.mxu0 0
        %898 = vmatprep.subr.bf16.mxu0 0
        %899 = vmatpush1.bf16.msra.mxu0 0
        %900 = vmatprep.subr.bf16.mxu0 0
        %901 = vmatpush1.bf16.msra.mxu0 0
        %902 = vmatprep.subr.bf16.mxu0 0
        %903 = vmatpush1.bf16.msra.mxu0 0
        %904 = vmatprep.subr.bf16.mxu0 0
        %905 = vmatpush1.bf16.msra.mxu0 0
        %906 = vmatprep.subr.bf16.mxu0 0
        %907 = vmatpush1.bf16.msra.mxu0 0
        %908 = vmatprep.subr.bf16.mxu0 0
        %909 = vmatpush1.bf16.msra.mxu0 0
        %910 = vmatprep.subr.bf16.mxu0 0
        %911 = vmatpush1.bf16.msra.mxu0 0
        %912 = vmatprep.subr.bf16.mxu0 0
        %913 = vmatpush1.bf16.msra.mxu0 0
        %914 = vmatprep.subr.bf16.mxu0 0
        %915 = vmatpush1.bf16.msra.mxu0 0
        %916 = vmatprep.subr.bf16.mxu0 0
        %917 = vmatpush1.bf16.msra.mxu0 0
        %918 = vmatprep.subr.bf16.mxu0 0
        %919 = vmatpush1.bf16.msra.mxu0 0
        %920 = vmatprep.subr.bf16.mxu0 0
        %921 = vmatpush1.bf16.msra.mxu0 0
        %922 = vmatprep.mubr.bf16.mxu0 0
        %923 = vmatmul.mubr.bf16.gmra.mrb[0].mxu0 %v661
        %v924 = vpop.f32.mrb[0].mxu0
        %v925 = vadd.f32 %v877, %v924
        %v926 = vpop.f32.mrb[0].mxu0
        %v927 = vpop.f32.mrb[0].mxu0
        %v928 = vadd.f32 %v877, %v927
        %v929 = vpop.f32.mrb[0].mxu0
        %930 = vmatprep.mubr.bf16.mxu0 0
        %931 = vmatmul.mubr.bf16.gmra.mrb[0].mxu0 %v664
        %v932 = vpop.f32.mrb[0].mxu0
        %v933 = vadd.f32 %v877, %v932
        %v934 = vpop.f32.mrb[0].mxu0
        %v935 = vpop.f32.mrb[0].mxu0
        %v936 = vadd.f32 %v877, %v935
        %v937 = vpop.f32.mrb[0].mxu0
        %938 = vmatprep.mubr.bf16.mxu0 0
        %939 = vmatmul.mubr.bf16.gmra.mrb[0].mxu0 %v667
        %v940 = vpop.f32.mrb[0].mxu0
        %v941 = vadd.f32 %v877, %v940
        %v942 = vpop.f32.mrb[0].mxu0
        %v943 = vpop.f32.mrb[0].mxu0
        %v944 = vadd.f32 %v877, %v943
        %v945 = vpop.f32.mrb[0].mxu0
        %946 = vmatprep.mubr.bf16.mxu0 0
        %947 = vmatmul.mubr.bf16.gmra.mrb[0].mxu0 %v670
        %v948 = vpop.f32.mrb[0].mxu0
        %v949 = vadd.f32 %v877, %v948
        %v950 = vpop.f32.mrb[0].mxu0
        %v951 = vpop.f32.mrb[0].mxu0
        %v952 = vadd.f32 %v877, %v951
        %v953 = vpop.f32.mrb[0].mxu0
        %954 = vmatprep.mubr.bf16.mxu0 0
        %955 = vmatmul.mubr.bf16.gmra.mrb[0].mxu0 %v673
        %v956 = vpop.f32.mrb[0].mxu0
        %v957 = vadd.f32 %v877, %v956
        %v958 = vpop.f32.mrb[0].mxu0
        %v959 = vpop.f32.mrb[0].mxu0
        %v960 = vadd.f32 %v877, %v959
        %v961 = vpop.f32.mrb[0].mxu0
        %962 = vmatprep.mubr.bf16.mxu0 0
        %963 = vmatmul.mubr.bf16.gmra.mrb[0].mxu0 %v676
        %v964 = vpop.f32.mrb[0].mxu0
        %v965 = vadd.f32 %v877, %v964
        %v966 = vpop.f32.mrb[0].mxu0
        %v967 = vpop.f32.mrb[0].mxu0
        %v968 = vadd.f32 %v877, %v967
        %v969 = vpop.f32.mrb[0].mxu0
        %970 = vmatprep.mubr.bf16.mxu0 0
        %971 = vmatmul.mubr.bf16.gmra.mrb[0].mxu0 %v679
        %v972 = vpop.f32.mrb[0].mxu0
        %v973 = vadd.f32 %v877, %v972
        %v974 = vpop.f32.mrb[0].mxu0
        %v975 = vpop.f32.mrb[0].mxu0
        %v976 = vadd.f32 %v877, %v975
        %v977 = vpop.f32.mrb[0].mxu0
        %978 = vmatprep.mubr.bf16.mxu0 0
        %979 = vmatmul.mubr.bf16.gmra.mrb[0].mxu0 %v682
        %v980 = vpop.f32.mrb[0].mxu0
        %v981 = vadd.f32 %v877, %v980
        %v982 = vpop.f32.mrb[0].mxu0
        %v983 = vpop.f32.mrb[0].mxu0
        %v984 = vadd.f32 %v877, %v983
        %v985 = vpop.f32.mrb[0].mxu0
        %986 = vmatprep.mubr.bf16.mxu0 0
        %987 = vmatmul.mubr.bf16.gmra.mrb[0].mxu0 %v685
        %v988 = vpop.f32.mrb[0].mxu0
        %v989 = vadd.f32 %v877, %v988
        %v990 = vpop.f32.mrb[0].mxu0
        %v991 = vpop.f32.mrb[0].mxu0
        %v992 = vadd.f32 %v877, %v991
        %v993 = vpop.f32.mrb[0].mxu0
        %994 = vmatprep.mubr.bf16.mxu0 0
        %995 = vmatmul.mubr.bf16.gmra.mrb[0].mxu0 %v688
        %v996 = vpop.f32.mrb[0].mxu0
        %v997 = vadd.f32 %v877, %v996
        %v998 = vpop.f32.mrb[0].mxu0
        %v999 = vpop.f32.mrb[0].mxu0
        %v1000 = vadd.f32 %v877, %v999
        %v1001 = vpop.f32.mrb[0].mxu0
        %1002 = vmatprep.mubr.bf16.mxu0 0
        %1003 = vmatmul.mubr.bf16.gmra.mrb[0].mxu0 %v691
        %v1004 = vpop.f32.mrb[0].mxu0
        %v1005 = vadd.f32 %v877, %v1004
        %v1006 = vpop.f32.mrb[0].mxu0
        %v1007 = vpop.f32.mrb[0].mxu0
        %v1008 = vadd.f32 %v877, %v1007
        %v1009 = vpop.f32.mrb[0].mxu0
        %1010 = vmatprep.mubr.bf16.mxu0 0
        %1011 = vmatmul.mubr.bf16.gmra.mrb[0].mxu0 %v694
        %v1012 = vpop.f32.mrb[0].mxu0
        %v1013 = vadd.f32 %v877, %v1012
        %v1014 = vpop.f32.mrb[0].mxu0
        %v1015 = vpop.f32.mrb[0].mxu0
        %v1016 = vadd.f32 %v877, %v1015
        %v1017 = vpop.f32.mrb[0].mxu0
        %1018 = vmatprep.mubr.bf16.mxu0 0
        %1019 = vmatmul.mubr.bf16.gmra.mrb[0].mxu0 %v697
        %v1020 = vpop.f32.mrb[0].mxu0
        %v1021 = vadd.f32 %v877, %v1020
        %v1022 = vpop.f32.mrb[0].mxu0
        %v1023 = vpop.f32.mrb[0].mxu0
        %v1024 = vadd.f32 %v877, %v1023
        %v1025 = vpop.f32.mrb[0].mxu0
        %1026 = vmatprep.mubr.bf16.mxu0 0
        %1027 = vmatmul.mubr.bf16.gmra.mrb[0].mxu0 %v700
        %v1028 = vpop.f32.mrb[0].mxu0
        %v1029 = vadd.f32 %v877, %v1028
        %v1030 = vpop.f32.mrb[0].mxu0
        %v1031 = vpop.f32.mrb[0].mxu0
        %v1032 = vadd.f32 %v877, %v1031
        %v1033 = vpop.f32.mrb[0].mxu0
        %1034 = vmatprep.mubr.bf16.mxu0 0
        %1035 = vmatmul.mubr.bf16.gmra.mrb[0].mxu0 %v703
        %v1036 = vpop.f32.mrb[0].mxu0
        %v1037 = vadd.f32 %v877, %v1036
        %v1038 = vpop.f32.mrb[0].mxu0
        %v1039 = vpop.f32.mrb[0].mxu0
        %v1040 = vadd.f32 %v877, %v1039
        %v1041 = vpop.f32.mrb[0].mxu0
        %1042 = vmatprep.mubr.bf16.mxu0 0
        %1043 = vmatmul.mubr.bf16.gmra.mrb[0].mxu0 %v706
        %v1044 = vpop.f32.mrb[0].mxu0
        %v1045 = vadd.f32 %v877, %v1044
        %v1046 = vpop.f32.mrb[0].mxu0
        %v1047 = vpop.f32.mrb[0].mxu0
        %v1048 = vadd.f32 %v877, %v1047
        %v1049 = vpop.f32.mrb[0].mxu0
        %1050 = vdwg.mxu0
        %vm1051 = vcmask 64512
        %v1052 = vsel %vm1051, %v925, 0.0
        %1053 = vadd.xlane.f32.xlu0 %v1052
        %v1054 = vpop.xlane.xlu0 %1053
        %v1055 = vsel %vm1051, %v928, 0.0
        %1056 = vadd.xlane.f32.xlu0 %v1055
        %v1057 = vpop.xlane.xlu0 %1056
        %v1058 = vsel %vm1051, %v933, 0.0
        %1059 = vadd.xlane.f32.xlu0 %v1058
        %v1060 = vpop.xlane.xlu0 %1059
        %v1061 = vsel %vm1051, %v936, 0.0
        %1062 = vadd.xlane.f32.xlu0 %v1061
        %v1063 = vpop.xlane.xlu0 %1062
        %v1064 = vsel %vm1051, %v941, 0.0
        %1065 = vadd.xlane.f32.xlu0 %v1064
        %v1066 = vpop.xlane.xlu0 %1065
        %v1067 = vsel %vm1051, %v944, 0.0
        %1068 = vadd.xlane.f32.xlu0 %v1067
        %v1069 = vpop.xlane.xlu0 %1068
        %v1070 = vsel %vm1051, %v949, 0.0
        %1071 = vadd.xlane.f32.xlu0 %v1070
        %v1072 = vpop.xlane.xlu0 %1071
        %v1073 = vsel %vm1051, %v952, 0.0
        %1074 = vadd.xlane.f32.xlu0 %v1073
        %v1075 = vpop.xlane.xlu0 %1074
        %v1076 = vsel %vm1051, %v957, 0.0
        %1077 = vadd.xlane.f32.xlu0 %v1076
        %v1078 = vpop.xlane.xlu0 %1077
        %v1079 = vsel %vm1051, %v960, 0.0
        %1080 = vadd.xlane.f32.xlu0 %v1079
        %v1081 = vpop.xlane.xlu0 %1080
        %v1082 = vsel %vm1051, %v965, 0.0
        %1083 = vadd.xlane.f32.xlu0 %v1082
        %v1084 = vpop.xlane.xlu0 %1083
        %v1085 = vsel %vm1051, %v968, 0.0
        %1086 = vadd.xlane.f32.xlu0 %v1085
        %v1087 = vpop.xlane.xlu0 %1086
        %v1088 = vsel %vm1051, %v973, 0.0
        %1089 = vadd.xlane.f32.xlu0 %v1088
        %v1090 = vpop.xlane.xlu0 %1089
        %v1091 = vsel %vm1051, %v976, 0.0
        %1092 = vadd.xlane.f32.xlu0 %v1091
        %v1093 = vpop.xlane.xlu0 %1092
        %v1094 = vsel %vm1051, %v981, 0.0
        %1095 = vadd.xlane.f32.xlu0 %v1094
        %v1096 = vpop.xlane.xlu0 %1095
        %v1097 = vsel %vm1051, %v984, 0.0
        %1098 = vadd.xlane.f32.xlu0 %v1097
        %v1099 = vpop.xlane.xlu0 %1098
        %v1100 = vsel %vm1051, %v989, 0.0
        %1101 = vadd.xlane.f32.xlu0 %v1100
        %v1102 = vpop.xlane.xlu0 %1101
        %v1103 = vsel %vm1051, %v992, 0.0
        %1104 = vadd.xlane.f32.xlu0 %v1103
        %v1105 = vpop.xlane.xlu0 %1104
        %v1106 = vsel %vm1051, %v997, 0.0
        %1107 = vadd.xlane.f32.xlu0 %v1106
        %v1108 = vpop.xlane.xlu0 %1107
        %v1109 = vsel %vm1051, %v1000, 0.0
        %1110 = vadd.xlane.f32.xlu0 %v1109
        %v1111 = vpop.xlane.xlu0 %1110
        %v1112 = vsel %vm1051, %v1005, 0.0
        %1113 = vadd.xlane.f32.xlu0 %v1112
        %v1114 = vpop.xlane.xlu0 %1113
        %v1115 = vsel %vm1051, %v1008, 0.0
        %1116 = vadd.xlane.f32.xlu0 %v1115
        %v1117 = vpop.xlane.xlu0 %1116
        %v1118 = vsel %vm1051, %v1013, 0.0
        %1119 = vadd.xlane.f32.xlu0 %v1118
        %v1120 = vpop.xlane.xlu0 %1119
        %v1121 = vsel %vm1051, %v1016, 0.0
        %1122 = vadd.xlane.f32.xlu0 %v1121
        %v1123 = vpop.xlane.xlu0 %1122
        %v1124 = vsel %vm1051, %v1021, 0.0
        %1125 = vadd.xlane.f32.xlu0 %v1124
        %v1126 = vpop.xlane.xlu0 %1125
        %v1127 = vsel %vm1051, %v1024, 0.0
        %1128 = vadd.xlane.f32.xlu0 %v1127
        %v1129 = vpop.xlane.xlu0 %1128
        %v1130 = vsel %vm1051, %v1029, 0.0
        %1131 = vadd.xlane.f32.xlu0 %v1130
        %v1132 = vpop.xlane.xlu0 %1131
        %v1133 = vsel %vm1051, %v1032, 0.0
        %1134 = vadd.xlane.f32.xlu0 %v1133
        %v1135 = vpop.xlane.xlu0 %1134
        %v1136 = vsel %vm1051, %v1037, 0.0
        %1137 = vadd.xlane.f32.xlu0 %v1136
        %v1138 = vpop.xlane.xlu0 %1137
        %v1139 = vsel %vm1051, %v1040, 0.0
        %1140 = vadd.xlane.f32.xlu0 %v1139
        %v1141 = vpop.xlane.xlu0 %1140
        %v1142 = vsel %vm1051, %v1045, 0.0
        %1143 = vadd.xlane.f32.xlu0 %v1142
        %v1144 = vpop.xlane.xlu0 %1143
        %v1145 = vsel %vm1051, %v1048, 0.0
        %1146 = vadd.xlane.f32.xlu0 %v1145
        %v1147 = vpop.xlane.xlu0 %1146
        %v1148 = vrcp.pop 8.0
        %v1149 = vmul.f32 %v1054, %v1148
        %v1150 = vmul.f32 %v1057, %v1148
        %v1151 = vmul.f32 %v1060, %v1148
        %v1152 = vmul.f32 %v1063, %v1148
        %v1153 = vmul.f32 %v1066, %v1148
        %v1154 = vmul.f32 %v1069, %v1148
        %v1155 = vmul.f32 %v1072, %v1148
        %v1156 = vmul.f32 %v1075, %v1148
        %v1157 = vmul.f32 %v1078, %v1148
        %v1158 = vmul.f32 %v1081, %v1148
        %v1159 = vmul.f32 %v1084, %v1148
        %v1160 = vmul.f32 %v1087, %v1148
        %v1161 = vmul.f32 %v1090, %v1148
        %v1162 = vmul.f32 %v1093, %v1148
        %v1163 = vmul.f32 %v1096, %v1148
        %v1164 = vmul.f32 %v1099, %v1148
        %v1165 = vmul.f32 %v1102, %v1148
        %v1166 = vmul.f32 %v1105, %v1148
        %v1167 = vmul.f32 %v1108, %v1148
        %v1168 = vmul.f32 %v1111, %v1148
        %v1169 = vmul.f32 %v1114, %v1148
        %v1170 = vmul.f32 %v1117, %v1148
        %v1171 = vmul.f32 %v1120, %v1148
        %v1172 = vmul.f32 %v1123, %v1148
        %v1173 = vmul.f32 %v1126, %v1148
        %v1174 = vmul.f32 %v1129, %v1148
        %v1175 = vmul.f32 %v1132, %v1148
        %v1176 = vmul.f32 %v1135, %v1148
        %v1177 = vmul.f32 %v1138, %v1148
        %v1178 = vmul.f32 %v1141, %v1148
        %v1179 = vmul.f32 %v1144, %v1148
        %v1180 = vmul.f32 %v1147, %v1148
        %v1181 = vsub.f32 %v925, %v1149
        %v1182 = vsub.f32 %v928, %v1150
        %v1183 = vsub.f32 %v933, %v1151
        %v1184 = vsub.f32 %v936, %v1152
        %v1185 = vsub.f32 %v941, %v1153
        %v1186 = vsub.f32 %v944, %v1154
        %v1187 = vsub.f32 %v949, %v1155
        %v1188 = vsub.f32 %v952, %v1156
        %v1189 = vsub.f32 %v957, %v1157
        %v1190 = vsub.f32 %v960, %v1158
        %v1191 = vsub.f32 %v965, %v1159
        %v1192 = vsub.f32 %v968, %v1160
        %v1193 = vsub.f32 %v973, %v1161
        %v1194 = vsub.f32 %v976, %v1162
        %v1195 = vsub.f32 %v981, %v1163
        %v1196 = vsub.f32 %v984, %v1164
        %v1197 = vsub.f32 %v989, %v1165
        %v1198 = vsub.f32 %v992, %v1166
        %v1199 = vsub.f32 %v997, %v1167
        %v1200 = vsub.f32 %v1000, %v1168
        %v1201 = vsub.f32 %v1005, %v1169
        %v1202 = vsub.f32 %v1008, %v1170
        %v1203 = vsub.f32 %v1013, %v1171
        %v1204 = vsub.f32 %v1016, %v1172
        %v1205 = vsub.f32 %v1021, %v1173
        %v1206 = vsub.f32 %v1024, %v1174
        %v1207 = vsub.f32 %v1029, %v1175
        %v1208 = vsub.f32 %v1032, %v1176
        %v1209 = vsub.f32 %v1037, %v1177
        %v1210 = vsub.f32 %v1040, %v1178
        %v1211 = vsub.f32 %v1045, %v1179
        %v1212 = vsub.f32 %v1048, %v1180
        %v1213 = vmul.f32 %v1181, %v1181
        %v1214 = vmul.f32 %v1182, %v1182
        %v1215 = vmul.f32 %v1183, %v1183
        %v1216 = vmul.f32 %v1184, %v1184
        %v1217 = vmul.f32 %v1185, %v1185
        %v1218 = vmul.f32 %v1186, %v1186
        %v1219 = vmul.f32 %v1187, %v1187
        %v1220 = vmul.f32 %v1188, %v1188
        %v1221 = vmul.f32 %v1189, %v1189
        %v1222 = vmul.f32 %v1190, %v1190
        %v1223 = vmul.f32 %v1191, %v1191
        %v1224 = vmul.f32 %v1192, %v1192
        %v1225 = vmul.f32 %v1193, %v1193
        %v1226 = vmul.f32 %v1194, %v1194
        %v1227 = vmul.f32 %v1195, %v1195
        %v1228 = vmul.f32 %v1196, %v1196
        %v1229 = vmul.f32 %v1197, %v1197
        %v1230 = vmul.f32 %v1198, %v1198
        %v1231 = vmul.f32 %v1199, %v1199
        %v1232 = vmul.f32 %v1200, %v1200
        %v1233 = vmul.f32 %v1201, %v1201
        %v1234 = vmul.f32 %v1202, %v1202
        %v1235 = vmul.f32 %v1203, %v1203
        %v1236 = vmul.f32 %v1204, %v1204
        %v1237 = vmul.f32 %v1205, %v1205
        %v1238 = vmul.f32 %v1206, %v1206
        %v1239 = vmul.f32 %v1207, %v1207
        %v1240 = vmul.f32 %v1208, %v1208
        %v1241 = vmul.f32 %v1209, %v1209
        %v1242 = vmul.f32 %v1210, %v1210
        %v1243 = vmul.f32 %v1211, %v1211
        %v1244 = vmul.f32 %v1212, %v1212
        %v1245 = vsel %vm1051, %v1213, 0.0
        %1246 = vadd.xlane.f32.xlu0 %v1245
        %v1247 = vpop.xlane.xlu0 %1246
        %v1248 = vsel %vm1051, %v1214, 0.0
        %1249 = vadd.xlane.f32.xlu0 %v1248
        %v1250 = vpop.xlane.xlu0 %1249
        %v1251 = vsel %vm1051, %v1215, 0.0
        %1252 = vadd.xlane.f32.xlu0 %v1251
        %v1253 = vpop.xlane.xlu0 %1252
        %v1254 = vsel %vm1051, %v1216, 0.0
        %1255 = vadd.xlane.f32.xlu0 %v1254
        %v1256 = vpop.xlane.xlu0 %1255
        %v1257 = vsel %vm1051, %v1217, 0.0
        %1258 = vadd.xlane.f32.xlu0 %v1257
        %v1259 = vpop.xlane.xlu0 %1258
        %v1260 = vsel %vm1051, %v1218, 0.0
        %1261 = vadd.xlane.f32.xlu0 %v1260
        %v1262 = vpop.xlane.xlu0 %1261
        %v1263 = vsel %vm1051, %v1219, 0.0
        %1264 = vadd.xlane.f32.xlu0 %v1263
        %v1265 = vpop.xlane.xlu0 %1264
        %v1266 = vsel %vm1051, %v1220, 0.0
        %1267 = vadd.xlane.f32.xlu0 %v1266
        %v1268 = vpop.xlane.xlu0 %1267
        %v1269 = vsel %vm1051, %v1221, 0.0
        %1270 = vadd.xlane.f32.xlu0 %v1269
        %v1271 = vpop.xlane.xlu0 %1270
        %v1272 = vsel %vm1051, %v1222, 0.0
        %1273 = vadd.xlane.f32.xlu0 %v1272
        %v1274 = vpop.xlane.xlu0 %1273
        %v1275 = vsel %vm1051, %v1223, 0.0
        %1276 = vadd.xlane.f32.xlu0 %v1275
        %v1277 = vpop.xlane.xlu0 %1276
        %v1278 = vsel %vm1051, %v1224, 0.0
        %1279 = vadd.xlane.f32.xlu0 %v1278
        %v1280 = vpop.xlane.xlu0 %1279
        %v1281 = vsel %vm1051, %v1225, 0.0
        %1282 = vadd.xlane.f32.xlu0 %v1281
        %v1283 = vpop.xlane.xlu0 %1282
        %v1284 = vsel %vm1051, %v1226, 0.0
        %1285 = vadd.xlane.f32.xlu0 %v1284
        %v1286 = vpop.xlane.xlu0 %1285
        %v1287 = vsel %vm1051, %v1227, 0.0
        %1288 = vadd.xlane.f32.xlu0 %v1287
        %v1289 = vpop.xlane.xlu0 %1288
        %v1290 = vsel %vm1051, %v1228, 0.0
        %1291 = vadd.xlane.f32.xlu0 %v1290
        %v1292 = vpop.xlane.xlu0 %1291
        %v1293 = vsel %vm1051, %v1229, 0.0
        %1294 = vadd.xlane.f32.xlu0 %v1293
        %v1295 = vpop.xlane.xlu0 %1294
        %v1296 = vsel %vm1051, %v1230, 0.0
        %1297 = vadd.xlane.f32.xlu0 %v1296
        %v1298 = vpop.xlane.xlu0 %1297
        %v1299 = vsel %vm1051, %v1231, 0.0
        %1300 = vadd.xlane.f32.xlu0 %v1299
        %v1301 = vpop.xlane.xlu0 %1300
        %v1302 = vsel %vm1051, %v1232, 0.0
        %1303 = vadd.xlane.f32.xlu0 %v1302
        %v1304 = vpop.xlane.xlu0 %1303
        %v1305 = vsel %vm1051, %v1233, 0.0
        %1306 = vadd.xlane.f32.xlu0 %v1305
        %v1307 = vpop.xlane.xlu0 %1306
        %v1308 = vsel %vm1051, %v1234, 0.0
        %1309 = vadd.xlane.f32.xlu0 %v1308
        %v1310 = vpop.xlane.xlu0 %1309
        %v1311 = vsel %vm1051, %v1235, 0.0
        %1312 = vadd.xlane.f32.xlu0 %v1311
        %v1313 = vpop.xlane.xlu0 %1312
        %v1314 = vsel %vm1051, %v1236, 0.0
        %1315 = vadd.xlane.f32.xlu0 %v1314
        %v1316 = vpop.xlane.xlu0 %1315
        %v1317 = vsel %vm1051, %v1237, 0.0
        %1318 = vadd.xlane.f32.xlu0 %v1317
        %v1319 = vpop.xlane.xlu0 %1318
        %v1320 = vsel %vm1051, %v1238, 0.0
        %1321 = vadd.xlane.f32.xlu0 %v1320
        %v1322 = vpop.xlane.xlu0 %1321
        %v1323 = vsel %vm1051, %v1239, 0.0
        %1324 = vadd.xlane.f32.xlu0 %v1323
        %v1325 = vpop.xlane.xlu0 %1324
        %v1326 = vsel %vm1051, %v1240, 0.0
        %1327 = vadd.xlane.f32.xlu0 %v1326
        %v1328 = vpop.xlane.xlu0 %1327
        %v1329 = vsel %vm1051, %v1241, 0.0
        %1330 = vadd.xlane.f32.xlu0 %v1329
        %v1331 = vpop.xlane.xlu0 %1330
        %v1332 = vsel %vm1051, %v1242, 0.0
        %1333 = vadd.xlane.f32.xlu0 %v1332
        %v1334 = vpop.xlane.xlu0 %1333
        %v1335 = vsel %vm1051, %v1243, 0.0
        %1336 = vadd.xlane.f32.xlu0 %v1335
        %v1337 = vpop.xlane.xlu0 %1336
        %v1338 = vsel %vm1051, %v1244, 0.0
        %1339 = vadd.xlane.f32.xlu0 %v1338
        %v1340 = vpop.xlane.xlu0 %1339
        %v1341 = vmul.f32 %v1247, %v1148
        %v1342 = vmul.f32 %v1250, %v1148
        %v1343 = vmul.f32 %v1253, %v1148
        %v1344 = vmul.f32 %v1256, %v1148
        %v1345 = vmul.f32 %v1259, %v1148
        %v1346 = vmul.f32 %v1262, %v1148
        %v1347 = vmul.f32 %v1265, %v1148
        %v1348 = vmul.f32 %v1268, %v1148
        %v1349 = vmul.f32 %v1271, %v1148
        %v1350 = vmul.f32 %v1274, %v1148
        %v1351 = vmul.f32 %v1277, %v1148
        %v1352 = vmul.f32 %v1280, %v1148
        %v1353 = vmul.f32 %v1283, %v1148
        %v1354 = vmul.f32 %v1286, %v1148
        %v1355 = vmul.f32 %v1289, %v1148
        %v1356 = vmul.f32 %v1292, %v1148
        %v1357 = vmul.f32 %v1295, %v1148
        %v1358 = vmul.f32 %v1298, %v1148
        %v1359 = vmul.f32 %v1301, %v1148
        %v1360 = vmul.f32 %v1304, %v1148
        %v1361 = vmul.f32 %v1307, %v1148
        %v1362 = vmul.f32 %v1310, %v1148
        %v1363 = vmul.f32 %v1313, %v1148
        %v1364 = vmul.f32 %v1316, %v1148
        %v1365 = vmul.f32 %v1319, %v1148
        %v1366 = vmul.f32 %v1322, %v1148
        %v1367 = vmul.f32 %v1325, %v1148
        %v1368 = vmul.f32 %v1328, %v1148
        %v1369 = vmul.f32 %v1331, %v1148
        %v1370 = vmul.f32 %v1334, %v1148
        %v1371 = vmul.f32 %v1337, %v1148
        %v1372 = vmul.f32 %v1340, %v1148
        %v1373 = vadd.f32 %v1341, 1e-06
        %v1374 = vadd.f32 %v1342, 1e-06
        %v1375 = vadd.f32 %v1343, 1e-06
        %v1376 = vadd.f32 %v1344, 1e-06
        %v1377 = vadd.f32 %v1345, 1e-06
        %v1378 = vadd.f32 %v1346, 1e-06
        %v1379 = vadd.f32 %v1347, 1e-06
        %v1380 = vadd.f32 %v1348, 1e-06
        %v1381 = vadd.f32 %v1349, 1e-06
        %v1382 = vadd.f32 %v1350, 1e-06
        %v1383 = vadd.f32 %v1351, 1e-06
        %v1384 = vadd.f32 %v1352, 1e-06
        %v1385 = vadd.f32 %v1353, 1e-06
        %v1386 = vadd.f32 %v1354, 1e-06
        %v1387 = vadd.f32 %v1355, 1e-06
        %v1388 = vadd.f32 %v1356, 1e-06
        %v1389 = vadd.f32 %v1357, 1e-06
        %v1390 = vadd.f32 %v1358, 1e-06
        %v1391 = vadd.f32 %v1359, 1e-06
        %v1392 = vadd.f32 %v1360, 1e-06
        %v1393 = vadd.f32 %v1361, 1e-06
        %v1394 = vadd.f32 %v1362, 1e-06
        %v1395 = vadd.f32 %v1363, 1e-06
        %v1396 = vadd.f32 %v1364, 1e-06
        %v1397 = vadd.f32 %v1365, 1e-06
        %v1398 = vadd.f32 %v1366, 1e-06
        %v1399 = vadd.f32 %v1367, 1e-06
        %v1400 = vadd.f32 %v1368, 1e-06
        %v1401 = vadd.f32 %v1369, 1e-06
        %v1402 = vadd.f32 %v1370, 1e-06
        %v1403 = vadd.f32 %v1371, 1e-06
        %v1404 = vadd.f32 %v1372, 1e-06
        %v1405 = vrsqrt.pop %v1373
        %v1406 = vrsqrt.pop %v1374
        %v1407 = vrsqrt.pop %v1375
        %v1408 = vrsqrt.pop %v1376
        %v1409 = vrsqrt.pop %v1377
        %v1410 = vrsqrt.pop %v1378
        %v1411 = vrsqrt.pop %v1379
        %v1412 = vrsqrt.pop %v1380
        %v1413 = vrsqrt.pop %v1381
        %v1414 = vrsqrt.pop %v1382
        %v1415 = vrsqrt.pop %v1383
        %v1416 = vrsqrt.pop %v1384
        %v1417 = vrsqrt.pop %v1385
        %v1418 = vrsqrt.pop %v1386
        %v1419 = vrsqrt.pop %v1387
        %v1420 = vrsqrt.pop %v1388
        %v1421 = vrsqrt.pop %v1389
        %v1422 = vrsqrt.pop %v1390
        %v1423 = vrsqrt.pop %v1391
        %v1424 = vrsqrt.pop %v1392
        %v1425 = vrsqrt.pop %v1393
        %v1426 = vrsqrt.pop %v1394
        %v1427 = vrsqrt.pop %v1395
        %v1428 = vrsqrt.pop %v1396
        %v1429 = vrsqrt.pop %v1397
        %v1430 = vrsqrt.pop %v1398
        %v1431 = vrsqrt.pop %v1399
        %v1432 = vrsqrt.pop %v1400
        %v1433 = vrsqrt.pop %v1401
        %v1434 = vrsqrt.pop %v1402
        %v1435 = vrsqrt.pop %v1403
        %v1436 = vrsqrt.pop %v1404
        %v1437 = vmul.f32 %v1181, %v1405
        %v1438 = vmul.f32 %v1182, %v1406
        %v1439 = vmul.f32 %v1183, %v1407
        %v1440 = vmul.f32 %v1184, %v1408
        %v1441 = vmul.f32 %v1185, %v1409
        %v1442 = vmul.f32 %v1186, %v1410
        %v1443 = vmul.f32 %v1187, %v1411
        %v1444 = vmul.f32 %v1188, %v1412
        %v1445 = vmul.f32 %v1189, %v1413
        %v1446 = vmul.f32 %v1190, %v1414
        %v1447 = vmul.f32 %v1191, %v1415
        %v1448 = vmul.f32 %v1192, %v1416
        %v1449 = vmul.f32 %v1193, %v1417
        %v1450 = vmul.f32 %v1194, %v1418
        %v1451 = vmul.f32 %v1195, %v1419
        %v1452 = vmul.f32 %v1196, %v1420
        %v1453 = vmul.f32 %v1197, %v1421
        %v1454 = vmul.f32 %v1198, %v1422
        %v1455 = vmul.f32 %v1199, %v1423
        %v1456 = vmul.f32 %v1200, %v1424
        %v1457 = vmul.f32 %v1201, %v1425
        %v1458 = vmul.f32 %v1202, %v1426
        %v1459 = vmul.f32 %v1203, %v1427
        %v1460 = vmul.f32 %v1204, %v1428
        %v1461 = vmul.f32 %v1205, %v1429
        %v1462 = vmul.f32 %v1206, %v1430
        %v1463 = vmul.f32 %v1207, %v1431
        %v1464 = vmul.f32 %v1208, %v1432
        %v1465 = vmul.f32 %v1209, %v1433
        %v1466 = vmul.f32 %v1210, %v1434
        %v1467 = vmul.f32 %v1211, %v1435
        %v1468 = vmul.f32 %v1212, %v1436
        %v1469 = vpack.c.bf16 %v1438, %v1437
        %v1470 = vpack.c.bf16 %v1440, %v1439
        %v1471 = vpack.c.bf16 %v1442, %v1441
        %v1472 = vpack.c.bf16 %v1444, %v1443
        %v1473 = vpack.c.bf16 %v1446, %v1445
        %v1474 = vpack.c.bf16 %v1448, %v1447
        %v1475 = vpack.c.bf16 %v1450, %v1449
        %v1476 = vpack.c.bf16 %v1452, %v1451
        %v1477 = vpack.c.bf16 %v1454, %v1453
        %v1478 = vpack.c.bf16 %v1456, %v1455
        %v1479 = vpack.c.bf16 %v1458, %v1457
        %v1480 = vpack.c.bf16 %v1460, %v1459
        %v1481 = vpack.c.bf16 %v1462, %v1461
        %v1482 = vpack.c.bf16 %v1464, %v1463
        %v1483 = vpack.c.bf16 %v1466, %v1465
        %v1484 = vpack.c.bf16 %v1468, %v1467
        %v1485 = vld [vmem:[%s10] sm:$0xf]
        %v1487 = vsel %vm1051, %v1469, 0
        %v1490 = vsel %vm1051, %v1470, 0
        %v1493 = vsel %vm1051, %v1471, 0
        %v1496 = vsel %vm1051, %v1472, 0
        %v1499 = vsel %vm1051, %v1473, 0
        %v1502 = vsel %vm1051, %v1474, 0
        %v1505 = vsel %vm1051, %v1475, 0
        %v1508 = vsel %vm1051, %v1476, 0
        %v1511 = vsel %vm1051, %v1477, 0
        %v1514 = vsel %vm1051, %v1478, 0
        %v1517 = vsel %vm1051, %v1479, 0
        %v1520 = vsel %vm1051, %v1480, 0
        %v1523 = vsel %vm1051, %v1481, 0
        %v1526 = vsel %vm1051, %v1482, 0
        %v1529 = vsel %vm1051, %v1483, 0
        %v1532 = vsel %vm1051, %v1484, 0
        %vm1534 = vcmask 1043456
        %v1536 = vsel %vm1534, %v1485, 0
        %1538 = vmatprep.subr.bf16.mxu0 0
        %1539 = vmatpush1.bf16.msra.mxu0 %v1536
        %1540 = vmatprep.subr.bf16.mxu0 0
        %1541 = vmatpush1.bf16.msra.mxu0 0
        %1542 = vmatprep.subr.bf16.mxu0 0
        %1543 = vmatpush1.bf16.msra.mxu0 0
        %1544 = vmatprep.subr.bf16.mxu0 0
        %1545 = vmatpush1.bf16.msra.mxu0 0
        %1546 = vmatprep.subr.bf16.mxu0 0
        %1547 = vmatpush1.bf16.msra.mxu0 0
        %1548 = vmatprep.subr.bf16.mxu0 0
        %1549 = vmatpush1.bf16.msra.mxu0 0
        %1550 = vmatprep.subr.bf16.mxu0 0
        %1551 = vmatpush1.bf16.msra.mxu0 0
        %1552 = vmatprep.subr.bf16.mxu0 0
        %1553 = vmatpush1.bf16.msra.mxu0 0
        %1554 = vmatprep.subr.bf16.mxu0 0
        %1555 = vmatpush1.bf16.msra.mxu0 0
        %1556 = vmatprep.subr.bf16.mxu0 0
        %1557 = vmatpush1.bf16.msra.mxu0 0
        %1558 = vmatprep.subr.bf16.mxu0 0
        %1559 = vmatpush1.bf16.msra.mxu0 0
        %1560 = vmatprep.subr.bf16.mxu0 0
        %1561 = vmatpush1.bf16.msra.mxu0 0
        %1562 = vmatprep.subr.bf16.mxu0 0
        %1563 = vmatpush1.bf16.msra.mxu0 0
        %1564 = vmatprep.subr.bf16.mxu0 0
        %1565 = vmatpush1.bf16.msra.mxu0 0
        %1566 = vmatprep.subr.bf16.mxu0 0
        %1567 = vmatpush1.bf16.msra.mxu0 0
        %1568 = vmatprep.subr.bf16.mxu0 0
        %1569 = vmatpush1.bf16.msra.mxu0 0
        %1570 = vmatprep.mubr.bf16.mxu0 0
        %1571 = vmatmul.mubr.bf16.gmra.mrb[0].mxu0 %v1487
        %v1572 = vpop.f32.mrb[0].mxu0
        %v1573 = vadd.f32 0.0, %v1572
        %v1574 = vpop.f32.mrb[0].mxu0
        %v1575 = vpop.f32.mrb[0].mxu0
        %v1576 = vadd.f32 0.0, %v1575
        %v1577 = vpop.f32.mrb[0].mxu0
        %1578 = vmatprep.mubr.bf16.mxu0 0
        %1579 = vmatmul.mubr.bf16.gmra.mrb[0].mxu0 %v1490
        %v1580 = vpop.f32.mrb[0].mxu0
        %v1581 = vadd.f32 0.0, %v1580
        %v1582 = vpop.f32.mrb[0].mxu0
        %v1583 = vpop.f32.mrb[0].mxu0
        %v1584 = vadd.f32 0.0, %v1583
        %v1585 = vpop.f32.mrb[0].mxu0
        %1586 = vmatprep.mubr.bf16.mxu0 0
        %1587 = vmatmul.mubr.bf16.gmra.mrb[0].mxu0 %v1493
        %v1588 = vpop.f32.mrb[0].mxu0
        %v1589 = vadd.f32 0.0, %v1588
        %v1590 = vpop.f32.mrb[0].mxu0
        %v1591 = vpop.f32.mrb[0].mxu0
        %v1592 = vadd.f32 0.0, %v1591
        %v1593 = vpop.f32.mrb[0].mxu0
        %1594 = vmatprep.mubr.bf16.mxu0 0
        %1595 = vmatmul.mubr.bf16.gmra.mrb[0].mxu0 %v1496
        %v1596 = vpop.f32.mrb[0].mxu0
        %v1597 = vadd.f32 0.0, %v1596
        %v1598 = vpop.f32.mrb[0].mxu0
        %v1599 = vpop.f32.mrb[0].mxu0
        %v1600 = vadd.f32 0.0, %v1599
        %v1601 = vpop.f32.mrb[0].mxu0
        %1602 = vmatprep.mubr.bf16.mxu0 0
        %1603 = vmatmul.mubr.bf16.gmra.mrb[0].mxu0 %v1499
        %v1604 = vpop.f32.mrb[0].mxu0
        %v1605 = vadd.f32 0.0, %v1604
        %v1606 = vpop.f32.mrb[0].mxu0
        %v1607 = vpop.f32.mrb[0].mxu0
        %v1608 = vadd.f32 0.0, %v1607
        %v1609 = vpop.f32.mrb[0].mxu0
        %1610 = vmatprep.mubr.bf16.mxu0 0
        %1611 = vmatmul.mubr.bf16.gmra.mrb[0].mxu0 %v1502
        %v1612 = vpop.f32.mrb[0].mxu0
        %v1613 = vadd.f32 0.0, %v1612
        %v1614 = vpop.f32.mrb[0].mxu0
        %v1615 = vpop.f32.mrb[0].mxu0
        %v1616 = vadd.f32 0.0, %v1615
        %v1617 = vpop.f32.mrb[0].mxu0
        %1618 = vmatprep.mubr.bf16.mxu0 0
        %1619 = vmatmul.mubr.bf16.gmra.mrb[0].mxu0 %v1505
        %v1620 = vpop.f32.mrb[0].mxu0
        %v1621 = vadd.f32 0.0, %v1620
        %v1622 = vpop.f32.mrb[0].mxu0
        %v1623 = vpop.f32.mrb[0].mxu0
        %v1624 = vadd.f32 0.0, %v1623
        %v1625 = vpop.f32.mrb[0].mxu0
        %1626 = vmatprep.mubr.bf16.mxu0 0
        %1627 = vmatmul.mubr.bf16.gmra.mrb[0].mxu0 %v1508
        %v1628 = vpop.f32.mrb[0].mxu0
        %v1629 = vadd.f32 0.0, %v1628
        %v1630 = vpop.f32.mrb[0].mxu0
        %v1631 = vpop.f32.mrb[0].mxu0
        %v1632 = vadd.f32 0.0, %v1631
        %v1633 = vpop.f32.mrb[0].mxu0
        %1634 = vmatprep.mubr.bf16.mxu0 0
        %1635 = vmatmul.mubr.bf16.gmra.mrb[0].mxu0 %v1511
        %v1636 = vpop.f32.mrb[0].mxu0
        %v1637 = vadd.f32 0.0, %v1636
        %v1638 = vpop.f32.mrb[0].mxu0
        %v1639 = vpop.f32.mrb[0].mxu0
        %v1640 = vadd.f32 0.0, %v1639
        %v1641 = vpop.f32.mrb[0].mxu0
        %1642 = vmatprep.mubr.bf16.mxu0 0
        %1643 = vmatmul.mubr.bf16.gmra.mrb[0].mxu0 %v1514
        %v1644 = vpop.f32.mrb[0].mxu0
        %v1645 = vadd.f32 0.0, %v1644
        %v1646 = vpop.f32.mrb[0].mxu0
        %v1647 = vpop.f32.mrb[0].mxu0
        %v1648 = vadd.f32 0.0, %v1647
        %v1649 = vpop.f32.mrb[0].mxu0
        %1650 = vmatprep.mubr.bf16.mxu0 0
        %1651 = vmatmul.mubr.bf16.gmra.mrb[0].mxu0 %v1517
        %v1652 = vpop.f32.mrb[0].mxu0
        %v1653 = vadd.f32 0.0, %v1652
        %v1654 = vpop.f32.mrb[0].mxu0
        %v1655 = vpop.f32.mrb[0].mxu0
        %v1656 = vadd.f32 0.0, %v1655
        %v1657 = vpop.f32.mrb[0].mxu0
        %1658 = vmatprep.mubr.bf16.mxu0 0
        %1659 = vmatmul.mubr.bf16.gmra.mrb[0].mxu0 %v1520
        %v1660 = vpop.f32.mrb[0].mxu0
        %v1661 = vadd.f32 0.0, %v1660
        %v1662 = vpop.f32.mrb[0].mxu0
        %v1663 = vpop.f32.mrb[0].mxu0
        %v1664 = vadd.f32 0.0, %v1663
        %v1665 = vpop.f32.mrb[0].mxu0
        %1666 = vmatprep.mubr.bf16.mxu0 0
        %1667 = vmatmul.mubr.bf16.gmra.mrb[0].mxu0 %v1523
        %v1668 = vpop.f32.mrb[0].mxu0
        %v1669 = vadd.f32 0.0, %v1668
        %v1670 = vpop.f32.mrb[0].mxu0
        %v1671 = vpop.f32.mrb[0].mxu0
        %v1672 = vadd.f32 0.0, %v1671
        %v1673 = vpop.f32.mrb[0].mxu0
        %1674 = vmatprep.mubr.bf16.mxu0 0
        %1675 = vmatmul.mubr.bf16.gmra.mrb[0].mxu0 %v1526
        %v1676 = vpop.f32.mrb[0].mxu0
        %v1677 = vadd.f32 0.0, %v1676
        %v1678 = vpop.f32.mrb[0].mxu0
        %v1679 = vpop.f32.mrb[0].mxu0
        %v1680 = vadd.f32 0.0, %v1679
        %v1681 = vpop.f32.mrb[0].mxu0
        %1682 = vmatprep.mubr.bf16.mxu0 0
        %1683 = vmatmul.mubr.bf16.gmra.mrb[0].mxu0 %v1529
        %v1684 = vpop.f32.mrb[0].mxu0
        %v1685 = vadd.f32 0.0, %v1684
        %v1686 = vpop.f32.mrb[0].mxu0
        %v1687 = vpop.f32.mrb[0].mxu0
        %v1688 = vadd.f32 0.0, %v1687
        %v1689 = vpop.f32.mrb[0].mxu0
        %1690 = vmatprep.mubr.bf16.mxu0 0
        %1691 = vmatmul.mubr.bf16.gmra.mrb[0].mxu0 %v1532
        %v1692 = vpop.f32.mrb[0].mxu0
        %v1693 = vadd.f32 0.0, %v1692
        %v1694 = vpop.f32.mrb[0].mxu0
        %v1695 = vpop.f32.mrb[0].mxu0
        %v1696 = vadd.f32 0.0, %v1695
        %v1697 = vpop.f32.mrb[0].mxu0
        %1698 = vdwg.mxu0
        %v1699 = vadd.f32 %v743, %v1573
        %v1700 = vadd.f32 %v746, %v1576
        %v1701 = vadd.f32 %v751, %v1581
        %v1702 = vadd.f32 %v754, %v1584
        %v1703 = vadd.f32 %v759, %v1589
        %v1704 = vadd.f32 %v762, %v1592
        %v1705 = vadd.f32 %v767, %v1597
        %v1706 = vadd.f32 %v770, %v1600
        %v1707 = vadd.f32 %v775, %v1605
        %v1708 = vadd.f32 %v778, %v1608
        %v1709 = vadd.f32 %v783, %v1613
        %v1710 = vadd.f32 %v786, %v1616
        %v1711 = vadd.f32 %v791, %v1621
        %v1712 = vadd.f32 %v794, %v1624
        %v1713 = vadd.f32 %v799, %v1629
        %v1714 = vadd.f32 %v802, %v1632
        %v1715 = vadd.f32 %v807, %v1637
        %v1716 = vadd.f32 %v810, %v1640
        %v1717 = vadd.f32 %v815, %v1645
        %v1718 = vadd.f32 %v818, %v1648
        %v1719 = vadd.f32 %v823, %v1653
        %v1720 = vadd.f32 %v826, %v1656
        %v1721 = vadd.f32 %v831, %v1661
        %v1722 = vadd.f32 %v834, %v1664
        %v1723 = vadd.f32 %v839, %v1669
        %v1724 = vadd.f32 %v842, %v1672
        %v1725 = vadd.f32 %v847, %v1677
        %v1726 = vadd.f32 %v850, %v1680
        %v1727 = vadd.f32 %v855, %v1685
        %v1728 = vadd.f32 %v858, %v1688
        %v1729 = vadd.f32 %v863, %v1693
        %v1730 = vadd.f32 %v866, %v1696
        %v1731 = vld [vmem:[%s513] sm:$0xf]
        %v1732 = vld [vmem:[%s513 + $0x4] sm:$0xf]
        %v1733 = vld [vmem:[%s513 + $0x8] sm:$0xf]
        %v1734 = vld [vmem:[%s513 + $0xc] sm:$0xf]
        %v1735 = vld [vmem:[%s513 + $0x10] sm:$0xf]
        %v1736 = vld [vmem:[%s513 + $0x14] sm:$0xf]
        %v1737 = vld [vmem:[%s513 + $0x18] sm:$0xf]
        %v1738 = vld [vmem:[%s513 + $0x1c] sm:$0xf]
        %s1739 = scalar_lea.vmem %s7, 16
        %v1740 = vld [vmem:[%s1739] sm:$0xf]
        %v1741 = vld [vmem:[%s1739 + $0x4] sm:$0xf]
        %v1742 = vld [vmem:[%s1739 + $0x8] sm:$0xf]
        %v1743 = vld [vmem:[%s1739 + $0xc] sm:$0xf]
        %v1744 = vld [vmem:[%s8 + $0x1] sm:$0x1]
        %v1745 = vlaneseq
        %v1746 = vshrl.u32 %v1745, 7
        %v1747 = vsub.s32 0, %v1746
        %v1748 = vrot.slane %v1744, %v1747
        %v1757 = vunpack.c.l.b16 %v1731
        %v1758 = vunpack.c.l.b16 %v1732
        %v1759 = vunpack.c.l.b16 %v1733
        %v1760 = vunpack.c.l.b16 %v1734
        %v1761 = vunpack.c.l.b16 %v1735
        %v1762 = vunpack.c.l.b16 %v1736
        %v1763 = vunpack.c.l.b16 %v1737
        %v1764 = vunpack.c.l.b16 %v1738
        %v1765 = vpack.c.b16 %v1758, %v1757
        %v1766 = vpack.c.b16 %v1760, %v1759
        %v1767 = vpack.c.b16 %v1762, %v1761
        %v1768 = vpack.c.b16 %v1764, %v1763
        %v1773 = vunpack.c.l.b16 %v1740
        %v1774 = vunpack.c.l.b16 %v1741
        %v1775 = vunpack.c.l.b16 %v1742
        %v1776 = vunpack.c.l.b16 %v1743
        %v1777 = vpack.c.b16 %v1774, %v1773
        %v1778 = vpack.c.b16 %v1776, %v1775
        %v1782 = vsel %vm659, %v1765, 0
        %v1785 = vsel %vm659, %v1766, 0
        %v1788 = vsel %vm659, %v1767, 0
        %v1791 = vsel %vm659, %v1768, 0
        %1793 = vmatprep.subr.bf16.mxu0 0
        %1794 = vmatpush1.bf16.msra.mxu0 %v1777
        %1795 = vmatprep.subr.bf16.mxu0 0
        %1796 = vmatpush1.bf16.msra.mxu0 %v1778
        %1797 = vmatprep.subr.bf16.mxu0 0
        %1798 = vmatpush1.bf16.msra.mxu0 0
        %1799 = vmatprep.subr.bf16.mxu0 0
        %1800 = vmatpush1.bf16.msra.mxu0 0
        %1801 = vmatprep.subr.bf16.mxu0 0
        %1802 = vmatpush1.bf16.msra.mxu0 0
        %1803 = vmatprep.subr.bf16.mxu0 0
        %1804 = vmatpush1.bf16.msra.mxu0 0
        %1805 = vmatprep.subr.bf16.mxu0 0
        %1806 = vmatpush1.bf16.msra.mxu0 0
        %1807 = vmatprep.subr.bf16.mxu0 0
        %1808 = vmatpush1.bf16.msra.mxu0 0
        %1809 = vmatprep.subr.bf16.mxu0 0
        %1810 = vmatpush1.bf16.msra.mxu0 0
        %1811 = vmatprep.subr.bf16.mxu0 0
        %1812 = vmatpush1.bf16.msra.mxu0 0
        %1813 = vmatprep.subr.bf16.mxu0 0
        %1814 = vmatpush1.bf16.msra.mxu0 0
        %1815 = vmatprep.subr.bf16.mxu0 0
        %1816 = vmatpush1.bf16.msra.mxu0 0
        %1817 = vmatprep.subr.bf16.mxu0 0
        %1818 = vmatpush1.bf16.msra.mxu0 0
        %1819 = vmatprep.subr.bf16.mxu0 0
        %1820 = vmatpush1.bf16.msra.mxu0 0
        %1821 = vmatprep.subr.bf16.mxu0 0
        %1822 = vmatpush1.bf16.msra.mxu0 0
        %1823 = vmatprep.subr.bf16.mxu0 0
        %1824 = vmatpush1.bf16.msra.mxu0 0
        %1825 = vmatprep.mubr.bf16.mxu0 0
        %1826 = vmatmul.mubr.bf16.gmra.mrb[0].mxu0 %v1782
        %v1827 = vpop.f32.mrb[0].mxu0
        %v1828 = vadd.f32 %v1748, %v1827
        %v1829 = vpop.f32.mrb[0].mxu0
        %v1830 = vpop.f32.mrb[0].mxu0
        %v1831 = vadd.f32 %v1748, %v1830
        %v1832 = vpop.f32.mrb[0].mxu0
        %1833 = vmatprep.mubr.bf16.mxu0 0
        %1834 = vmatmul.mubr.bf16.gmra.mrb[0].mxu0 %v1785
        %v1835 = vpop.f32.mrb[0].mxu0
        %v1836 = vadd.f32 %v1748, %v1835
        %v1837 = vpop.f32.mrb[0].mxu0
        %v1838 = vpop.f32.mrb[0].mxu0
        %v1839 = vadd.f32 %v1748, %v1838
        %v1840 = vpop.f32.mrb[0].mxu0
        %1841 = vmatprep.mubr.bf16.mxu0 0
        %1842 = vmatmul.mubr.bf16.gmra.mrb[0].mxu0 %v1788
        %v1843 = vpop.f32.mrb[0].mxu0
        %v1844 = vadd.f32 %v1748, %v1843
        %v1845 = vpop.f32.mrb[0].mxu0
        %v1846 = vpop.f32.mrb[0].mxu0
        %v1847 = vadd.f32 %v1748, %v1846
        %v1848 = vpop.f32.mrb[0].mxu0
        %1849 = vmatprep.mubr.bf16.mxu0 0
        %1850 = vmatmul.mubr.bf16.gmra.mrb[0].mxu0 %v1791
        %v1851 = vpop.f32.mrb[0].mxu0
        %v1852 = vadd.f32 %v1748, %v1851
        %v1853 = vpop.f32.mrb[0].mxu0
        %v1854 = vpop.f32.mrb[0].mxu0
        %v1855 = vadd.f32 %v1748, %v1854
        %v1856 = vpop.f32.mrb[0].mxu0
        %1857 = vdwg.mxu0
        %v1858 = vld [vmem:[%s4] sm:$0xf]
        %v1859 = vld [vmem:[%s4 + $0x4] sm:$0xf]
        %v1860 = vld [vmem:[%s4 + $0x8] sm:$0xf]
        %v1861 = vld [vmem:[%s4 + $0xc] sm:$0xf]
        %v1862 = vld [vmem:[%s4 + $0x10] sm:$0xf]
        %v1863 = vld [vmem:[%s4 + $0x14] sm:$0xf]
        %v1864 = vld [vmem:[%s4 + $0x18] sm:$0xf]
        %v1865 = vld [vmem:[%s4 + $0x1c] sm:$0xf]
        %v1866 = vld [vmem:[%s4 + $0x20] sm:$0xf]
        %v1867 = vld [vmem:[%s4 + $0x24] sm:$0xf]
        %v1868 = vld [vmem:[%s4 + $0x28] sm:$0xf]
        %v1869 = vld [vmem:[%s4 + $0x2c] sm:$0xf]
        %v1870 = vld [vmem:[%s4 + $0x30] sm:$0xf]
        %v1871 = vld [vmem:[%s4 + $0x34] sm:$0xf]
        %v1872 = vld [vmem:[%s4 + $0x38] sm:$0xf]
        %v1873 = vld [vmem:[%s4 + $0x3c] sm:$0xf]
        %v1874 = vld [vmem:[%s4 + $0x40] sm:$0xf]
        %v1875 = vld [vmem:[%s4 + $0x44] sm:$0xf]
        %v1876 = vld [vmem:[%s4 + $0x48] sm:$0xf]
        %v1877 = vld [vmem:[%s4 + $0x4c] sm:$0xf]
        %v1878 = vld [vmem:[%s4 + $0x50] sm:$0xf]
        %v1879 = vld [vmem:[%s4 + $0x54] sm:$0xf]
        %v1880 = vld [vmem:[%s4 + $0x58] sm:$0xf]
        %v1881 = vld [vmem:[%s4 + $0x5c] sm:$0xf]
        %v1882 = vld [vmem:[%s4 + $0x60] sm:$0xf]
        %v1883 = vld [vmem:[%s4 + $0x64] sm:$0xf]
        %v1884 = vld [vmem:[%s4 + $0x68] sm:$0xf]
        %v1885 = vld [vmem:[%s4 + $0x6c] sm:$0xf]
        %v1886 = vld [vmem:[%s4 + $0x70] sm:$0xf]
        %v1887 = vld [vmem:[%s4 + $0x74] sm:$0xf]
        %v1888 = vld [vmem:[%s4 + $0x78] sm:$0xf]
        %v1889 = vld [vmem:[%s4 + $0x7c] sm:$0xf]
        %v1890 = vpack.c.bf16 %v1831, %v1828
        %v1891 = vpack.c.bf16 %v1839, %v1836
        %v1892 = vpack.c.bf16 %v1847, %v1844
        %v1893 = vpack.c.bf16 %v1855, %v1852
        %v1926 = vunpack.c.l.b16 %v1858
        %v1927 = vunpack.c.l.b16 %v1859
        %v1928 = vunpack.c.l.b16 %v1860
        %v1929 = vunpack.c.l.b16 %v1861
        %v1930 = vunpack.c.l.b16 %v1862
        %v1931 = vunpack.c.l.b16 %v1863
        %v1932 = vunpack.c.l.b16 %v1864
        %v1933 = vunpack.c.l.b16 %v1865
        %v1934 = vunpack.c.l.b16 %v1866
        %v1935 = vunpack.c.l.b16 %v1867
        %v1936 = vunpack.c.l.b16 %v1868
        %v1937 = vunpack.c.l.b16 %v1869
        %v1938 = vunpack.c.l.b16 %v1870
        %v1939 = vunpack.c.l.b16 %v1871
        %v1940 = vunpack.c.l.b16 %v1872
        %v1941 = vunpack.c.l.b16 %v1873
        %v1942 = vunpack.c.l.b16 %v1874
        %v1943 = vunpack.c.l.b16 %v1875
        %v1944 = vunpack.c.l.b16 %v1876
        %v1945 = vunpack.c.l.b16 %v1877
        %v1946 = vunpack.c.l.b16 %v1878
        %v1947 = vunpack.c.l.b16 %v1879
        %v1948 = vunpack.c.l.b16 %v1880
        %v1949 = vunpack.c.l.b16 %v1881
        %v1950 = vunpack.c.l.b16 %v1882
        %v1951 = vunpack.c.l.b16 %v1883
        %v1952 = vunpack.c.l.b16 %v1884
        %v1953 = vunpack.c.l.b16 %v1885
        %v1954 = vunpack.c.l.b16 %v1886
        %v1955 = vunpack.c.l.b16 %v1887
        %v1956 = vunpack.c.l.b16 %v1888
        %v1957 = vunpack.c.l.b16 %v1889
        %v1958 = vpack.c.b16 %v1927, %v1926
        %v1959 = vpack.c.b16 %v1929, %v1928
        %v1960 = vpack.c.b16 %v1931, %v1930
        %v1961 = vpack.c.b16 %v1933, %v1932
        %v1962 = vpack.c.b16 %v1935, %v1934
        %v1963 = vpack.c.b16 %v1937, %v1936
        %v1964 = vpack.c.b16 %v1939, %v1938
        %v1965 = vpack.c.b16 %v1941, %v1940
        %v1966 = vpack.c.b16 %v1943, %v1942
        %v1967 = vpack.c.b16 %v1945, %v1944
        %v1968 = vpack.c.b16 %v1947, %v1946
        %v1969 = vpack.c.b16 %v1949, %v1948
        %v1970 = vpack.c.b16 %v1951, %v1950
        %v1971 = vpack.c.b16 %v1953, %v1952
        %v1972 = vpack.c.b16 %v1955, %v1954
        %v1973 = vpack.c.b16 %v1957, %v1956
        %vm1974 = vcmask 523264
        %v1976 = vsel %vm1974, %v1958, 0
        %v1979 = vsel %vm1974, %v1959, 0
        %v1982 = vsel %vm1974, %v1960, 0
        %v1985 = vsel %vm1974, %v1961, 0
        %v1988 = vsel %vm1974, %v1962, 0
        %v1991 = vsel %vm1974, %v1963, 0
        %v1994 = vsel %vm1974, %v1964, 0
        %v1997 = vsel %vm1974, %v1965, 0
        %v2000 = vsel %vm1974, %v1966, 0
        %v2003 = vsel %vm1974, %v1967, 0
        %v2006 = vsel %vm1974, %v1968, 0
        %v2009 = vsel %vm1974, %v1969, 0
        %v2012 = vsel %vm1974, %v1970, 0
        %v2015 = vsel %vm1974, %v1971, 0
        %v2018 = vsel %vm1974, %v1972, 0
        %v2021 = vsel %vm1974, %v1973, 0
        %2023 = vmatprep.subr.bf16.mxu0 0
        %2024 = vmatpush1.bf16.msra.mxu0 %v1890
        %2025 = vmatprep.subr.bf16.mxu0 0
        %2026 = vmatpush1.bf16.msra.mxu0 %v1891
        %2027 = vmatprep.subr.bf16.mxu0 0
        %2028 = vmatpush1.bf16.msra.mxu0 %v1892
        %2029 = vmatprep.subr.bf16.mxu0 0
        %2030 = vmatpush1.bf16.msra.mxu0 %v1893
        %2031 = vmatprep.subr.bf16.mxu0 0
        %2032 = vmatpush1.bf16.msra.mxu0 0
        %2033 = vmatprep.subr.bf16.mxu0 0
        %2034 = vmatpush1.bf16.msra.mxu0 0
        %2035 = vmatprep.subr.bf16.mxu0 0
        %2036 = vmatpush1.bf16.msra.mxu0 0
        %2037 = vmatprep.subr.bf16.mxu0 0
        %2038 = vmatpush1.bf16.msra.mxu0 0
        %2039 = vmatprep.subr.bf16.mxu0 0
        %2040 = vmatpush1.bf16.msra.mxu0 0
        %2041 = vmatprep.subr.bf16.mxu0 0
        %2042 = vmatpush1.bf16.msra.mxu0 0
        %2043 = vmatprep.subr.bf16.mxu0 0
        %2044 = vmatpush1.bf16.msra.mxu0 0
        %2045 = vmatprep.subr.bf16.mxu0 0
        %2046 = vmatpush1.bf16.msra.mxu0 0
        %2047 = vmatprep.subr.bf16.mxu0 0
        %2048 = vmatpush1.bf16.msra.mxu0 0
        %2049 = vmatprep.subr.bf16.mxu0 0
        %2050 = vmatpush1.bf16.msra.mxu0 0
        %2051 = vmatprep.subr.bf16.mxu0 0
        %2052 = vmatpush1.bf16.msra.mxu0 0
        %2053 = vmatprep.subr.bf16.mxu0 0
        %2054 = vmatpush1.bf16.msra.mxu0 0
        %2055 = vmatprep.mubr.bf16.mxu0 0
        %2056 = vmatmul.mubr.bf16.gmra.mrb[0].mxu0 %v1976
        %v2057 = vpop.f32.mrb[0].mxu0
        %v2058 = vadd.f32 0.0, %v2057
        %v2059 = vpop.f32.mrb[0].mxu0
        %v2060 = vpop.f32.mrb[0].mxu0
        %v2061 = vadd.f32 0.0, %v2060
        %v2062 = vpop.f32.mrb[0].mxu0
        %2063 = vmatprep.mubr.bf16.mxu0 0
        %2064 = vmatmul.mubr.bf16.gmra.mrb[0].mxu0 %v1979
        %v2065 = vpop.f32.mrb[0].mxu0
        %v2066 = vadd.f32 0.0, %v2065
        %v2067 = vpop.f32.mrb[0].mxu0
        %v2068 = vpop.f32.mrb[0].mxu0
        %v2069 = vadd.f32 0.0, %v2068
        %v2070 = vpop.f32.mrb[0].mxu0
        %2071 = vmatprep.mubr.bf16.mxu0 0
        %2072 = vmatmul.mubr.bf16.gmra.mrb[0].mxu0 %v1982
        %v2073 = vpop.f32.mrb[0].mxu0
        %v2074 = vadd.f32 0.0, %v2073
        %v2075 = vpop.f32.mrb[0].mxu0
        %v2076 = vpop.f32.mrb[0].mxu0
        %v2077 = vadd.f32 0.0, %v2076
        %v2078 = vpop.f32.mrb[0].mxu0
        %2079 = vmatprep.mubr.bf16.mxu0 0
        %2080 = vmatmul.mubr.bf16.gmra.mrb[0].mxu0 %v1985
        %v2081 = vpop.f32.mrb[0].mxu0
        %v2082 = vadd.f32 0.0, %v2081
        %v2083 = vpop.f32.mrb[0].mxu0
        %v2084 = vpop.f32.mrb[0].mxu0
        %v2085 = vadd.f32 0.0, %v2084
        %v2086 = vpop.f32.mrb[0].mxu0
        %2087 = vmatprep.mubr.bf16.mxu0 0
        %2088 = vmatmul.mubr.bf16.gmra.mrb[0].mxu0 %v1988
        %v2089 = vpop.f32.mrb[0].mxu0
        %v2090 = vadd.f32 0.0, %v2089
        %v2091 = vpop.f32.mrb[0].mxu0
        %v2092 = vpop.f32.mrb[0].mxu0
        %v2093 = vadd.f32 0.0, %v2092
        %v2094 = vpop.f32.mrb[0].mxu0
        %2095 = vmatprep.mubr.bf16.mxu0 0
        %2096 = vmatmul.mubr.bf16.gmra.mrb[0].mxu0 %v1991
        %v2097 = vpop.f32.mrb[0].mxu0
        %v2098 = vadd.f32 0.0, %v2097
        %v2099 = vpop.f32.mrb[0].mxu0
        %v2100 = vpop.f32.mrb[0].mxu0
        %v2101 = vadd.f32 0.0, %v2100
        %v2102 = vpop.f32.mrb[0].mxu0
        %2103 = vmatprep.mubr.bf16.mxu0 0
        %2104 = vmatmul.mubr.bf16.gmra.mrb[0].mxu0 %v1994
        %v2105 = vpop.f32.mrb[0].mxu0
        %v2106 = vadd.f32 0.0, %v2105
        %v2107 = vpop.f32.mrb[0].mxu0
        %v2108 = vpop.f32.mrb[0].mxu0
        %v2109 = vadd.f32 0.0, %v2108
        %v2110 = vpop.f32.mrb[0].mxu0
        %2111 = vmatprep.mubr.bf16.mxu0 0
        %2112 = vmatmul.mubr.bf16.gmra.mrb[0].mxu0 %v1997
        %v2113 = vpop.f32.mrb[0].mxu0
        %v2114 = vadd.f32 0.0, %v2113
        %v2115 = vpop.f32.mrb[0].mxu0
        %v2116 = vpop.f32.mrb[0].mxu0
        %v2117 = vadd.f32 0.0, %v2116
        %v2118 = vpop.f32.mrb[0].mxu0
        %2119 = vmatprep.mubr.bf16.mxu0 0
        %2120 = vmatmul.mubr.bf16.gmra.mrb[0].mxu0 %v2000
        %v2121 = vpop.f32.mrb[0].mxu0
        %v2122 = vadd.f32 0.0, %v2121
        %v2123 = vpop.f32.mrb[0].mxu0
        %v2124 = vpop.f32.mrb[0].mxu0
        %v2125 = vadd.f32 0.0, %v2124
        %v2126 = vpop.f32.mrb[0].mxu0
        %2127 = vmatprep.mubr.bf16.mxu0 0
        %2128 = vmatmul.mubr.bf16.gmra.mrb[0].mxu0 %v2003
        %v2129 = vpop.f32.mrb[0].mxu0
        %v2130 = vadd.f32 0.0, %v2129
        %v2131 = vpop.f32.mrb[0].mxu0
        %v2132 = vpop.f32.mrb[0].mxu0
        %v2133 = vadd.f32 0.0, %v2132
        %v2134 = vpop.f32.mrb[0].mxu0
        %2135 = vmatprep.mubr.bf16.mxu0 0
        %2136 = vmatmul.mubr.bf16.gmra.mrb[0].mxu0 %v2006
        %v2137 = vpop.f32.mrb[0].mxu0
        %v2138 = vadd.f32 0.0, %v2137
        %v2139 = vpop.f32.mrb[0].mxu0
        %v2140 = vpop.f32.mrb[0].mxu0
        %v2141 = vadd.f32 0.0, %v2140
        %v2142 = vpop.f32.mrb[0].mxu0
        %2143 = vmatprep.mubr.bf16.mxu0 0
        %2144 = vmatmul.mubr.bf16.gmra.mrb[0].mxu0 %v2009
        %v2145 = vpop.f32.mrb[0].mxu0
        %v2146 = vadd.f32 0.0, %v2145
        %v2147 = vpop.f32.mrb[0].mxu0
        %v2148 = vpop.f32.mrb[0].mxu0
        %v2149 = vadd.f32 0.0, %v2148
        %v2150 = vpop.f32.mrb[0].mxu0
        %2151 = vmatprep.mubr.bf16.mxu0 0
        %2152 = vmatmul.mubr.bf16.gmra.mrb[0].mxu0 %v2012
        %v2153 = vpop.f32.mrb[0].mxu0
        %v2154 = vadd.f32 0.0, %v2153
        %v2155 = vpop.f32.mrb[0].mxu0
        %v2156 = vpop.f32.mrb[0].mxu0
        %v2157 = vadd.f32 0.0, %v2156
        %v2158 = vpop.f32.mrb[0].mxu0
        %2159 = vmatprep.mubr.bf16.mxu0 0
        %2160 = vmatmul.mubr.bf16.gmra.mrb[0].mxu0 %v2015
        %v2161 = vpop.f32.mrb[0].mxu0
        %v2162 = vadd.f32 0.0, %v2161
        %v2163 = vpop.f32.mrb[0].mxu0
        %v2164 = vpop.f32.mrb[0].mxu0
        %v2165 = vadd.f32 0.0, %v2164
        %v2166 = vpop.f32.mrb[0].mxu0
        %2167 = vmatprep.mubr.bf16.mxu0 0
        %2168 = vmatmul.mubr.bf16.gmra.mrb[0].mxu0 %v2018
        %v2169 = vpop.f32.mrb[0].mxu0
        %v2170 = vadd.f32 0.0, %v2169
        %v2171 = vpop.f32.mrb[0].mxu0
        %v2172 = vpop.f32.mrb[0].mxu0
        %v2173 = vadd.f32 0.0, %v2172
        %v2174 = vpop.f32.mrb[0].mxu0
        %2175 = vmatprep.mubr.bf16.mxu0 0
        %2176 = vmatmul.mubr.bf16.gmra.mrb[0].mxu0 %v2021
        %v2177 = vpop.f32.mrb[0].mxu0
        %v2178 = vadd.f32 0.0, %v2177
        %v2179 = vpop.f32.mrb[0].mxu0
        %v2180 = vpop.f32.mrb[0].mxu0
        %v2181 = vadd.f32 0.0, %v2180
        %v2182 = vpop.f32.mrb[0].mxu0
        %2183 = vdwg.mxu0
        %v2184 = vsel %vm1051, %v2058, 0.0
        %2185 = vadd.xlane.f32.xlu0 %v2184
        %v2186 = vpop.xlane.xlu0 %2185
        %v2187 = vsel %vm1051, %v2061, 0.0
        %2188 = vadd.xlane.f32.xlu0 %v2187
        %v2189 = vpop.xlane.xlu0 %2188
        %v2190 = vsel %vm1051, %v2066, 0.0
        %2191 = vadd.xlane.f32.xlu0 %v2190
        %v2192 = vpop.xlane.xlu0 %2191
        %v2193 = vsel %vm1051, %v2069, 0.0
        %2194 = vadd.xlane.f32.xlu0 %v2193
        %v2195 = vpop.xlane.xlu0 %2194
        %v2196 = vsel %vm1051, %v2074, 0.0
        %2197 = vadd.xlane.f32.xlu0 %v2196
        %v2198 = vpop.xlane.xlu0 %2197
        %v2199 = vsel %vm1051, %v2077, 0.0
        %2200 = vadd.xlane.f32.xlu0 %v2199
        %v2201 = vpop.xlane.xlu0 %2200
        %v2202 = vsel %vm1051, %v2082, 0.0
        %2203 = vadd.xlane.f32.xlu0 %v2202
        %v2204 = vpop.xlane.xlu0 %2203
        %v2205 = vsel %vm1051, %v2085, 0.0
        %2206 = vadd.xlane.f32.xlu0 %v2205
        %v2207 = vpop.xlane.xlu0 %2206
        %v2208 = vsel %vm1051, %v2090, 0.0
        %2209 = vadd.xlane.f32.xlu0 %v2208
        %v2210 = vpop.xlane.xlu0 %2209
        %v2211 = vsel %vm1051, %v2093, 0.0
        %2212 = vadd.xlane.f32.xlu0 %v2211
        %v2213 = vpop.xlane.xlu0 %2212
        %v2214 = vsel %vm1051, %v2098, 0.0
        %2215 = vadd.xlane.f32.xlu0 %v2214
        %v2216 = vpop.xlane.xlu0 %2215
        %v2217 = vsel %vm1051, %v2101, 0.0
        %2218 = vadd.xlane.f32.xlu0 %v2217
        %v2219 = vpop.xlane.xlu0 %2218
        %v2220 = vsel %vm1051, %v2106, 0.0
        %2221 = vadd.xlane.f32.xlu0 %v2220
        %v2222 = vpop.xlane.xlu0 %2221
        %v2223 = vsel %vm1051, %v2109, 0.0
        %2224 = vadd.xlane.f32.xlu0 %v2223
        %v2225 = vpop.xlane.xlu0 %2224
        %v2226 = vsel %vm1051, %v2114, 0.0
        %2227 = vadd.xlane.f32.xlu0 %v2226
        %v2228 = vpop.xlane.xlu0 %2227
        %v2229 = vsel %vm1051, %v2117, 0.0
        %2230 = vadd.xlane.f32.xlu0 %v2229
        %v2231 = vpop.xlane.xlu0 %2230
        %v2232 = vsel %vm1051, %v2122, 0.0
        %2233 = vadd.xlane.f32.xlu0 %v2232
        %v2234 = vpop.xlane.xlu0 %2233
        %v2235 = vsel %vm1051, %v2125, 0.0
        %2236 = vadd.xlane.f32.xlu0 %v2235
        %v2237 = vpop.xlane.xlu0 %2236
        %v2238 = vsel %vm1051, %v2130, 0.0
        %2239 = vadd.xlane.f32.xlu0 %v2238
        %v2240 = vpop.xlane.xlu0 %2239
        %v2241 = vsel %vm1051, %v2133, 0.0
        %2242 = vadd.xlane.f32.xlu0 %v2241
        %v2243 = vpop.xlane.xlu0 %2242
        %v2244 = vsel %vm1051, %v2138, 0.0
        %2245 = vadd.xlane.f32.xlu0 %v2244
        %v2246 = vpop.xlane.xlu0 %2245
        %v2247 = vsel %vm1051, %v2141, 0.0
        %2248 = vadd.xlane.f32.xlu0 %v2247
        %v2249 = vpop.xlane.xlu0 %2248
        %v2250 = vsel %vm1051, %v2146, 0.0
        %2251 = vadd.xlane.f32.xlu0 %v2250
        %v2252 = vpop.xlane.xlu0 %2251
        %v2253 = vsel %vm1051, %v2149, 0.0
        %2254 = vadd.xlane.f32.xlu0 %v2253
        %v2255 = vpop.xlane.xlu0 %2254
        %v2256 = vsel %vm1051, %v2154, 0.0
        %2257 = vadd.xlane.f32.xlu0 %v2256
        %v2258 = vpop.xlane.xlu0 %2257
        %v2259 = vsel %vm1051, %v2157, 0.0
        %2260 = vadd.xlane.f32.xlu0 %v2259
        %v2261 = vpop.xlane.xlu0 %2260
        %v2262 = vsel %vm1051, %v2162, 0.0
        %2263 = vadd.xlane.f32.xlu0 %v2262
        %v2264 = vpop.xlane.xlu0 %2263
        %v2265 = vsel %vm1051, %v2165, 0.0
        %2266 = vadd.xlane.f32.xlu0 %v2265
        %v2267 = vpop.xlane.xlu0 %2266
        %v2268 = vsel %vm1051, %v2170, 0.0
        %2269 = vadd.xlane.f32.xlu0 %v2268
        %v2270 = vpop.xlane.xlu0 %2269
        %v2271 = vsel %vm1051, %v2173, 0.0
        %2272 = vadd.xlane.f32.xlu0 %v2271
        %v2273 = vpop.xlane.xlu0 %2272
        %v2274 = vsel %vm1051, %v2178, 0.0
        %2275 = vadd.xlane.f32.xlu0 %v2274
        %v2276 = vpop.xlane.xlu0 %2275
        %v2277 = vsel %vm1051, %v2181, 0.0
        %2278 = vadd.xlane.f32.xlu0 %v2277
        %v2279 = vpop.xlane.xlu0 %2278
        %v2280 = vmul.f32 %v2186, %v1148
        %v2281 = vmul.f32 %v2189, %v1148
        %v2282 = vmul.f32 %v2192, %v1148
        %v2283 = vmul.f32 %v2195, %v1148
        %v2284 = vmul.f32 %v2198, %v1148
        %v2285 = vmul.f32 %v2201, %v1148
        %v2286 = vmul.f32 %v2204, %v1148
        %v2287 = vmul.f32 %v2207, %v1148
        %v2288 = vmul.f32 %v2210, %v1148
        %v2289 = vmul.f32 %v2213, %v1148
        %v2290 = vmul.f32 %v2216, %v1148
        %v2291 = vmul.f32 %v2219, %v1148
        %v2292 = vmul.f32 %v2222, %v1148
        %v2293 = vmul.f32 %v2225, %v1148
        %v2294 = vmul.f32 %v2228, %v1148
        %v2295 = vmul.f32 %v2231, %v1148
        %v2296 = vmul.f32 %v2234, %v1148
        %v2297 = vmul.f32 %v2237, %v1148
        %v2298 = vmul.f32 %v2240, %v1148
        %v2299 = vmul.f32 %v2243, %v1148
        %v2300 = vmul.f32 %v2246, %v1148
        %v2301 = vmul.f32 %v2249, %v1148
        %v2302 = vmul.f32 %v2252, %v1148
        %v2303 = vmul.f32 %v2255, %v1148
        %v2304 = vmul.f32 %v2258, %v1148
        %v2305 = vmul.f32 %v2261, %v1148
        %v2306 = vmul.f32 %v2264, %v1148
        %v2307 = vmul.f32 %v2267, %v1148
        %v2308 = vmul.f32 %v2270, %v1148
        %v2309 = vmul.f32 %v2273, %v1148
        %v2310 = vmul.f32 %v2276, %v1148
        %v2311 = vmul.f32 %v2279, %v1148
        %v2312 = vsub.f32 %v2058, %v2280
        %v2313 = vsub.f32 %v2061, %v2281
        %v2314 = vsub.f32 %v2066, %v2282
        %v2315 = vsub.f32 %v2069, %v2283
        %v2316 = vsub.f32 %v2074, %v2284
        %v2317 = vsub.f32 %v2077, %v2285
        %v2318 = vsub.f32 %v2082, %v2286
        %v2319 = vsub.f32 %v2085, %v2287
        %v2320 = vsub.f32 %v2090, %v2288
        %v2321 = vsub.f32 %v2093, %v2289
        %v2322 = vsub.f32 %v2098, %v2290
        %v2323 = vsub.f32 %v2101, %v2291
        %v2324 = vsub.f32 %v2106, %v2292
        %v2325 = vsub.f32 %v2109, %v2293
        %v2326 = vsub.f32 %v2114, %v2294
        %v2327 = vsub.f32 %v2117, %v2295
        %v2328 = vsub.f32 %v2122, %v2296
        %v2329 = vsub.f32 %v2125, %v2297
        %v2330 = vsub.f32 %v2130, %v2298
        %v2331 = vsub.f32 %v2133, %v2299
        %v2332 = vsub.f32 %v2138, %v2300
        %v2333 = vsub.f32 %v2141, %v2301
        %v2334 = vsub.f32 %v2146, %v2302
        %v2335 = vsub.f32 %v2149, %v2303
        %v2336 = vsub.f32 %v2154, %v2304
        %v2337 = vsub.f32 %v2157, %v2305
        %v2338 = vsub.f32 %v2162, %v2306
        %v2339 = vsub.f32 %v2165, %v2307
        %v2340 = vsub.f32 %v2170, %v2308
        %v2341 = vsub.f32 %v2173, %v2309
        %v2342 = vsub.f32 %v2178, %v2310
        %v2343 = vsub.f32 %v2181, %v2311
        %v2344 = vmul.f32 %v2312, %v2312
        %v2345 = vmul.f32 %v2313, %v2313
        %v2346 = vmul.f32 %v2314, %v2314
        %v2347 = vmul.f32 %v2315, %v2315
        %v2348 = vmul.f32 %v2316, %v2316
        %v2349 = vmul.f32 %v2317, %v2317
        %v2350 = vmul.f32 %v2318, %v2318
        %v2351 = vmul.f32 %v2319, %v2319
        %v2352 = vmul.f32 %v2320, %v2320
        %v2353 = vmul.f32 %v2321, %v2321
        %v2354 = vmul.f32 %v2322, %v2322
        %v2355 = vmul.f32 %v2323, %v2323
        %v2356 = vmul.f32 %v2324, %v2324
        %v2357 = vmul.f32 %v2325, %v2325
        %v2358 = vmul.f32 %v2326, %v2326
        %v2359 = vmul.f32 %v2327, %v2327
        %v2360 = vmul.f32 %v2328, %v2328
        %v2361 = vmul.f32 %v2329, %v2329
        %v2362 = vmul.f32 %v2330, %v2330
        %v2363 = vmul.f32 %v2331, %v2331
        %v2364 = vmul.f32 %v2332, %v2332
        %v2365 = vmul.f32 %v2333, %v2333
        %v2366 = vmul.f32 %v2334, %v2334
        %v2367 = vmul.f32 %v2335, %v2335
        %v2368 = vmul.f32 %v2336, %v2336
        %v2369 = vmul.f32 %v2337, %v2337
        %v2370 = vmul.f32 %v2338, %v2338
        %v2371 = vmul.f32 %v2339, %v2339
        %v2372 = vmul.f32 %v2340, %v2340
        %v2373 = vmul.f32 %v2341, %v2341
        %v2374 = vmul.f32 %v2342, %v2342
        %v2375 = vmul.f32 %v2343, %v2343
        %v2376 = vsel %vm1051, %v2344, 0.0
        %2377 = vadd.xlane.f32.xlu0 %v2376
        %v2378 = vpop.xlane.xlu0 %2377
        %v2379 = vsel %vm1051, %v2345, 0.0
        %2380 = vadd.xlane.f32.xlu0 %v2379
        %v2381 = vpop.xlane.xlu0 %2380
        %v2382 = vsel %vm1051, %v2346, 0.0
        %2383 = vadd.xlane.f32.xlu0 %v2382
        %v2384 = vpop.xlane.xlu0 %2383
        %v2385 = vsel %vm1051, %v2347, 0.0
        %2386 = vadd.xlane.f32.xlu0 %v2385
        %v2387 = vpop.xlane.xlu0 %2386
        %v2388 = vsel %vm1051, %v2348, 0.0
        %2389 = vadd.xlane.f32.xlu0 %v2388
        %v2390 = vpop.xlane.xlu0 %2389
        %v2391 = vsel %vm1051, %v2349, 0.0
        %2392 = vadd.xlane.f32.xlu0 %v2391
        %v2393 = vpop.xlane.xlu0 %2392
        %v2394 = vsel %vm1051, %v2350, 0.0
        %2395 = vadd.xlane.f32.xlu0 %v2394
        %v2396 = vpop.xlane.xlu0 %2395
        %v2397 = vsel %vm1051, %v2351, 0.0
        %2398 = vadd.xlane.f32.xlu0 %v2397
        %v2399 = vpop.xlane.xlu0 %2398
        %v2400 = vsel %vm1051, %v2352, 0.0
        %2401 = vadd.xlane.f32.xlu0 %v2400
        %v2402 = vpop.xlane.xlu0 %2401
        %v2403 = vsel %vm1051, %v2353, 0.0
        %2404 = vadd.xlane.f32.xlu0 %v2403
        %v2405 = vpop.xlane.xlu0 %2404
        %v2406 = vsel %vm1051, %v2354, 0.0
        %2407 = vadd.xlane.f32.xlu0 %v2406
        %v2408 = vpop.xlane.xlu0 %2407
        %v2409 = vsel %vm1051, %v2355, 0.0
        %2410 = vadd.xlane.f32.xlu0 %v2409
        %v2411 = vpop.xlane.xlu0 %2410
        %v2412 = vsel %vm1051, %v2356, 0.0
        %2413 = vadd.xlane.f32.xlu0 %v2412
        %v2414 = vpop.xlane.xlu0 %2413
        %v2415 = vsel %vm1051, %v2357, 0.0
        %2416 = vadd.xlane.f32.xlu0 %v2415
        %v2417 = vpop.xlane.xlu0 %2416
        %v2418 = vsel %vm1051, %v2358, 0.0
        %2419 = vadd.xlane.f32.xlu0 %v2418
        %v2420 = vpop.xlane.xlu0 %2419
        %v2421 = vsel %vm1051, %v2359, 0.0
        %2422 = vadd.xlane.f32.xlu0 %v2421
        %v2423 = vpop.xlane.xlu0 %2422
        %v2424 = vsel %vm1051, %v2360, 0.0
        %2425 = vadd.xlane.f32.xlu0 %v2424
        %v2426 = vpop.xlane.xlu0 %2425
        %v2427 = vsel %vm1051, %v2361, 0.0
        %2428 = vadd.xlane.f32.xlu0 %v2427
        %v2429 = vpop.xlane.xlu0 %2428
        %v2430 = vsel %vm1051, %v2362, 0.0
        %2431 = vadd.xlane.f32.xlu0 %v2430
        %v2432 = vpop.xlane.xlu0 %2431
        %v2433 = vsel %vm1051, %v2363, 0.0
        %2434 = vadd.xlane.f32.xlu0 %v2433
        %v2435 = vpop.xlane.xlu0 %2434
        %v2436 = vsel %vm1051, %v2364, 0.0
        %2437 = vadd.xlane.f32.xlu0 %v2436
        %v2438 = vpop.xlane.xlu0 %2437
        %v2439 = vsel %vm1051, %v2365, 0.0
        %2440 = vadd.xlane.f32.xlu0 %v2439
        %v2441 = vpop.xlane.xlu0 %2440
        %v2442 = vsel %vm1051, %v2366, 0.0
        %2443 = vadd.xlane.f32.xlu0 %v2442
        %v2444 = vpop.xlane.xlu0 %2443
        %v2445 = vsel %vm1051, %v2367, 0.0
        %2446 = vadd.xlane.f32.xlu0 %v2445
        %v2447 = vpop.xlane.xlu0 %2446
        %v2448 = vsel %vm1051, %v2368, 0.0
        %2449 = vadd.xlane.f32.xlu0 %v2448
        %v2450 = vpop.xlane.xlu0 %2449
        %v2451 = vsel %vm1051, %v2369, 0.0
        %2452 = vadd.xlane.f32.xlu0 %v2451
        %v2453 = vpop.xlane.xlu0 %2452
        %v2454 = vsel %vm1051, %v2370, 0.0
        %2455 = vadd.xlane.f32.xlu0 %v2454
        %v2456 = vpop.xlane.xlu0 %2455
        %v2457 = vsel %vm1051, %v2371, 0.0
        %2458 = vadd.xlane.f32.xlu0 %v2457
        %v2459 = vpop.xlane.xlu0 %2458
        %v2460 = vsel %vm1051, %v2372, 0.0
        %2461 = vadd.xlane.f32.xlu0 %v2460
        %v2462 = vpop.xlane.xlu0 %2461
        %v2463 = vsel %vm1051, %v2373, 0.0
        %2464 = vadd.xlane.f32.xlu0 %v2463
        %v2465 = vpop.xlane.xlu0 %2464
        %v2466 = vsel %vm1051, %v2374, 0.0
        %2467 = vadd.xlane.f32.xlu0 %v2466
        %v2468 = vpop.xlane.xlu0 %2467
        %v2469 = vsel %vm1051, %v2375, 0.0
        %2470 = vadd.xlane.f32.xlu0 %v2469
        %v2471 = vpop.xlane.xlu0 %2470
        %v2472 = vmul.f32 %v2378, %v1148
        %v2473 = vmul.f32 %v2381, %v1148
        %v2474 = vmul.f32 %v2384, %v1148
        %v2475 = vmul.f32 %v2387, %v1148
        %v2476 = vmul.f32 %v2390, %v1148
        %v2477 = vmul.f32 %v2393, %v1148
        %v2478 = vmul.f32 %v2396, %v1148
        %v2479 = vmul.f32 %v2399, %v1148
        %v2480 = vmul.f32 %v2402, %v1148
        %v2481 = vmul.f32 %v2405, %v1148
        %v2482 = vmul.f32 %v2408, %v1148
        %v2483 = vmul.f32 %v2411, %v1148
        %v2484 = vmul.f32 %v2414, %v1148
        %v2485 = vmul.f32 %v2417, %v1148
        %v2486 = vmul.f32 %v2420, %v1148
        %v2487 = vmul.f32 %v2423, %v1148
        %v2488 = vmul.f32 %v2426, %v1148
        %v2489 = vmul.f32 %v2429, %v1148
        %v2490 = vmul.f32 %v2432, %v1148
        %v2491 = vmul.f32 %v2435, %v1148
        %v2492 = vmul.f32 %v2438, %v1148
        %v2493 = vmul.f32 %v2441, %v1148
        %v2494 = vmul.f32 %v2444, %v1148
        %v2495 = vmul.f32 %v2447, %v1148
        %v2496 = vmul.f32 %v2450, %v1148
        %v2497 = vmul.f32 %v2453, %v1148
        %v2498 = vmul.f32 %v2456, %v1148
        %v2499 = vmul.f32 %v2459, %v1148
        %v2500 = vmul.f32 %v2462, %v1148
        %v2501 = vmul.f32 %v2465, %v1148
        %v2502 = vmul.f32 %v2468, %v1148
        %v2503 = vmul.f32 %v2471, %v1148
        %v2504 = vadd.f32 %v2472, 1e-06
        %v2505 = vadd.f32 %v2473, 1e-06
        %v2506 = vadd.f32 %v2474, 1e-06
        %v2507 = vadd.f32 %v2475, 1e-06
        %v2508 = vadd.f32 %v2476, 1e-06
        %v2509 = vadd.f32 %v2477, 1e-06
        %v2510 = vadd.f32 %v2478, 1e-06
        %v2511 = vadd.f32 %v2479, 1e-06
        %v2512 = vadd.f32 %v2480, 1e-06
        %v2513 = vadd.f32 %v2481, 1e-06
        %v2514 = vadd.f32 %v2482, 1e-06
        %v2515 = vadd.f32 %v2483, 1e-06
        %v2516 = vadd.f32 %v2484, 1e-06
        %v2517 = vadd.f32 %v2485, 1e-06
        %v2518 = vadd.f32 %v2486, 1e-06
        %v2519 = vadd.f32 %v2487, 1e-06
        %v2520 = vadd.f32 %v2488, 1e-06
        %v2521 = vadd.f32 %v2489, 1e-06
        %v2522 = vadd.f32 %v2490, 1e-06
        %v2523 = vadd.f32 %v2491, 1e-06
        %v2524 = vadd.f32 %v2492, 1e-06
        %v2525 = vadd.f32 %v2493, 1e-06
        %v2526 = vadd.f32 %v2494, 1e-06
        %v2527 = vadd.f32 %v2495, 1e-06
        %v2528 = vadd.f32 %v2496, 1e-06
        %v2529 = vadd.f32 %v2497, 1e-06
        %v2530 = vadd.f32 %v2498, 1e-06
        %v2531 = vadd.f32 %v2499, 1e-06
        %v2532 = vadd.f32 %v2500, 1e-06
        %v2533 = vadd.f32 %v2501, 1e-06
        %v2534 = vadd.f32 %v2502, 1e-06
        %v2535 = vadd.f32 %v2503, 1e-06
        %v2536 = vrsqrt.pop %v2504
        %v2537 = vrsqrt.pop %v2505
        %v2538 = vrsqrt.pop %v2506
        %v2539 = vrsqrt.pop %v2507
        %v2540 = vrsqrt.pop %v2508
        %v2541 = vrsqrt.pop %v2509
        %v2542 = vrsqrt.pop %v2510
        %v2543 = vrsqrt.pop %v2511
        %v2544 = vrsqrt.pop %v2512
        %v2545 = vrsqrt.pop %v2513
        %v2546 = vrsqrt.pop %v2514
        %v2547 = vrsqrt.pop %v2515
        %v2548 = vrsqrt.pop %v2516
        %v2549 = vrsqrt.pop %v2517
        %v2550 = vrsqrt.pop %v2518
        %v2551 = vrsqrt.pop %v2519
        %v2552 = vrsqrt.pop %v2520
        %v2553 = vrsqrt.pop %v2521
        %v2554 = vrsqrt.pop %v2522
        %v2555 = vrsqrt.pop %v2523
        %v2556 = vrsqrt.pop %v2524
        %v2557 = vrsqrt.pop %v2525
        %v2558 = vrsqrt.pop %v2526
        %v2559 = vrsqrt.pop %v2527
        %v2560 = vrsqrt.pop %v2528
        %v2561 = vrsqrt.pop %v2529
        %v2562 = vrsqrt.pop %v2530
        %v2563 = vrsqrt.pop %v2531
        %v2564 = vrsqrt.pop %v2532
        %v2565 = vrsqrt.pop %v2533
        %v2566 = vrsqrt.pop %v2534
        %v2567 = vrsqrt.pop %v2535
        %v2568 = vmul.f32 %v2312, %v2536
        %v2569 = vmul.f32 %v2313, %v2537
        %v2570 = vmul.f32 %v2314, %v2538
        %v2571 = vmul.f32 %v2315, %v2539
        %v2572 = vmul.f32 %v2316, %v2540
        %v2573 = vmul.f32 %v2317, %v2541
        %v2574 = vmul.f32 %v2318, %v2542
        %v2575 = vmul.f32 %v2319, %v2543
        %v2576 = vmul.f32 %v2320, %v2544
        %v2577 = vmul.f32 %v2321, %v2545
        %v2578 = vmul.f32 %v2322, %v2546
        %v2579 = vmul.f32 %v2323, %v2547
        %v2580 = vmul.f32 %v2324, %v2548
        %v2581 = vmul.f32 %v2325, %v2549
        %v2582 = vmul.f32 %v2326, %v2550
        %v2583 = vmul.f32 %v2327, %v2551
        %v2584 = vmul.f32 %v2328, %v2552
        %v2585 = vmul.f32 %v2329, %v2553
        %v2586 = vmul.f32 %v2330, %v2554
        %v2587 = vmul.f32 %v2331, %v2555
        %v2588 = vmul.f32 %v2332, %v2556
        %v2589 = vmul.f32 %v2333, %v2557
        %v2590 = vmul.f32 %v2334, %v2558
        %v2591 = vmul.f32 %v2335, %v2559
        %v2592 = vmul.f32 %v2336, %v2560
        %v2593 = vmul.f32 %v2337, %v2561
        %v2594 = vmul.f32 %v2338, %v2562
        %v2595 = vmul.f32 %v2339, %v2563
        %v2596 = vmul.f32 %v2340, %v2564
        %v2597 = vmul.f32 %v2341, %v2565
        %v2598 = vmul.f32 %v2342, %v2566
        %v2599 = vmul.f32 %v2343, %v2567
        %v2600 = vpack.c.bf16 %v2569, %v2568
        %v2601 = vpack.c.bf16 %v2571, %v2570
        %v2602 = vpack.c.bf16 %v2573, %v2572
        %v2603 = vpack.c.bf16 %v2575, %v2574
        %v2604 = vpack.c.bf16 %v2577, %v2576
        %v2605 = vpack.c.bf16 %v2579, %v2578
        %v2606 = vpack.c.bf16 %v2581, %v2580
        %v2607 = vpack.c.bf16 %v2583, %v2582
        %v2608 = vpack.c.bf16 %v2585, %v2584
        %v2609 = vpack.c.bf16 %v2587, %v2586
        %v2610 = vpack.c.bf16 %v2589, %v2588
        %v2611 = vpack.c.bf16 %v2591, %v2590
        %v2612 = vpack.c.bf16 %v2593, %v2592
        %v2613 = vpack.c.bf16 %v2595, %v2594
        %v2614 = vpack.c.bf16 %v2597, %v2596
        %v2615 = vpack.c.bf16 %v2599, %v2598
        %s2616 = scalar_lea.vmem %s10, 4
        %v2617 = vld [vmem:[%s2616] sm:$0xf]
        %v2619 = vsel %vm1051, %v2600, 0
        %v2622 = vsel %vm1051, %v2601, 0
        %v2625 = vsel %vm1051, %v2602, 0
        %v2628 = vsel %vm1051, %v2603, 0
        %v2631 = vsel %vm1051, %v2604, 0
        %v2634 = vsel %vm1051, %v2605, 0
        %v2637 = vsel %vm1051, %v2606, 0
        %v2640 = vsel %vm1051, %v2607, 0
        %v2643 = vsel %vm1051, %v2608, 0
        %v2646 = vsel %vm1051, %v2609, 0
        %v2649 = vsel %vm1051, %v2610, 0
        %v2652 = vsel %vm1051, %v2611, 0
        %v2655 = vsel %vm1051, %v2612, 0
        %v2658 = vsel %vm1051, %v2613, 0
        %v2661 = vsel %vm1051, %v2614, 0
        %v2664 = vsel %vm1051, %v2615, 0
        %v2667 = vsel %vm1534, %v2617, 0
        %2669 = vmatprep.subr.bf16.mxu0 0
        %2670 = vmatpush1.bf16.msra.mxu0 %v2667
        %2671 = vmatprep.subr.bf16.mxu0 0
        %2672 = vmatpush1.bf16.msra.mxu0 0
        %2673 = vmatprep.subr.bf16.mxu0 0
        %2674 = vmatpush1.bf16.msra.mxu0 0
        %2675 = vmatprep.subr.bf16.mxu0 0
        %2676 = vmatpush1.bf16.msra.mxu0 0
        %2677 = vmatprep.subr.bf16.mxu0 0
        %2678 = vmatpush1.bf16.msra.mxu0 0
        %2679 = vmatprep.subr.bf16.mxu0 0
        %2680 = vmatpush1.bf16.msra.mxu0 0
        %2681 = vmatprep.subr.bf16.mxu0 0
        %2682 = vmatpush1.bf16.msra.mxu0 0
        %2683 = vmatprep.subr.bf16.mxu0 0
        %2684 = vmatpush1.bf16.msra.mxu0 0
        %2685 = vmatprep.subr.bf16.mxu0 0
        %2686 = vmatpush1.bf16.msra.mxu0 0
        %2687 = vmatprep.subr.bf16.mxu0 0
        %2688 = vmatpush1.bf16.msra.mxu0 0
        %2689 = vmatprep.subr.bf16.mxu0 0
        %2690 = vmatpush1.bf16.msra.mxu0 0
        %2691 = vmatprep.subr.bf16.mxu0 0
        %2692 = vmatpush1.bf16.msra.mxu0 0
        %2693 = vmatprep.subr.bf16.mxu0 0
        %2694 = vmatpush1.bf16.msra.mxu0 0
        %2695 = vmatprep.subr.bf16.mxu0 0
        %2696 = vmatpush1.bf16.msra.mxu0 0
        %2697 = vmatprep.subr.bf16.mxu0 0
        %2698 = vmatpush1.bf16.msra.mxu0 0
        %2699 = vmatprep.subr.bf16.mxu0 0
        %2700 = vmatpush1.bf16.msra.mxu0 0
        %2701 = vmatprep.mubr.bf16.mxu0 0
        %2702 = vmatmul.mubr.bf16.gmra.mrb[0].mxu0 %v2619
        %v2703 = vpop.f32.mrb[0].mxu0
        %v2704 = vadd.f32 0.0, %v2703
        %v2705 = vpop.f32.mrb[0].mxu0
        %v2706 = vpop.f32.mrb[0].mxu0
        %v2707 = vadd.f32 0.0, %v2706
        %v2708 = vpop.f32.mrb[0].mxu0
        %2709 = vmatprep.mubr.bf16.mxu0 0
        %2710 = vmatmul.mubr.bf16.gmra.mrb[0].mxu0 %v2622
        %v2711 = vpop.f32.mrb[0].mxu0
        %v2712 = vadd.f32 0.0, %v2711
        %v2713 = vpop.f32.mrb[0].mxu0
        %v2714 = vpop.f32.mrb[0].mxu0
        %v2715 = vadd.f32 0.0, %v2714
        %v2716 = vpop.f32.mrb[0].mxu0
        %2717 = vmatprep.mubr.bf16.mxu0 0
        %2718 = vmatmul.mubr.bf16.gmra.mrb[0].mxu0 %v2625
        %v2719 = vpop.f32.mrb[0].mxu0
        %v2720 = vadd.f32 0.0, %v2719
        %v2721 = vpop.f32.mrb[0].mxu0
        %v2722 = vpop.f32.mrb[0].mxu0
        %v2723 = vadd.f32 0.0, %v2722
        %v2724 = vpop.f32.mrb[0].mxu0
        %2725 = vmatprep.mubr.bf16.mxu0 0
        %2726 = vmatmul.mubr.bf16.gmra.mrb[0].mxu0 %v2628
        %v2727 = vpop.f32.mrb[0].mxu0
        %v2728 = vadd.f32 0.0, %v2727
        %v2729 = vpop.f32.mrb[0].mxu0
        %v2730 = vpop.f32.mrb[0].mxu0
        %v2731 = vadd.f32 0.0, %v2730
        %v2732 = vpop.f32.mrb[0].mxu0
        %2733 = vmatprep.mubr.bf16.mxu0 0
        %2734 = vmatmul.mubr.bf16.gmra.mrb[0].mxu0 %v2631
        %v2735 = vpop.f32.mrb[0].mxu0
        %v2736 = vadd.f32 0.0, %v2735
        %v2737 = vpop.f32.mrb[0].mxu0
        %v2738 = vpop.f32.mrb[0].mxu0
        %v2739 = vadd.f32 0.0, %v2738
        %v2740 = vpop.f32.mrb[0].mxu0
        %2741 = vmatprep.mubr.bf16.mxu0 0
        %2742 = vmatmul.mubr.bf16.gmra.mrb[0].mxu0 %v2634
        %v2743 = vpop.f32.mrb[0].mxu0
        %v2744 = vadd.f32 0.0, %v2743
        %v2745 = vpop.f32.mrb[0].mxu0
        %v2746 = vpop.f32.mrb[0].mxu0
        %v2747 = vadd.f32 0.0, %v2746
        %v2748 = vpop.f32.mrb[0].mxu0
        %2749 = vmatprep.mubr.bf16.mxu0 0
        %2750 = vmatmul.mubr.bf16.gmra.mrb[0].mxu0 %v2637
        %v2751 = vpop.f32.mrb[0].mxu0
        %v2752 = vadd.f32 0.0, %v2751
        %v2753 = vpop.f32.mrb[0].mxu0
        %v2754 = vpop.f32.mrb[0].mxu0
        %v2755 = vadd.f32 0.0, %v2754
        %v2756 = vpop.f32.mrb[0].mxu0
        %2757 = vmatprep.mubr.bf16.mxu0 0
        %2758 = vmatmul.mubr.bf16.gmra.mrb[0].mxu0 %v2640
        %v2759 = vpop.f32.mrb[0].mxu0
        %v2760 = vadd.f32 0.0, %v2759
        %v2761 = vpop.f32.mrb[0].mxu0
        %v2762 = vpop.f32.mrb[0].mxu0
        %v2763 = vadd.f32 0.0, %v2762
        %v2764 = vpop.f32.mrb[0].mxu0
        %2765 = vmatprep.mubr.bf16.mxu0 0
        %2766 = vmatmul.mubr.bf16.gmra.mrb[0].mxu0 %v2643
        %v2767 = vpop.f32.mrb[0].mxu0
        %v2768 = vadd.f32 0.0, %v2767
        %v2769 = vpop.f32.mrb[0].mxu0
        %v2770 = vpop.f32.mrb[0].mxu0
        %v2771 = vadd.f32 0.0, %v2770
        %v2772 = vpop.f32.mrb[0].mxu0
        %2773 = vmatprep.mubr.bf16.mxu0 0
        %2774 = vmatmul.mubr.bf16.gmra.mrb[0].mxu0 %v2646
        %v2775 = vpop.f32.mrb[0].mxu0
        %v2776 = vadd.f32 0.0, %v2775
        %v2777 = vpop.f32.mrb[0].mxu0
        %v2778 = vpop.f32.mrb[0].mxu0
        %v2779 = vadd.f32 0.0, %v2778
        %v2780 = vpop.f32.mrb[0].mxu0
        %2781 = vmatprep.mubr.bf16.mxu0 0
        %2782 = vmatmul.mubr.bf16.gmra.mrb[0].mxu0 %v2649
        %v2783 = vpop.f32.mrb[0].mxu0
        %v2784 = vadd.f32 0.0, %v2783
        %v2785 = vpop.f32.mrb[0].mxu0
        %v2786 = vpop.f32.mrb[0].mxu0
        %v2787 = vadd.f32 0.0, %v2786
        %v2788 = vpop.f32.mrb[0].mxu0
        %2789 = vmatprep.mubr.bf16.mxu0 0
        %2790 = vmatmul.mubr.bf16.gmra.mrb[0].mxu0 %v2652
        %v2791 = vpop.f32.mrb[0].mxu0
        %v2792 = vadd.f32 0.0, %v2791
        %v2793 = vpop.f32.mrb[0].mxu0
        %v2794 = vpop.f32.mrb[0].mxu0
        %v2795 = vadd.f32 0.0, %v2794
        %v2796 = vpop.f32.mrb[0].mxu0
        %2797 = vmatprep.mubr.bf16.mxu0 0
        %2798 = vmatmul.mubr.bf16.gmra.mrb[0].mxu0 %v2655
        %v2799 = vpop.f32.mrb[0].mxu0
        %v2800 = vadd.f32 0.0, %v2799
        %v2801 = vpop.f32.mrb[0].mxu0
        %v2802 = vpop.f32.mrb[0].mxu0
        %v2803 = vadd.f32 0.0, %v2802
        %v2804 = vpop.f32.mrb[0].mxu0
        %2805 = vmatprep.mubr.bf16.mxu0 0
        %2806 = vmatmul.mubr.bf16.gmra.mrb[0].mxu0 %v2658
        %v2807 = vpop.f32.mrb[0].mxu0
        %v2808 = vadd.f32 0.0, %v2807
        %v2809 = vpop.f32.mrb[0].mxu0
        %v2810 = vpop.f32.mrb[0].mxu0
        %v2811 = vadd.f32 0.0, %v2810
        %v2812 = vpop.f32.mrb[0].mxu0
        %2813 = vmatprep.mubr.bf16.mxu0 0
        %2814 = vmatmul.mubr.bf16.gmra.mrb[0].mxu0 %v2661
        %v2815 = vpop.f32.mrb[0].mxu0
        %v2816 = vadd.f32 0.0, %v2815
        %v2817 = vpop.f32.mrb[0].mxu0
        %v2818 = vpop.f32.mrb[0].mxu0
        %v2819 = vadd.f32 0.0, %v2818
        %v2820 = vpop.f32.mrb[0].mxu0
        %2821 = vmatprep.mubr.bf16.mxu0 0
        %2822 = vmatmul.mubr.bf16.gmra.mrb[0].mxu0 %v2664
        %v2823 = vpop.f32.mrb[0].mxu0
        %v2824 = vadd.f32 0.0, %v2823
        %v2825 = vpop.f32.mrb[0].mxu0
        %v2826 = vpop.f32.mrb[0].mxu0
        %v2827 = vadd.f32 0.0, %v2826
        %v2828 = vpop.f32.mrb[0].mxu0
        %2829 = vdwg.mxu0
        %v2830 = vadd.f32 %v1699, %v2704
        %v2831 = vadd.f32 %v1700, %v2707
        %v2832 = vadd.f32 %v1701, %v2712
        %v2833 = vadd.f32 %v1702, %v2715
        %v2834 = vadd.f32 %v1703, %v2720
        %v2835 = vadd.f32 %v1704, %v2723
        %v2836 = vadd.f32 %v1705, %v2728
        %v2837 = vadd.f32 %v1706, %v2731
        %v2838 = vadd.f32 %v1707, %v2736
        %v2839 = vadd.f32 %v1708, %v2739
        %v2840 = vadd.f32 %v1709, %v2744
        %v2841 = vadd.f32 %v1710, %v2747
        %v2842 = vadd.f32 %v1711, %v2752
        %v2843 = vadd.f32 %v1712, %v2755
        %v2844 = vadd.f32 %v1713, %v2760
        %v2845 = vadd.f32 %v1714, %v2763
        %v2846 = vadd.f32 %v1715, %v2768
        %v2847 = vadd.f32 %v1716, %v2771
        %v2848 = vadd.f32 %v1717, %v2776
        %v2849 = vadd.f32 %v1718, %v2779
        %v2850 = vadd.f32 %v1719, %v2784
        %v2851 = vadd.f32 %v1720, %v2787
        %v2852 = vadd.f32 %v1721, %v2792
        %v2853 = vadd.f32 %v1722, %v2795
        %v2854 = vadd.f32 %v1723, %v2800
        %v2855 = vadd.f32 %v1724, %v2803
        %v2856 = vadd.f32 %v1725, %v2808
        %v2857 = vadd.f32 %v1726, %v2811
        %v2858 = vadd.f32 %v1727, %v2816
        %v2859 = vadd.f32 %v1728, %v2819
        %v2860 = vadd.f32 %v1729, %v2824
        %v2861 = vadd.f32 %v1730, %v2827
        %v2862 = vld [vmem:[%s518] sm:$0xf]
        %v2863 = vld [vmem:[%s518 + $0x4] sm:$0xf]
        %s2864 = scalar_lea.vmem %s7, 32
        %v2865 = vld [vmem:[%s2864] sm:$0xf]
        %v2866 = vld [vmem:[%s2864 + $0x4] sm:$0xf]
        %v2867 = vld [vmem:[%s2864 + $0x8] sm:$0xf]
        %v2868 = vld [vmem:[%s2864 + $0xc] sm:$0xf]
        %v2869 = vld [vmem:[%s8 + $0x2] sm:$0x1]
        %v2870 = vlaneseq
        %v2871 = vshrl.u32 %v2870, 7
        %v2872 = vsub.s32 0, %v2871
        %v2873 = vrot.slane %v2869, %v2872
        %v2876 = vunpack.c.l.b16 %v2862
        %v2877 = vunpack.c.l.b16 %v2863
        %v2878 = vpack.c.b16 %v2877, %v2876
        %v2883 = vunpack.c.l.b16 %v2865
        %v2884 = vunpack.c.l.b16 %v2866
        %v2885 = vunpack.c.l.b16 %v2867
        %v2886 = vunpack.c.l.b16 %v2868
        %v2887 = vpack.c.b16 %v2884, %v2883
        %v2888 = vpack.c.b16 %v2886, %v2885
        %v2892 = vsel %vm659, %v2878, 0
        %2894 = vmatprep.subr.bf16.mxu0 0
        %2895 = vmatpush1.bf16.msra.mxu0 %v2887
        %2896 = vmatprep.subr.bf16.mxu0 0
        %2897 = vmatpush1.bf16.msra.mxu0 %v2888
        %2898 = vmatprep.subr.bf16.mxu0 0
        %2899 = vmatpush1.bf16.msra.mxu0 0
        %2900 = vmatprep.subr.bf16.mxu0 0
        %2901 = vmatpush1.bf16.msra.mxu0 0
        %2902 = vmatprep.subr.bf16.mxu0 0
        %2903 = vmatpush1.bf16.msra.mxu0 0
        %2904 = vmatprep.subr.bf16.mxu0 0
        %2905 = vmatpush1.bf16.msra.mxu0 0
        %2906 = vmatprep.subr.bf16.mxu0 0
        %2907 = vmatpush1.bf16.msra.mxu0 0
        %2908 = vmatprep.subr.bf16.mxu0 0
        %2909 = vmatpush1.bf16.msra.mxu0 0
        %2910 = vmatprep.subr.bf16.mxu0 0
        %2911 = vmatpush1.bf16.msra.mxu0 0
        %2912 = vmatprep.subr.bf16.mxu0 0
        %2913 = vmatpush1.bf16.msra.mxu0 0
        %2914 = vmatprep.subr.bf16.mxu0 0
        %2915 = vmatpush1.bf16.msra.mxu0 0
        %2916 = vmatprep.subr.bf16.mxu0 0
        %2917 = vmatpush1.bf16.msra.mxu0 0
        %2918 = vmatprep.subr.bf16.mxu0 0
        %2919 = vmatpush1.bf16.msra.mxu0 0
        %2920 = vmatprep.subr.bf16.mxu0 0
        %2921 = vmatpush1.bf16.msra.mxu0 0
        %2922 = vmatprep.subr.bf16.mxu0 0
        %2923 = vmatpush1.bf16.msra.mxu0 0
        %2924 = vmatprep.subr.bf16.mxu0 0
        %2925 = vmatpush1.bf16.msra.mxu0 0
        %2926 = vmatprep.mubr.bf16.mxu0 0
        %2927 = vmatmul.mubr.bf16.gmra.mrb[0].mxu0 %v2892
        %v2928 = vpop.f32.mrb[0].mxu0
        %v2929 = vadd.f32 %v2873, %v2928
        %v2930 = vpop.f32.mrb[0].mxu0
        %v2931 = vpop.f32.mrb[0].mxu0
        %v2932 = vadd.f32 %v2873, %v2931
        %v2933 = vpop.f32.mrb[0].mxu0
        %2934 = vdwg.mxu0
        %v2935 = vld [vmem:[%s5] sm:$0xf]
        %v2936 = vld [vmem:[%s5 + $0x4] sm:$0xf]
        %v2937 = vld [vmem:[%s5 + $0x8] sm:$0xf]
        %v2938 = vld [vmem:[%s5 + $0xc] sm:$0xf]
        %v2939 = vld [vmem:[%s5 + $0x10] sm:$0xf]
        %v2940 = vld [vmem:[%s5 + $0x14] sm:$0xf]
        %v2941 = vld [vmem:[%s5 + $0x18] sm:$0xf]
        %v2942 = vld [vmem:[%s5 + $0x1c] sm:$0xf]
        %v2943 = vld [vmem:[%s5 + $0x20] sm:$0xf]
        %v2944 = vld [vmem:[%s5 + $0x24] sm:$0xf]
        %v2945 = vld [vmem:[%s5 + $0x28] sm:$0xf]
        %v2946 = vld [vmem:[%s5 + $0x2c] sm:$0xf]
        %v2947 = vld [vmem:[%s5 + $0x30] sm:$0xf]
        %v2948 = vld [vmem:[%s5 + $0x34] sm:$0xf]
        %v2949 = vld [vmem:[%s5 + $0x38] sm:$0xf]
        %v2950 = vld [vmem:[%s5 + $0x3c] sm:$0xf]
        %v2951 = vld [vmem:[%s5 + $0x40] sm:$0xf]
        %v2952 = vld [vmem:[%s5 + $0x44] sm:$0xf]
        %v2953 = vld [vmem:[%s5 + $0x48] sm:$0xf]
        %v2954 = vld [vmem:[%s5 + $0x4c] sm:$0xf]
        %v2955 = vld [vmem:[%s5 + $0x50] sm:$0xf]
        %v2956 = vld [vmem:[%s5 + $0x54] sm:$0xf]
        %v2957 = vld [vmem:[%s5 + $0x58] sm:$0xf]
        %v2958 = vld [vmem:[%s5 + $0x5c] sm:$0xf]
        %v2959 = vld [vmem:[%s5 + $0x60] sm:$0xf]
        %v2960 = vld [vmem:[%s5 + $0x64] sm:$0xf]
        %v2961 = vld [vmem:[%s5 + $0x68] sm:$0xf]
        %v2962 = vld [vmem:[%s5 + $0x6c] sm:$0xf]
        %v2963 = vld [vmem:[%s5 + $0x70] sm:$0xf]
        %v2964 = vld [vmem:[%s5 + $0x74] sm:$0xf]
        %v2965 = vld [vmem:[%s5 + $0x78] sm:$0xf]
        %v2966 = vld [vmem:[%s5 + $0x7c] sm:$0xf]
        %v2967 = vpack.c.bf16 %v2932, %v2929
        %v3000 = vunpack.c.l.b16 %v2935
        %v3001 = vunpack.c.l.b16 %v2936
        %v3002 = vunpack.c.l.b16 %v2937
        %v3003 = vunpack.c.l.b16 %v2938
        %v3004 = vunpack.c.l.b16 %v2939
        %v3005 = vunpack.c.l.b16 %v2940
        %v3006 = vunpack.c.l.b16 %v2941
        %v3007 = vunpack.c.l.b16 %v2942
        %v3008 = vunpack.c.l.b16 %v2943
        %v3009 = vunpack.c.l.b16 %v2944
        %v3010 = vunpack.c.l.b16 %v2945
        %v3011 = vunpack.c.l.b16 %v2946
        %v3012 = vunpack.c.l.b16 %v2947
        %v3013 = vunpack.c.l.b16 %v2948
        %v3014 = vunpack.c.l.b16 %v2949
        %v3015 = vunpack.c.l.b16 %v2950
        %v3016 = vunpack.c.l.b16 %v2951
        %v3017 = vunpack.c.l.b16 %v2952
        %v3018 = vunpack.c.l.b16 %v2953
        %v3019 = vunpack.c.l.b16 %v2954
        %v3020 = vunpack.c.l.b16 %v2955
        %v3021 = vunpack.c.l.b16 %v2956
        %v3022 = vunpack.c.l.b16 %v2957
        %v3023 = vunpack.c.l.b16 %v2958
        %v3024 = vunpack.c.l.b16 %v2959
        %v3025 = vunpack.c.l.b16 %v2960
        %v3026 = vunpack.c.l.b16 %v2961
        %v3027 = vunpack.c.l.b16 %v2962
        %v3028 = vunpack.c.l.b16 %v2963
        %v3029 = vunpack.c.l.b16 %v2964
        %v3030 = vunpack.c.l.b16 %v2965
        %v3031 = vunpack.c.l.b16 %v2966
        %v3032 = vpack.c.b16 %v3001, %v3000
        %v3033 = vpack.c.b16 %v3003, %v3002
        %v3034 = vpack.c.b16 %v3005, %v3004
        %v3035 = vpack.c.b16 %v3007, %v3006
        %v3036 = vpack.c.b16 %v3009, %v3008
        %v3037 = vpack.c.b16 %v3011, %v3010
        %v3038 = vpack.c.b16 %v3013, %v3012
        %v3039 = vpack.c.b16 %v3015, %v3014
        %v3040 = vpack.c.b16 %v3017, %v3016
        %v3041 = vpack.c.b16 %v3019, %v3018
        %v3042 = vpack.c.b16 %v3021, %v3020
        %v3043 = vpack.c.b16 %v3023, %v3022
        %v3044 = vpack.c.b16 %v3025, %v3024
        %v3045 = vpack.c.b16 %v3027, %v3026
        %v3046 = vpack.c.b16 %v3029, %v3028
        %v3047 = vpack.c.b16 %v3031, %v3030
        %vm3048 = vcmask 130048
        %v3050 = vsel %vm3048, %v3032, 0
        %v3053 = vsel %vm3048, %v3033, 0
        %v3056 = vsel %vm3048, %v3034, 0
        %v3059 = vsel %vm3048, %v3035, 0
        %v3062 = vsel %vm3048, %v3036, 0
        %v3065 = vsel %vm3048, %v3037, 0
        %v3068 = vsel %vm3048, %v3038, 0
        %v3071 = vsel %vm3048, %v3039, 0
        %v3074 = vsel %vm3048, %v3040, 0
        %v3077 = vsel %vm3048, %v3041, 0
        %v3080 = vsel %vm3048, %v3042, 0
        %v3083 = vsel %vm3048, %v3043, 0
        %v3086 = vsel %vm3048, %v3044, 0
        %v3089 = vsel %vm3048, %v3045, 0
        %v3092 = vsel %vm3048, %v3046, 0
        %v3095 = vsel %vm3048, %v3047, 0
        %3097 = vmatprep.subr.bf16.mxu0 0
        %3098 = vmatpush1.bf16.msra.mxu0 %v2967
        %3099 = vmatprep.subr.bf16.mxu0 0
        %3100 = vmatpush1.bf16.msra.mxu0 0
        %3101 = vmatprep.subr.bf16.mxu0 0
        %3102 = vmatpush1.bf16.msra.mxu0 0
        %3103 = vmatprep.subr.bf16.mxu0 0
        %3104 = vmatpush1.bf16.msra.mxu0 0
        %3105 = vmatprep.subr.bf16.mxu0 0
        %3106 = vmatpush1.bf16.msra.mxu0 0
        %3107 = vmatprep.subr.bf16.mxu0 0
        %3108 = vmatpush1.bf16.msra.mxu0 0
        %3109 = vmatprep.subr.bf16.mxu0 0
        %3110 = vmatpush1.bf16.msra.mxu0 0
        %3111 = vmatprep.subr.bf16.mxu0 0
        %3112 = vmatpush1.bf16.msra.mxu0 0
        %3113 = vmatprep.subr.bf16.mxu0 0
        %3114 = vmatpush1.bf16.msra.mxu0 0
        %3115 = vmatprep.subr.bf16.mxu0 0
        %3116 = vmatpush1.bf16.msra.mxu0 0
        %3117 = vmatprep.subr.bf16.mxu0 0
        %3118 = vmatpush1.bf16.msra.mxu0 0
        %3119 = vmatprep.subr.bf16.mxu0 0
        %3120 = vmatpush1.bf16.msra.mxu0 0
        %3121 = vmatprep.subr.bf16.mxu0 0
        %3122 = vmatpush1.bf16.msra.mxu0 0
        %3123 = vmatprep.subr.bf16.mxu0 0
        %3124 = vmatpush1.bf16.msra.mxu0 0
        %3125 = vmatprep.subr.bf16.mxu0 0
        %3126 = vmatpush1.bf16.msra.mxu0 0
        %3127 = vmatprep.subr.bf16.mxu0 0
        %3128 = vmatpush1.bf16.msra.mxu0 0
        %3129 = vmatprep.mubr.bf16.mxu0 0
        %3130 = vmatmul.mubr.bf16.gmra.mrb[0].mxu0 %v3050
        %v3131 = vpop.f32.mrb[0].mxu0
        %v3132 = vadd.f32 0.0, %v3131
        %v3133 = vpop.f32.mrb[0].mxu0
        %v3134 = vpop.f32.mrb[0].mxu0
        %v3135 = vadd.f32 0.0, %v3134
        %v3136 = vpop.f32.mrb[0].mxu0
        %3137 = vmatprep.mubr.bf16.mxu0 0
        %3138 = vmatmul.mubr.bf16.gmra.mrb[0].mxu0 %v3053
        %v3139 = vpop.f32.mrb[0].mxu0
        %v3140 = vadd.f32 0.0, %v3139
        %v3141 = vpop.f32.mrb[0].mxu0
        %v3142 = vpop.f32.mrb[0].mxu0
        %v3143 = vadd.f32 0.0, %v3142
        %v3144 = vpop.f32.mrb[0].mxu0
        %3145 = vmatprep.mubr.bf16.mxu0 0
        %3146 = vmatmul.mubr.bf16.gmra.mrb[0].mxu0 %v3056
        %v3147 = vpop.f32.mrb[0].mxu0
        %v3148 = vadd.f32 0.0, %v3147
        %v3149 = vpop.f32.mrb[0].mxu0
        %v3150 = vpop.f32.mrb[0].mxu0
        %v3151 = vadd.f32 0.0, %v3150
        %v3152 = vpop.f32.mrb[0].mxu0
        %3153 = vmatprep.mubr.bf16.mxu0 0
        %3154 = vmatmul.mubr.bf16.gmra.mrb[0].mxu0 %v3059
        %v3155 = vpop.f32.mrb[0].mxu0
        %v3156 = vadd.f32 0.0, %v3155
        %v3157 = vpop.f32.mrb[0].mxu0
        %v3158 = vpop.f32.mrb[0].mxu0
        %v3159 = vadd.f32 0.0, %v3158
        %v3160 = vpop.f32.mrb[0].mxu0
        %3161 = vmatprep.mubr.bf16.mxu0 0
        %3162 = vmatmul.mubr.bf16.gmra.mrb[0].mxu0 %v3062
        %v3163 = vpop.f32.mrb[0].mxu0
        %v3164 = vadd.f32 0.0, %v3163
        %v3165 = vpop.f32.mrb[0].mxu0
        %v3166 = vpop.f32.mrb[0].mxu0
        %v3167 = vadd.f32 0.0, %v3166
        %v3168 = vpop.f32.mrb[0].mxu0
        %3169 = vmatprep.mubr.bf16.mxu0 0
        %3170 = vmatmul.mubr.bf16.gmra.mrb[0].mxu0 %v3065
        %v3171 = vpop.f32.mrb[0].mxu0
        %v3172 = vadd.f32 0.0, %v3171
        %v3173 = vpop.f32.mrb[0].mxu0
        %v3174 = vpop.f32.mrb[0].mxu0
        %v3175 = vadd.f32 0.0, %v3174
        %v3176 = vpop.f32.mrb[0].mxu0
        %3177 = vmatprep.mubr.bf16.mxu0 0
        %3178 = vmatmul.mubr.bf16.gmra.mrb[0].mxu0 %v3068
        %v3179 = vpop.f32.mrb[0].mxu0
        %v3180 = vadd.f32 0.0, %v3179
        %v3181 = vpop.f32.mrb[0].mxu0
        %v3182 = vpop.f32.mrb[0].mxu0
        %v3183 = vadd.f32 0.0, %v3182
        %v3184 = vpop.f32.mrb[0].mxu0
        %3185 = vmatprep.mubr.bf16.mxu0 0
        %3186 = vmatmul.mubr.bf16.gmra.mrb[0].mxu0 %v3071
        %v3187 = vpop.f32.mrb[0].mxu0
        %v3188 = vadd.f32 0.0, %v3187
        %v3189 = vpop.f32.mrb[0].mxu0
        %v3190 = vpop.f32.mrb[0].mxu0
        %v3191 = vadd.f32 0.0, %v3190
        %v3192 = vpop.f32.mrb[0].mxu0
        %3193 = vmatprep.mubr.bf16.mxu0 0
        %3194 = vmatmul.mubr.bf16.gmra.mrb[0].mxu0 %v3074
        %v3195 = vpop.f32.mrb[0].mxu0
        %v3196 = vadd.f32 0.0, %v3195
        %v3197 = vpop.f32.mrb[0].mxu0
        %v3198 = vpop.f32.mrb[0].mxu0
        %v3199 = vadd.f32 0.0, %v3198
        %v3200 = vpop.f32.mrb[0].mxu0
        %3201 = vmatprep.mubr.bf16.mxu0 0
        %3202 = vmatmul.mubr.bf16.gmra.mrb[0].mxu0 %v3077
        %v3203 = vpop.f32.mrb[0].mxu0
        %v3204 = vadd.f32 0.0, %v3203
        %v3205 = vpop.f32.mrb[0].mxu0
        %v3206 = vpop.f32.mrb[0].mxu0
        %v3207 = vadd.f32 0.0, %v3206
        %v3208 = vpop.f32.mrb[0].mxu0
        %3209 = vmatprep.mubr.bf16.mxu0 0
        %3210 = vmatmul.mubr.bf16.gmra.mrb[0].mxu0 %v3080
        %v3211 = vpop.f32.mrb[0].mxu0
        %v3212 = vadd.f32 0.0, %v3211
        %v3213 = vpop.f32.mrb[0].mxu0
        %v3214 = vpop.f32.mrb[0].mxu0
        %v3215 = vadd.f32 0.0, %v3214
        %v3216 = vpop.f32.mrb[0].mxu0
        %3217 = vmatprep.mubr.bf16.mxu0 0
        %3218 = vmatmul.mubr.bf16.gmra.mrb[0].mxu0 %v3083
        %v3219 = vpop.f32.mrb[0].mxu0
        %v3220 = vadd.f32 0.0, %v3219
        %v3221 = vpop.f32.mrb[0].mxu0
        %v3222 = vpop.f32.mrb[0].mxu0
        %v3223 = vadd.f32 0.0, %v3222
        %v3224 = vpop.f32.mrb[0].mxu0
        %3225 = vmatprep.mubr.bf16.mxu0 0
        %3226 = vmatmul.mubr.bf16.gmra.mrb[0].mxu0 %v3086
        %v3227 = vpop.f32.mrb[0].mxu0
        %v3228 = vadd.f32 0.0, %v3227
        %v3229 = vpop.f32.mrb[0].mxu0
        %v3230 = vpop.f32.mrb[0].mxu0
        %v3231 = vadd.f32 0.0, %v3230
        %v3232 = vpop.f32.mrb[0].mxu0
        %3233 = vmatprep.mubr.bf16.mxu0 0
        %3234 = vmatmul.mubr.bf16.gmra.mrb[0].mxu0 %v3089
        %v3235 = vpop.f32.mrb[0].mxu0
        %v3236 = vadd.f32 0.0, %v3235
        %v3237 = vpop.f32.mrb[0].mxu0
        %v3238 = vpop.f32.mrb[0].mxu0
        %v3239 = vadd.f32 0.0, %v3238
        %v3240 = vpop.f32.mrb[0].mxu0
        %3241 = vmatprep.mubr.bf16.mxu0 0
        %3242 = vmatmul.mubr.bf16.gmra.mrb[0].mxu0 %v3092
        %v3243 = vpop.f32.mrb[0].mxu0
        %v3244 = vadd.f32 0.0, %v3243
        %v3245 = vpop.f32.mrb[0].mxu0
        %v3246 = vpop.f32.mrb[0].mxu0
        %v3247 = vadd.f32 0.0, %v3246
        %v3248 = vpop.f32.mrb[0].mxu0
        %3249 = vmatprep.mubr.bf16.mxu0 0
        %3250 = vmatmul.mubr.bf16.gmra.mrb[0].mxu0 %v3095
        %v3251 = vpop.f32.mrb[0].mxu0
        %v3252 = vadd.f32 0.0, %v3251
        %v3253 = vpop.f32.mrb[0].mxu0
        %v3254 = vpop.f32.mrb[0].mxu0
        %v3255 = vadd.f32 0.0, %v3254
        %v3256 = vpop.f32.mrb[0].mxu0
        %3257 = vdwg.mxu0
        %v3258 = vsel %vm1051, %v3132, 0.0
        %3259 = vadd.xlane.f32.xlu0 %v3258
        %v3260 = vpop.xlane.xlu0 %3259
        %v3261 = vsel %vm1051, %v3135, 0.0
        %3262 = vadd.xlane.f32.xlu0 %v3261
        %v3263 = vpop.xlane.xlu0 %3262
        %v3264 = vsel %vm1051, %v3140, 0.0
        %3265 = vadd.xlane.f32.xlu0 %v3264
        %v3266 = vpop.xlane.xlu0 %3265
        %v3267 = vsel %vm1051, %v3143, 0.0
        %3268 = vadd.xlane.f32.xlu0 %v3267
        %v3269 = vpop.xlane.xlu0 %3268
        %v3270 = vsel %vm1051, %v3148, 0.0
        %3271 = vadd.xlane.f32.xlu0 %v3270
        %v3272 = vpop.xlane.xlu0 %3271
        %v3273 = vsel %vm1051, %v3151, 0.0
        %3274 = vadd.xlane.f32.xlu0 %v3273
        %v3275 = vpop.xlane.xlu0 %3274
        %v3276 = vsel %vm1051, %v3156, 0.0
        %3277 = vadd.xlane.f32.xlu0 %v3276
        %v3278 = vpop.xlane.xlu0 %3277
        %v3279 = vsel %vm1051, %v3159, 0.0
        %3280 = vadd.xlane.f32.xlu0 %v3279
        %v3281 = vpop.xlane.xlu0 %3280
        %v3282 = vsel %vm1051, %v3164, 0.0
        %3283 = vadd.xlane.f32.xlu0 %v3282
        %v3284 = vpop.xlane.xlu0 %3283
        %v3285 = vsel %vm1051, %v3167, 0.0
        %3286 = vadd.xlane.f32.xlu0 %v3285
        %v3287 = vpop.xlane.xlu0 %3286
        %v3288 = vsel %vm1051, %v3172, 0.0
        %3289 = vadd.xlane.f32.xlu0 %v3288
        %v3290 = vpop.xlane.xlu0 %3289
        %v3291 = vsel %vm1051, %v3175, 0.0
        %3292 = vadd.xlane.f32.xlu0 %v3291
        %v3293 = vpop.xlane.xlu0 %3292
        %v3294 = vsel %vm1051, %v3180, 0.0
        %3295 = vadd.xlane.f32.xlu0 %v3294
        %v3296 = vpop.xlane.xlu0 %3295
        %v3297 = vsel %vm1051, %v3183, 0.0
        %3298 = vadd.xlane.f32.xlu0 %v3297
        %v3299 = vpop.xlane.xlu0 %3298
        %v3300 = vsel %vm1051, %v3188, 0.0
        %3301 = vadd.xlane.f32.xlu0 %v3300
        %v3302 = vpop.xlane.xlu0 %3301
        %v3303 = vsel %vm1051, %v3191, 0.0
        %3304 = vadd.xlane.f32.xlu0 %v3303
        %v3305 = vpop.xlane.xlu0 %3304
        %v3306 = vsel %vm1051, %v3196, 0.0
        %3307 = vadd.xlane.f32.xlu0 %v3306
        %v3308 = vpop.xlane.xlu0 %3307
        %v3309 = vsel %vm1051, %v3199, 0.0
        %3310 = vadd.xlane.f32.xlu0 %v3309
        %v3311 = vpop.xlane.xlu0 %3310
        %v3312 = vsel %vm1051, %v3204, 0.0
        %3313 = vadd.xlane.f32.xlu0 %v3312
        %v3314 = vpop.xlane.xlu0 %3313
        %v3315 = vsel %vm1051, %v3207, 0.0
        %3316 = vadd.xlane.f32.xlu0 %v3315
        %v3317 = vpop.xlane.xlu0 %3316
        %v3318 = vsel %vm1051, %v3212, 0.0
        %3319 = vadd.xlane.f32.xlu0 %v3318
        %v3320 = vpop.xlane.xlu0 %3319
        %v3321 = vsel %vm1051, %v3215, 0.0
        %3322 = vadd.xlane.f32.xlu0 %v3321
        %v3323 = vpop.xlane.xlu0 %3322
        %v3324 = vsel %vm1051, %v3220, 0.0
        %3325 = vadd.xlane.f32.xlu0 %v3324
        %v3326 = vpop.xlane.xlu0 %3325
        %v3327 = vsel %vm1051, %v3223, 0.0
        %3328 = vadd.xlane.f32.xlu0 %v3327
        %v3329 = vpop.xlane.xlu0 %3328
        %v3330 = vsel %vm1051, %v3228, 0.0
        %3331 = vadd.xlane.f32.xlu0 %v3330
        %v3332 = vpop.xlane.xlu0 %3331
        %v3333 = vsel %vm1051, %v3231, 0.0
        %3334 = vadd.xlane.f32.xlu0 %v3333
        %v3335 = vpop.xlane.xlu0 %3334
        %v3336 = vsel %vm1051, %v3236, 0.0
        %3337 = vadd.xlane.f32.xlu0 %v3336
        %v3338 = vpop.xlane.xlu0 %3337
        %v3339 = vsel %vm1051, %v3239, 0.0
        %3340 = vadd.xlane.f32.xlu0 %v3339
        %v3341 = vpop.xlane.xlu0 %3340
        %v3342 = vsel %vm1051, %v3244, 0.0
        %3343 = vadd.xlane.f32.xlu0 %v3342
        %v3344 = vpop.xlane.xlu0 %3343
        %v3345 = vsel %vm1051, %v3247, 0.0
        %3346 = vadd.xlane.f32.xlu0 %v3345
        %v3347 = vpop.xlane.xlu0 %3346
        %v3348 = vsel %vm1051, %v3252, 0.0
        %3349 = vadd.xlane.f32.xlu0 %v3348
        %v3350 = vpop.xlane.xlu0 %3349
        %v3351 = vsel %vm1051, %v3255, 0.0
        %3352 = vadd.xlane.f32.xlu0 %v3351
        %v3353 = vpop.xlane.xlu0 %3352
        %v3354 = vmul.f32 %v3260, %v1148
        %v3355 = vmul.f32 %v3263, %v1148
        %v3356 = vmul.f32 %v3266, %v1148
        %v3357 = vmul.f32 %v3269, %v1148
        %v3358 = vmul.f32 %v3272, %v1148
        %v3359 = vmul.f32 %v3275, %v1148
        %v3360 = vmul.f32 %v3278, %v1148
        %v3361 = vmul.f32 %v3281, %v1148
        %v3362 = vmul.f32 %v3284, %v1148
        %v3363 = vmul.f32 %v3287, %v1148
        %v3364 = vmul.f32 %v3290, %v1148
        %v3365 = vmul.f32 %v3293, %v1148
        %v3366 = vmul.f32 %v3296, %v1148
        %v3367 = vmul.f32 %v3299, %v1148
        %v3368 = vmul.f32 %v3302, %v1148
        %v3369 = vmul.f32 %v3305, %v1148
        %v3370 = vmul.f32 %v3308, %v1148
        %v3371 = vmul.f32 %v3311, %v1148
        %v3372 = vmul.f32 %v3314, %v1148
        %v3373 = vmul.f32 %v3317, %v1148
        %v3374 = vmul.f32 %v3320, %v1148
        %v3375 = vmul.f32 %v3323, %v1148
        %v3376 = vmul.f32 %v3326, %v1148
        %v3377 = vmul.f32 %v3329, %v1148
        %v3378 = vmul.f32 %v3332, %v1148
        %v3379 = vmul.f32 %v3335, %v1148
        %v3380 = vmul.f32 %v3338, %v1148
        %v3381 = vmul.f32 %v3341, %v1148
        %v3382 = vmul.f32 %v3344, %v1148
        %v3383 = vmul.f32 %v3347, %v1148
        %v3384 = vmul.f32 %v3350, %v1148
        %v3385 = vmul.f32 %v3353, %v1148
        %v3386 = vsub.f32 %v3132, %v3354
        %v3387 = vsub.f32 %v3135, %v3355
        %v3388 = vsub.f32 %v3140, %v3356
        %v3389 = vsub.f32 %v3143, %v3357
        %v3390 = vsub.f32 %v3148, %v3358
        %v3391 = vsub.f32 %v3151, %v3359
        %v3392 = vsub.f32 %v3156, %v3360
        %v3393 = vsub.f32 %v3159, %v3361
        %v3394 = vsub.f32 %v3164, %v3362
        %v3395 = vsub.f32 %v3167, %v3363
        %v3396 = vsub.f32 %v3172, %v3364
        %v3397 = vsub.f32 %v3175, %v3365
        %v3398 = vsub.f32 %v3180, %v3366
        %v3399 = vsub.f32 %v3183, %v3367
        %v3400 = vsub.f32 %v3188, %v3368
        %v3401 = vsub.f32 %v3191, %v3369
        %v3402 = vsub.f32 %v3196, %v3370
        %v3403 = vsub.f32 %v3199, %v3371
        %v3404 = vsub.f32 %v3204, %v3372
        %v3405 = vsub.f32 %v3207, %v3373
        %v3406 = vsub.f32 %v3212, %v3374
        %v3407 = vsub.f32 %v3215, %v3375
        %v3408 = vsub.f32 %v3220, %v3376
        %v3409 = vsub.f32 %v3223, %v3377
        %v3410 = vsub.f32 %v3228, %v3378
        %v3411 = vsub.f32 %v3231, %v3379
        %v3412 = vsub.f32 %v3236, %v3380
        %v3413 = vsub.f32 %v3239, %v3381
        %v3414 = vsub.f32 %v3244, %v3382
        %v3415 = vsub.f32 %v3247, %v3383
        %v3416 = vsub.f32 %v3252, %v3384
        %v3417 = vsub.f32 %v3255, %v3385
        %v3418 = vmul.f32 %v3386, %v3386
        %v3419 = vmul.f32 %v3387, %v3387
        %v3420 = vmul.f32 %v3388, %v3388
        %v3421 = vmul.f32 %v3389, %v3389
        %v3422 = vmul.f32 %v3390, %v3390
        %v3423 = vmul.f32 %v3391, %v3391
        %v3424 = vmul.f32 %v3392, %v3392
        %v3425 = vmul.f32 %v3393, %v3393
        %v3426 = vmul.f32 %v3394, %v3394
        %v3427 = vmul.f32 %v3395, %v3395
        %v3428 = vmul.f32 %v3396, %v3396
        %v3429 = vmul.f32 %v3397, %v3397
        %v3430 = vmul.f32 %v3398, %v3398
        %v3431 = vmul.f32 %v3399, %v3399
        %v3432 = vmul.f32 %v3400, %v3400
        %v3433 = vmul.f32 %v3401, %v3401
        %v3434 = vmul.f32 %v3402, %v3402
        %v3435 = vmul.f32 %v3403, %v3403
        %v3436 = vmul.f32 %v3404, %v3404
        %v3437 = vmul.f32 %v3405, %v3405
        %v3438 = vmul.f32 %v3406, %v3406
        %v3439 = vmul.f32 %v3407, %v3407
        %v3440 = vmul.f32 %v3408, %v3408
        %v3441 = vmul.f32 %v3409, %v3409
        %v3442 = vmul.f32 %v3410, %v3410
        %v3443 = vmul.f32 %v3411, %v3411
        %v3444 = vmul.f32 %v3412, %v3412
        %v3445 = vmul.f32 %v3413, %v3413
        %v3446 = vmul.f32 %v3414, %v3414
        %v3447 = vmul.f32 %v3415, %v3415
        %v3448 = vmul.f32 %v3416, %v3416
        %v3449 = vmul.f32 %v3417, %v3417
        %v3450 = vsel %vm1051, %v3418, 0.0
        %3451 = vadd.xlane.f32.xlu0 %v3450
        %v3452 = vpop.xlane.xlu0 %3451
        %v3453 = vsel %vm1051, %v3419, 0.0
        %3454 = vadd.xlane.f32.xlu0 %v3453
        %v3455 = vpop.xlane.xlu0 %3454
        %v3456 = vsel %vm1051, %v3420, 0.0
        %3457 = vadd.xlane.f32.xlu0 %v3456
        %v3458 = vpop.xlane.xlu0 %3457
        %v3459 = vsel %vm1051, %v3421, 0.0
        %3460 = vadd.xlane.f32.xlu0 %v3459
        %v3461 = vpop.xlane.xlu0 %3460
        %v3462 = vsel %vm1051, %v3422, 0.0
        %3463 = vadd.xlane.f32.xlu0 %v3462
        %v3464 = vpop.xlane.xlu0 %3463
        %v3465 = vsel %vm1051, %v3423, 0.0
        %3466 = vadd.xlane.f32.xlu0 %v3465
        %v3467 = vpop.xlane.xlu0 %3466
        %v3468 = vsel %vm1051, %v3424, 0.0
        %3469 = vadd.xlane.f32.xlu0 %v3468
        %v3470 = vpop.xlane.xlu0 %3469
        %v3471 = vsel %vm1051, %v3425, 0.0
        %3472 = vadd.xlane.f32.xlu0 %v3471
        %v3473 = vpop.xlane.xlu0 %3472
        %v3474 = vsel %vm1051, %v3426, 0.0
        %3475 = vadd.xlane.f32.xlu0 %v3474
        %v3476 = vpop.xlane.xlu0 %3475
        %v3477 = vsel %vm1051, %v3427, 0.0
        %3478 = vadd.xlane.f32.xlu0 %v3477
        %v3479 = vpop.xlane.xlu0 %3478
        %v3480 = vsel %vm1051, %v3428, 0.0
        %3481 = vadd.xlane.f32.xlu0 %v3480
        %v3482 = vpop.xlane.xlu0 %3481
        %v3483 = vsel %vm1051, %v3429, 0.0
        %3484 = vadd.xlane.f32.xlu0 %v3483
        %v3485 = vpop.xlane.xlu0 %3484
        %v3486 = vsel %vm1051, %v3430, 0.0
        %3487 = vadd.xlane.f32.xlu0 %v3486
        %v3488 = vpop.xlane.xlu0 %3487
        %v3489 = vsel %vm1051, %v3431, 0.0
        %3490 = vadd.xlane.f32.xlu0 %v3489
        %v3491 = vpop.xlane.xlu0 %3490
        %v3492 = vsel %vm1051, %v3432, 0.0
        %3493 = vadd.xlane.f32.xlu0 %v3492
        %v3494 = vpop.xlane.xlu0 %3493
        %v3495 = vsel %vm1051, %v3433, 0.0
        %3496 = vadd.xlane.f32.xlu0 %v3495
        %v3497 = vpop.xlane.xlu0 %3496
        %v3498 = vsel %vm1051, %v3434, 0.0
        %3499 = vadd.xlane.f32.xlu0 %v3498
        %v3500 = vpop.xlane.xlu0 %3499
        %v3501 = vsel %vm1051, %v3435, 0.0
        %3502 = vadd.xlane.f32.xlu0 %v3501
        %v3503 = vpop.xlane.xlu0 %3502
        %v3504 = vsel %vm1051, %v3436, 0.0
        %3505 = vadd.xlane.f32.xlu0 %v3504
        %v3506 = vpop.xlane.xlu0 %3505
        %v3507 = vsel %vm1051, %v3437, 0.0
        %3508 = vadd.xlane.f32.xlu0 %v3507
        %v3509 = vpop.xlane.xlu0 %3508
        %v3510 = vsel %vm1051, %v3438, 0.0
        %3511 = vadd.xlane.f32.xlu0 %v3510
        %v3512 = vpop.xlane.xlu0 %3511
        %v3513 = vsel %vm1051, %v3439, 0.0
        %3514 = vadd.xlane.f32.xlu0 %v3513
        %v3515 = vpop.xlane.xlu0 %3514
        %v3516 = vsel %vm1051, %v3440, 0.0
        %3517 = vadd.xlane.f32.xlu0 %v3516
        %v3518 = vpop.xlane.xlu0 %3517
        %v3519 = vsel %vm1051, %v3441, 0.0
        %3520 = vadd.xlane.f32.xlu0 %v3519
        %v3521 = vpop.xlane.xlu0 %3520
        %v3522 = vsel %vm1051, %v3442, 0.0
        %3523 = vadd.xlane.f32.xlu0 %v3522
        %v3524 = vpop.xlane.xlu0 %3523
        %v3525 = vsel %vm1051, %v3443, 0.0
        %3526 = vadd.xlane.f32.xlu0 %v3525
        %v3527 = vpop.xlane.xlu0 %3526
        %v3528 = vsel %vm1051, %v3444, 0.0
        %3529 = vadd.xlane.f32.xlu0 %v3528
        %v3530 = vpop.xlane.xlu0 %3529
        %v3531 = vsel %vm1051, %v3445, 0.0
        %3532 = vadd.xlane.f32.xlu0 %v3531
        %v3533 = vpop.xlane.xlu0 %3532
        %v3534 = vsel %vm1051, %v3446, 0.0
        %3535 = vadd.xlane.f32.xlu0 %v3534
        %v3536 = vpop.xlane.xlu0 %3535
        %v3537 = vsel %vm1051, %v3447, 0.0
        %3538 = vadd.xlane.f32.xlu0 %v3537
        %v3539 = vpop.xlane.xlu0 %3538
        %v3540 = vsel %vm1051, %v3448, 0.0
        %3541 = vadd.xlane.f32.xlu0 %v3540
        %v3542 = vpop.xlane.xlu0 %3541
        %v3543 = vsel %vm1051, %v3449, 0.0
        %3544 = vadd.xlane.f32.xlu0 %v3543
        %v3545 = vpop.xlane.xlu0 %3544
        %v3546 = vmul.f32 %v3452, %v1148
        %v3547 = vmul.f32 %v3455, %v1148
        %v3548 = vmul.f32 %v3458, %v1148
        %v3549 = vmul.f32 %v3461, %v1148
        %v3550 = vmul.f32 %v3464, %v1148
        %v3551 = vmul.f32 %v3467, %v1148
        %v3552 = vmul.f32 %v3470, %v1148
        %v3553 = vmul.f32 %v3473, %v1148
        %v3554 = vmul.f32 %v3476, %v1148
        %v3555 = vmul.f32 %v3479, %v1148
        %v3556 = vmul.f32 %v3482, %v1148
        %v3557 = vmul.f32 %v3485, %v1148
        %v3558 = vmul.f32 %v3488, %v1148
        %v3559 = vmul.f32 %v3491, %v1148
        %v3560 = vmul.f32 %v3494, %v1148
        %v3561 = vmul.f32 %v3497, %v1148
        %v3562 = vmul.f32 %v3500, %v1148
        %v3563 = vmul.f32 %v3503, %v1148
        %v3564 = vmul.f32 %v3506, %v1148
        %v3565 = vmul.f32 %v3509, %v1148
        %v3566 = vmul.f32 %v3512, %v1148
        %v3567 = vmul.f32 %v3515, %v1148
        %v3568 = vmul.f32 %v3518, %v1148
        %v3569 = vmul.f32 %v3521, %v1148
        %v3570 = vmul.f32 %v3524, %v1148
        %v3571 = vmul.f32 %v3527, %v1148
        %v3572 = vmul.f32 %v3530, %v1148
        %v3573 = vmul.f32 %v3533, %v1148
        %v3574 = vmul.f32 %v3536, %v1148
        %v3575 = vmul.f32 %v3539, %v1148
        %v3576 = vmul.f32 %v3542, %v1148
        %v3577 = vmul.f32 %v3545, %v1148
        %v3578 = vadd.f32 %v3546, 1e-06
        %v3579 = vadd.f32 %v3547, 1e-06
        %v3580 = vadd.f32 %v3548, 1e-06
        %v3581 = vadd.f32 %v3549, 1e-06
        %v3582 = vadd.f32 %v3550, 1e-06
        %v3583 = vadd.f32 %v3551, 1e-06
        %v3584 = vadd.f32 %v3552, 1e-06
        %v3585 = vadd.f32 %v3553, 1e-06
        %v3586 = vadd.f32 %v3554, 1e-06
        %v3587 = vadd.f32 %v3555, 1e-06
        %v3588 = vadd.f32 %v3556, 1e-06
        %v3589 = vadd.f32 %v3557, 1e-06
        %v3590 = vadd.f32 %v3558, 1e-06
        %v3591 = vadd.f32 %v3559, 1e-06
        %v3592 = vadd.f32 %v3560, 1e-06
        %v3593 = vadd.f32 %v3561, 1e-06
        %v3594 = vadd.f32 %v3562, 1e-06
        %v3595 = vadd.f32 %v3563, 1e-06
        %v3596 = vadd.f32 %v3564, 1e-06
        %v3597 = vadd.f32 %v3565, 1e-06
        %v3598 = vadd.f32 %v3566, 1e-06
        %v3599 = vadd.f32 %v3567, 1e-06
        %v3600 = vadd.f32 %v3568, 1e-06
        %v3601 = vadd.f32 %v3569, 1e-06
        %v3602 = vadd.f32 %v3570, 1e-06
        %v3603 = vadd.f32 %v3571, 1e-06
        %v3604 = vadd.f32 %v3572, 1e-06
        %v3605 = vadd.f32 %v3573, 1e-06
        %v3606 = vadd.f32 %v3574, 1e-06
        %v3607 = vadd.f32 %v3575, 1e-06
        %v3608 = vadd.f32 %v3576, 1e-06
        %v3609 = vadd.f32 %v3577, 1e-06
        %v3610 = vrsqrt.pop %v3578
        %v3611 = vrsqrt.pop %v3579
        %v3612 = vrsqrt.pop %v3580
        %v3613 = vrsqrt.pop %v3581
        %v3614 = vrsqrt.pop %v3582
        %v3615 = vrsqrt.pop %v3583
        %v3616 = vrsqrt.pop %v3584
        %v3617 = vrsqrt.pop %v3585
        %v3618 = vrsqrt.pop %v3586
        %v3619 = vrsqrt.pop %v3587
        %v3620 = vrsqrt.pop %v3588
        %v3621 = vrsqrt.pop %v3589
        %v3622 = vrsqrt.pop %v3590
        %v3623 = vrsqrt.pop %v3591
        %v3624 = vrsqrt.pop %v3592
        %v3625 = vrsqrt.pop %v3593
        %v3626 = vrsqrt.pop %v3594
        %v3627 = vrsqrt.pop %v3595
        %v3628 = vrsqrt.pop %v3596
        %v3629 = vrsqrt.pop %v3597
        %v3630 = vrsqrt.pop %v3598
        %v3631 = vrsqrt.pop %v3599
        %v3632 = vrsqrt.pop %v3600
        %v3633 = vrsqrt.pop %v3601
        %v3634 = vrsqrt.pop %v3602
        %v3635 = vrsqrt.pop %v3603
        %v3636 = vrsqrt.pop %v3604
        %v3637 = vrsqrt.pop %v3605
        %v3638 = vrsqrt.pop %v3606
        %v3639 = vrsqrt.pop %v3607
        %v3640 = vrsqrt.pop %v3608
        %v3641 = vrsqrt.pop %v3609
        %v3642 = vmul.f32 %v3386, %v3610
        %v3643 = vmul.f32 %v3387, %v3611
        %v3644 = vmul.f32 %v3388, %v3612
        %v3645 = vmul.f32 %v3389, %v3613
        %v3646 = vmul.f32 %v3390, %v3614
        %v3647 = vmul.f32 %v3391, %v3615
        %v3648 = vmul.f32 %v3392, %v3616
        %v3649 = vmul.f32 %v3393, %v3617
        %v3650 = vmul.f32 %v3394, %v3618
        %v3651 = vmul.f32 %v3395, %v3619
        %v3652 = vmul.f32 %v3396, %v3620
        %v3653 = vmul.f32 %v3397, %v3621
        %v3654 = vmul.f32 %v3398, %v3622
        %v3655 = vmul.f32 %v3399, %v3623
        %v3656 = vmul.f32 %v3400, %v3624
        %v3657 = vmul.f32 %v3401, %v3625
        %v3658 = vmul.f32 %v3402, %v3626
        %v3659 = vmul.f32 %v3403, %v3627
        %v3660 = vmul.f32 %v3404, %v3628
        %v3661 = vmul.f32 %v3405, %v3629
        %v3662 = vmul.f32 %v3406, %v3630
        %v3663 = vmul.f32 %v3407, %v3631
        %v3664 = vmul.f32 %v3408, %v3632
        %v3665 = vmul.f32 %v3409, %v3633
        %v3666 = vmul.f32 %v3410, %v3634
        %v3667 = vmul.f32 %v3411, %v3635
        %v3668 = vmul.f32 %v3412, %v3636
        %v3669 = vmul.f32 %v3413, %v3637
        %v3670 = vmul.f32 %v3414, %v3638
        %v3671 = vmul.f32 %v3415, %v3639
        %v3672 = vmul.f32 %v3416, %v3640
        %v3673 = vmul.f32 %v3417, %v3641
        %v3674 = vpack.c.bf16 %v3643, %v3642
        %v3675 = vpack.c.bf16 %v3645, %v3644
        %v3676 = vpack.c.bf16 %v3647, %v3646
        %v3677 = vpack.c.bf16 %v3649, %v3648
        %v3678 = vpack.c.bf16 %v3651, %v3650
        %v3679 = vpack.c.bf16 %v3653, %v3652
        %v3680 = vpack.c.bf16 %v3655, %v3654
        %v3681 = vpack.c.bf16 %v3657, %v3656
        %v3682 = vpack.c.bf16 %v3659, %v3658
        %v3683 = vpack.c.bf16 %v3661, %v3660
        %v3684 = vpack.c.bf16 %v3663, %v3662
        %v3685 = vpack.c.bf16 %v3665, %v3664
        %v3686 = vpack.c.bf16 %v3667, %v3666
        %v3687 = vpack.c.bf16 %v3669, %v3668
        %v3688 = vpack.c.bf16 %v3671, %v3670
        %v3689 = vpack.c.bf16 %v3673, %v3672
        %s3690 = scalar_lea.vmem %s10, 8
        %v3691 = vld [vmem:[%s3690] sm:$0xf]
        %v3693 = vsel %vm1051, %v3674, 0
        %v3696 = vsel %vm1051, %v3675, 0
        %v3699 = vsel %vm1051, %v3676, 0
        %v3702 = vsel %vm1051, %v3677, 0
        %v3705 = vsel %vm1051, %v3678, 0
        %v3708 = vsel %vm1051, %v3679, 0
        %v3711 = vsel %vm1051, %v3680, 0
        %v3714 = vsel %vm1051, %v3681, 0
        %v3717 = vsel %vm1051, %v3682, 0
        %v3720 = vsel %vm1051, %v3683, 0
        %v3723 = vsel %vm1051, %v3684, 0
        %v3726 = vsel %vm1051, %v3685, 0
        %v3729 = vsel %vm1051, %v3686, 0
        %v3732 = vsel %vm1051, %v3687, 0
        %v3735 = vsel %vm1051, %v3688, 0
        %v3738 = vsel %vm1051, %v3689, 0
        %v3741 = vsel %vm1534, %v3691, 0
        %3743 = vmatprep.subr.bf16.mxu0 0
        %3744 = vmatpush1.bf16.msra.mxu0 %v3741
        %3745 = vmatprep.subr.bf16.mxu0 0
        %3746 = vmatpush1.bf16.msra.mxu0 0
        %3747 = vmatprep.subr.bf16.mxu0 0
        %3748 = vmatpush1.bf16.msra.mxu0 0
        %3749 = vmatprep.subr.bf16.mxu0 0
        %3750 = vmatpush1.bf16.msra.mxu0 0
        %3751 = vmatprep.subr.bf16.mxu0 0
        %3752 = vmatpush1.bf16.msra.mxu0 0
        %3753 = vmatprep.subr.bf16.mxu0 0
        %3754 = vmatpush1.bf16.msra.mxu0 0
        %3755 = vmatprep.subr.bf16.mxu0 0
        %3756 = vmatpush1.bf16.msra.mxu0 0
        %3757 = vmatprep.subr.bf16.mxu0 0
        %3758 = vmatpush1.bf16.msra.mxu0 0
        %3759 = vmatprep.subr.bf16.mxu0 0
        %3760 = vmatpush1.bf16.msra.mxu0 0
        %3761 = vmatprep.subr.bf16.mxu0 0
        %3762 = vmatpush1.bf16.msra.mxu0 0
        %3763 = vmatprep.subr.bf16.mxu0 0
        %3764 = vmatpush1.bf16.msra.mxu0 0
        %3765 = vmatprep.subr.bf16.mxu0 0
        %3766 = vmatpush1.bf16.msra.mxu0 0
        %3767 = vmatprep.subr.bf16.mxu0 0
        %3768 = vmatpush1.bf16.msra.mxu0 0
        %3769 = vmatprep.subr.bf16.mxu0 0
        %3770 = vmatpush1.bf16.msra.mxu0 0
        %3771 = vmatprep.subr.bf16.mxu0 0
        %3772 = vmatpush1.bf16.msra.mxu0 0
        %3773 = vmatprep.subr.bf16.mxu0 0
        %3774 = vmatpush1.bf16.msra.mxu0 0
        %3775 = vmatprep.mubr.bf16.mxu0 0
        %3776 = vmatmul.mubr.bf16.gmra.mrb[0].mxu0 %v3693
        %v3777 = vpop.f32.mrb[0].mxu0
        %v3778 = vadd.f32 0.0, %v3777
        %v3779 = vpop.f32.mrb[0].mxu0
        %v3780 = vpop.f32.mrb[0].mxu0
        %v3781 = vadd.f32 0.0, %v3780
        %v3782 = vpop.f32.mrb[0].mxu0
        %3783 = vmatprep.mubr.bf16.mxu0 0
        %3784 = vmatmul.mubr.bf16.gmra.mrb[0].mxu0 %v3696
        %v3785 = vpop.f32.mrb[0].mxu0
        %v3786 = vadd.f32 0.0, %v3785
        %v3787 = vpop.f32.mrb[0].mxu0
        %v3788 = vpop.f32.mrb[0].mxu0
        %v3789 = vadd.f32 0.0, %v3788
        %v3790 = vpop.f32.mrb[0].mxu0
        %3791 = vmatprep.mubr.bf16.mxu0 0
        %3792 = vmatmul.mubr.bf16.gmra.mrb[0].mxu0 %v3699
        %v3793 = vpop.f32.mrb[0].mxu0
        %v3794 = vadd.f32 0.0, %v3793
        %v3795 = vpop.f32.mrb[0].mxu0
        %v3796 = vpop.f32.mrb[0].mxu0
        %v3797 = vadd.f32 0.0, %v3796
        %v3798 = vpop.f32.mrb[0].mxu0
        %3799 = vmatprep.mubr.bf16.mxu0 0
        %3800 = vmatmul.mubr.bf16.gmra.mrb[0].mxu0 %v3702
        %v3801 = vpop.f32.mrb[0].mxu0
        %v3802 = vadd.f32 0.0, %v3801
        %v3803 = vpop.f32.mrb[0].mxu0
        %v3804 = vpop.f32.mrb[0].mxu0
        %v3805 = vadd.f32 0.0, %v3804
        %v3806 = vpop.f32.mrb[0].mxu0
        %3807 = vmatprep.mubr.bf16.mxu0 0
        %3808 = vmatmul.mubr.bf16.gmra.mrb[0].mxu0 %v3705
        %v3809 = vpop.f32.mrb[0].mxu0
        %v3810 = vadd.f32 0.0, %v3809
        %v3811 = vpop.f32.mrb[0].mxu0
        %v3812 = vpop.f32.mrb[0].mxu0
        %v3813 = vadd.f32 0.0, %v3812
        %v3814 = vpop.f32.mrb[0].mxu0
        %3815 = vmatprep.mubr.bf16.mxu0 0
        %3816 = vmatmul.mubr.bf16.gmra.mrb[0].mxu0 %v3708
        %v3817 = vpop.f32.mrb[0].mxu0
        %v3818 = vadd.f32 0.0, %v3817
        %v3819 = vpop.f32.mrb[0].mxu0
        %v3820 = vpop.f32.mrb[0].mxu0
        %v3821 = vadd.f32 0.0, %v3820
        %v3822 = vpop.f32.mrb[0].mxu0
        %3823 = vmatprep.mubr.bf16.mxu0 0
        %3824 = vmatmul.mubr.bf16.gmra.mrb[0].mxu0 %v3711
        %v3825 = vpop.f32.mrb[0].mxu0
        %v3826 = vadd.f32 0.0, %v3825
        %v3827 = vpop.f32.mrb[0].mxu0
        %v3828 = vpop.f32.mrb[0].mxu0
        %v3829 = vadd.f32 0.0, %v3828
        %v3830 = vpop.f32.mrb[0].mxu0
        %3831 = vmatprep.mubr.bf16.mxu0 0
        %3832 = vmatmul.mubr.bf16.gmra.mrb[0].mxu0 %v3714
        %v3833 = vpop.f32.mrb[0].mxu0
        %v3834 = vadd.f32 0.0, %v3833
        %v3835 = vpop.f32.mrb[0].mxu0
        %v3836 = vpop.f32.mrb[0].mxu0
        %v3837 = vadd.f32 0.0, %v3836
        %v3838 = vpop.f32.mrb[0].mxu0
        %3839 = vmatprep.mubr.bf16.mxu0 0
        %3840 = vmatmul.mubr.bf16.gmra.mrb[0].mxu0 %v3717
        %v3841 = vpop.f32.mrb[0].mxu0
        %v3842 = vadd.f32 0.0, %v3841
        %v3843 = vpop.f32.mrb[0].mxu0
        %v3844 = vpop.f32.mrb[0].mxu0
        %v3845 = vadd.f32 0.0, %v3844
        %v3846 = vpop.f32.mrb[0].mxu0
        %3847 = vmatprep.mubr.bf16.mxu0 0
        %3848 = vmatmul.mubr.bf16.gmra.mrb[0].mxu0 %v3720
        %v3849 = vpop.f32.mrb[0].mxu0
        %v3850 = vadd.f32 0.0, %v3849
        %v3851 = vpop.f32.mrb[0].mxu0
        %v3852 = vpop.f32.mrb[0].mxu0
        %v3853 = vadd.f32 0.0, %v3852
        %v3854 = vpop.f32.mrb[0].mxu0
        %3855 = vmatprep.mubr.bf16.mxu0 0
        %3856 = vmatmul.mubr.bf16.gmra.mrb[0].mxu0 %v3723
        %v3857 = vpop.f32.mrb[0].mxu0
        %v3858 = vadd.f32 0.0, %v3857
        %v3859 = vpop.f32.mrb[0].mxu0
        %v3860 = vpop.f32.mrb[0].mxu0
        %v3861 = vadd.f32 0.0, %v3860
        %v3862 = vpop.f32.mrb[0].mxu0
        %3863 = vmatprep.mubr.bf16.mxu0 0
        %3864 = vmatmul.mubr.bf16.gmra.mrb[0].mxu0 %v3726
        %v3865 = vpop.f32.mrb[0].mxu0
        %v3866 = vadd.f32 0.0, %v3865
        %v3867 = vpop.f32.mrb[0].mxu0
        %v3868 = vpop.f32.mrb[0].mxu0
        %v3869 = vadd.f32 0.0, %v3868
        %v3870 = vpop.f32.mrb[0].mxu0
        %3871 = vmatprep.mubr.bf16.mxu0 0
        %3872 = vmatmul.mubr.bf16.gmra.mrb[0].mxu0 %v3729
        %v3873 = vpop.f32.mrb[0].mxu0
        %v3874 = vadd.f32 0.0, %v3873
        %v3875 = vpop.f32.mrb[0].mxu0
        %v3876 = vpop.f32.mrb[0].mxu0
        %v3877 = vadd.f32 0.0, %v3876
        %v3878 = vpop.f32.mrb[0].mxu0
        %3879 = vmatprep.mubr.bf16.mxu0 0
        %3880 = vmatmul.mubr.bf16.gmra.mrb[0].mxu0 %v3732
        %v3881 = vpop.f32.mrb[0].mxu0
        %v3882 = vadd.f32 0.0, %v3881
        %v3883 = vpop.f32.mrb[0].mxu0
        %v3884 = vpop.f32.mrb[0].mxu0
        %v3885 = vadd.f32 0.0, %v3884
        %v3886 = vpop.f32.mrb[0].mxu0
        %3887 = vmatprep.mubr.bf16.mxu0 0
        %3888 = vmatmul.mubr.bf16.gmra.mrb[0].mxu0 %v3735
        %v3889 = vpop.f32.mrb[0].mxu0
        %v3890 = vadd.f32 0.0, %v3889
        %v3891 = vpop.f32.mrb[0].mxu0
        %v3892 = vpop.f32.mrb[0].mxu0
        %v3893 = vadd.f32 0.0, %v3892
        %v3894 = vpop.f32.mrb[0].mxu0
        %3895 = vmatprep.mubr.bf16.mxu0 0
        %3896 = vmatmul.mubr.bf16.gmra.mrb[0].mxu0 %v3738
        %v3897 = vpop.f32.mrb[0].mxu0
        %v3898 = vadd.f32 0.0, %v3897
        %v3899 = vpop.f32.mrb[0].mxu0
        %v3900 = vpop.f32.mrb[0].mxu0
        %v3901 = vadd.f32 0.0, %v3900
        %v3902 = vpop.f32.mrb[0].mxu0
        %3903 = vdwg.mxu0
        %v3904 = vadd.f32 %v2830, %v3778
        %v3905 = vadd.f32 %v2831, %v3781
        %v3906 = vadd.f32 %v2832, %v3786
        %v3907 = vadd.f32 %v2833, %v3789
        %v3908 = vadd.f32 %v2834, %v3794
        %v3909 = vadd.f32 %v2835, %v3797
        %v3910 = vadd.f32 %v2836, %v3802
        %v3911 = vadd.f32 %v2837, %v3805
        %v3912 = vadd.f32 %v2838, %v3810
        %v3913 = vadd.f32 %v2839, %v3813
        %v3914 = vadd.f32 %v2840, %v3818
        %v3915 = vadd.f32 %v2841, %v3821
        %v3916 = vadd.f32 %v2842, %v3826
        %v3917 = vadd.f32 %v2843, %v3829
        %v3918 = vadd.f32 %v2844, %v3834
        %v3919 = vadd.f32 %v2845, %v3837
        %v3920 = vadd.f32 %v2846, %v3842
        %v3921 = vadd.f32 %v2847, %v3845
        %v3922 = vadd.f32 %v2848, %v3850
        %v3923 = vadd.f32 %v2849, %v3853
        %v3924 = vadd.f32 %v2850, %v3858
        %v3925 = vadd.f32 %v2851, %v3861
        %v3926 = vadd.f32 %v2852, %v3866
        %v3927 = vadd.f32 %v2853, %v3869
        %v3928 = vadd.f32 %v2854, %v3874
        %v3929 = vadd.f32 %v2855, %v3877
        %v3930 = vadd.f32 %v2856, %v3882
        %v3931 = vadd.f32 %v2857, %v3885
        %v3932 = vadd.f32 %v2858, %v3890
        %v3933 = vadd.f32 %v2859, %v3893
        %v3934 = vadd.f32 %v2860, %v3898
        %v3935 = vadd.f32 %v2861, %v3901
        %v3936 = vld [vmem:[%s522] sm:$0x3]
        %s3937 = scalar_lea.vmem %s7, 48
        %v3938 = vld [vmem:[%s3937] sm:$0xf]
        %v3939 = vld [vmem:[%s3937 + $0x4] sm:$0xf]
        %v3940 = vld [vmem:[%s3937 + $0x8] sm:$0xf]
        %v3941 = vld [vmem:[%s3937 + $0xc] sm:$0xf]
        %v3942 = vld [vmem:[%s8 + $0x3] sm:$0x1]
        %v3943 = vlaneseq
        %v3944 = vshrl.u32 %v3943, 7
        %v3945 = vsub.s32 0, %v3944
        %v3946 = vrot.slane %v3942, %v3945
        %v3951 = vunpack.c.l.b16 %v3938
        %v3952 = vunpack.c.l.b16 %v3939
        %v3953 = vunpack.c.l.b16 %v3940
        %v3954 = vunpack.c.l.b16 %v3941
        %v3955 = vpack.c.b16 %v3952, %v3951
        %v3956 = vpack.c.b16 %v3954, %v3953
        %v3960 = vsel %vm659, %v3936, 0
        %3962 = vmatprep.subr.bf16.mxu0 0
        %3963 = vmatpush1.bf16.msra.mxu0 %v3955
        %3964 = vmatprep.subr.bf16.mxu0 0
        %3965 = vmatpush1.bf16.msra.mxu0 %v3956
        %3966 = vmatprep.subr.bf16.mxu0 0
        %3967 = vmatpush1.bf16.msra.mxu0 0
        %3968 = vmatprep.subr.bf16.mxu0 0
        %3969 = vmatpush1.bf16.msra.mxu0 0
        %3970 = vmatprep.subr.bf16.mxu0 0
        %3971 = vmatpush1.bf16.msra.mxu0 0
        %3972 = vmatprep.subr.bf16.mxu0 0
        %3973 = vmatpush1.bf16.msra.mxu0 0
        %3974 = vmatprep.subr.bf16.mxu0 0
        %3975 = vmatpush1.bf16.msra.mxu0 0
        %3976 = vmatprep.subr.bf16.mxu0 0
        %3977 = vmatpush1.bf16.msra.mxu0 0
        %3978 = vmatprep.subr.bf16.mxu0 0
        %3979 = vmatpush1.bf16.msra.mxu0 0
        %3980 = vmatprep.subr.bf16.mxu0 0
        %3981 = vmatpush1.bf16.msra.mxu0 0
        %3982 = vmatprep.subr.bf16.mxu0 0
        %3983 = vmatpush1.bf16.msra.mxu0 0
        %3984 = vmatprep.subr.bf16.mxu0 0
        %3985 = vmatpush1.bf16.msra.mxu0 0
        %3986 = vmatprep.subr.bf16.mxu0 0
        %3987 = vmatpush1.bf16.msra.mxu0 0
        %3988 = vmatprep.subr.bf16.mxu0 0
        %3989 = vmatpush1.bf16.msra.mxu0 0
        %3990 = vmatprep.subr.bf16.mxu0 0
        %3991 = vmatpush1.bf16.msra.mxu0 0
        %3992 = vmatprep.subr.bf16.mxu0 0
        %3993 = vmatpush1.bf16.msra.mxu0 0
        %3994 = vmatprep.mubr.bf16.mxu0 0
        %3995 = vmatmul.mubr.bf16.gmra.mrb[0].mxu0 %v3960
        %v3996 = vpop.f32.mrb[0].mxu0
        %v3997 = vadd.f32 %v3946, %v3996
        %v3998 = vpop.f32.mrb[0].mxu0
        %v3999 = vpop.f32.mrb[0].mxu0
        %v4000 = vpop.f32.mrb[0].mxu0
        %4001 = vdwg.mxu0
        %v4002 = vld [vmem:[%s6] sm:$0xf]
        %v4003 = vld [vmem:[%s6 + $0x4] sm:$0xf]
        %v4004 = vld [vmem:[%s6 + $0x8] sm:$0xf]
        %v4005 = vld [vmem:[%s6 + $0xc] sm:$0xf]
        %v4006 = vld [vmem:[%s6 + $0x10] sm:$0xf]
        %v4007 = vld [vmem:[%s6 + $0x14] sm:$0xf]
        %v4008 = vld [vmem:[%s6 + $0x18] sm:$0xf]
        %v4009 = vld [vmem:[%s6 + $0x1c] sm:$0xf]
        %v4010 = vld [vmem:[%s6 + $0x20] sm:$0xf]
        %v4011 = vld [vmem:[%s6 + $0x24] sm:$0xf]
        %v4012 = vld [vmem:[%s6 + $0x28] sm:$0xf]
        %v4013 = vld [vmem:[%s6 + $0x2c] sm:$0xf]
        %v4014 = vld [vmem:[%s6 + $0x30] sm:$0xf]
        %v4015 = vld [vmem:[%s6 + $0x34] sm:$0xf]
        %v4016 = vld [vmem:[%s6 + $0x38] sm:$0xf]
        %v4017 = vld [vmem:[%s6 + $0x3c] sm:$0xf]
        %v4018 = vld [vmem:[%s6 + $0x40] sm:$0xf]
        %v4019 = vld [vmem:[%s6 + $0x44] sm:$0xf]
        %v4020 = vld [vmem:[%s6 + $0x48] sm:$0xf]
        %v4021 = vld [vmem:[%s6 + $0x4c] sm:$0xf]
        %v4022 = vld [vmem:[%s6 + $0x50] sm:$0xf]
        %v4023 = vld [vmem:[%s6 + $0x54] sm:$0xf]
        %v4024 = vld [vmem:[%s6 + $0x58] sm:$0xf]
        %v4025 = vld [vmem:[%s6 + $0x5c] sm:$0xf]
        %v4026 = vld [vmem:[%s6 + $0x60] sm:$0xf]
        %v4027 = vld [vmem:[%s6 + $0x64] sm:$0xf]
        %v4028 = vld [vmem:[%s6 + $0x68] sm:$0xf]
        %v4029 = vld [vmem:[%s6 + $0x6c] sm:$0xf]
        %v4030 = vld [vmem:[%s6 + $0x70] sm:$0xf]
        %v4031 = vld [vmem:[%s6 + $0x74] sm:$0xf]
        %v4032 = vld [vmem:[%s6 + $0x78] sm:$0xf]
        %v4033 = vld [vmem:[%s6 + $0x7c] sm:$0xf]
        %v4034 = vpack.c.bf16 %v3997, %v3997
        %v4067 = vunpack.c.l.b16 %v4002
        %v4068 = vunpack.c.l.b16 %v4003
        %v4069 = vunpack.c.l.b16 %v4004
        %v4070 = vunpack.c.l.b16 %v4005
        %v4071 = vunpack.c.l.b16 %v4006
        %v4072 = vunpack.c.l.b16 %v4007
        %v4073 = vunpack.c.l.b16 %v4008
        %v4074 = vunpack.c.l.b16 %v4009
        %v4075 = vunpack.c.l.b16 %v4010
        %v4076 = vunpack.c.l.b16 %v4011
        %v4077 = vunpack.c.l.b16 %v4012
        %v4078 = vunpack.c.l.b16 %v4013
        %v4079 = vunpack.c.l.b16 %v4014
        %v4080 = vunpack.c.l.b16 %v4015
        %v4081 = vunpack.c.l.b16 %v4016
        %v4082 = vunpack.c.l.b16 %v4017
        %v4083 = vunpack.c.l.b16 %v4018
        %v4084 = vunpack.c.l.b16 %v4019
        %v4085 = vunpack.c.l.b16 %v4020
        %v4086 = vunpack.c.l.b16 %v4021
        %v4087 = vunpack.c.l.b16 %v4022
        %v4088 = vunpack.c.l.b16 %v4023
        %v4089 = vunpack.c.l.b16 %v4024
        %v4090 = vunpack.c.l.b16 %v4025
        %v4091 = vunpack.c.l.b16 %v4026
        %v4092 = vunpack.c.l.b16 %v4027
        %v4093 = vunpack.c.l.b16 %v4028
        %v4094 = vunpack.c.l.b16 %v4029
        %v4095 = vunpack.c.l.b16 %v4030
        %v4096 = vunpack.c.l.b16 %v4031
        %v4097 = vunpack.c.l.b16 %v4032
        %v4098 = vunpack.c.l.b16 %v4033
        %v4099 = vpack.c.b16 %v4068, %v4067
        %v4100 = vpack.c.b16 %v4070, %v4069
        %v4101 = vpack.c.b16 %v4072, %v4071
        %v4102 = vpack.c.b16 %v4074, %v4073
        %v4103 = vpack.c.b16 %v4076, %v4075
        %v4104 = vpack.c.b16 %v4078, %v4077
        %v4105 = vpack.c.b16 %v4080, %v4079
        %v4106 = vpack.c.b16 %v4082, %v4081
        %v4107 = vpack.c.b16 %v4084, %v4083
        %v4108 = vpack.c.b16 %v4086, %v4085
        %v4109 = vpack.c.b16 %v4088, %v4087
        %v4110 = vpack.c.b16 %v4090, %v4089
        %v4111 = vpack.c.b16 %v4092, %v4091
        %v4112 = vpack.c.b16 %v4094, %v4093
        %v4113 = vpack.c.b16 %v4096, %v4095
        %v4114 = vpack.c.b16 %v4098, %v4097
        %vm4115 = vcmask 31744
        %v4117 = vsel %vm4115, %v4099, 0
        %v4120 = vsel %vm4115, %v4100, 0
        %v4123 = vsel %vm4115, %v4101, 0
        %v4126 = vsel %vm4115, %v4102, 0
        %v4129 = vsel %vm4115, %v4103, 0
        %v4132 = vsel %vm4115, %v4104, 0
        %v4135 = vsel %vm4115, %v4105, 0
        %v4138 = vsel %vm4115, %v4106, 0
        %v4141 = vsel %vm4115, %v4107, 0
        %v4144 = vsel %vm4115, %v4108, 0
        %v4147 = vsel %vm4115, %v4109, 0
        %v4150 = vsel %vm4115, %v4110, 0
        %v4153 = vsel %vm4115, %v4111, 0
        %v4156 = vsel %vm4115, %v4112, 0
        %v4159 = vsel %vm4115, %v4113, 0
        %v4162 = vsel %vm4115, %v4114, 0
        %vm4164 = vcmask 1041408
        %v4166 = vsel %vm4164, %v4034, 0
        %4168 = vmatprep.subr.bf16.mxu0 0
        %4169 = vmatpush1.bf16.msra.mxu0 %v4166
        %4170 = vmatprep.subr.bf16.mxu0 0
        %4171 = vmatpush1.bf16.msra.mxu0 0
        %4172 = vmatprep.subr.bf16.mxu0 0
        %4173 = vmatpush1.bf16.msra.mxu0 0
        %4174 = vmatprep.subr.bf16.mxu0 0
        %4175 = vmatpush1.bf16.msra.mxu0 0
        %4176 = vmatprep.subr.bf16.mxu0 0
        %4177 = vmatpush1.bf16.msra.mxu0 0
        %4178 = vmatprep.subr.bf16.mxu0 0
        %4179 = vmatpush1.bf16.msra.mxu0 0
        %4180 = vmatprep.subr.bf16.mxu0 0
        %4181 = vmatpush1.bf16.msra.mxu0 0
        %4182 = vmatprep.subr.bf16.mxu0 0
        %4183 = vmatpush1.bf16.msra.mxu0 0
        %4184 = vmatprep.subr.bf16.mxu0 0
        %4185 = vmatpush1.bf16.msra.mxu0 0
        %4186 = vmatprep.subr.bf16.mxu0 0
        %4187 = vmatpush1.bf16.msra.mxu0 0
        %4188 = vmatprep.subr.bf16.mxu0 0
        %4189 = vmatpush1.bf16.msra.mxu0 0
        %4190 = vmatprep.subr.bf16.mxu0 0
        %4191 = vmatpush1.bf16.msra.mxu0 0
        %4192 = vmatprep.subr.bf16.mxu0 0
        %4193 = vmatpush1.bf16.msra.mxu0 0
        %4194 = vmatprep.subr.bf16.mxu0 0
        %4195 = vmatpush1.bf16.msra.mxu0 0
        %4196 = vmatprep.subr.bf16.mxu0 0
        %4197 = vmatpush1.bf16.msra.mxu0 0
        %4198 = vmatprep.subr.bf16.mxu0 0
        %4199 = vmatpush1.bf16.msra.mxu0 0
        %4200 = vmatprep.mubr.bf16.mxu0 0
        %4201 = vmatmul.mubr.bf16.gmra.mrb[0].mxu0 %v4117
        %v4202 = vpop.f32.mrb[0].mxu0
        %v4203 = vadd.f32 0.0, %v4202
        %v4204 = vpop.f32.mrb[0].mxu0
        %v4205 = vpop.f32.mrb[0].mxu0
        %v4206 = vadd.f32 0.0, %v4205
        %v4207 = vpop.f32.mrb[0].mxu0
        %4208 = vmatprep.mubr.bf16.mxu0 0
        %4209 = vmatmul.mubr.bf16.gmra.mrb[0].mxu0 %v4120
        %v4210 = vpop.f32.mrb[0].mxu0
        %v4211 = vadd.f32 0.0, %v4210
        %v4212 = vpop.f32.mrb[0].mxu0
        %v4213 = vpop.f32.mrb[0].mxu0
        %v4214 = vadd.f32 0.0, %v4213
        %v4215 = vpop.f32.mrb[0].mxu0
        %4216 = vmatprep.mubr.bf16.mxu0 0
        %4217 = vmatmul.mubr.bf16.gmra.mrb[0].mxu0 %v4123
        %v4218 = vpop.f32.mrb[0].mxu0
        %v4219 = vadd.f32 0.0, %v4218
        %v4220 = vpop.f32.mrb[0].mxu0
        %v4221 = vpop.f32.mrb[0].mxu0
        %v4222 = vadd.f32 0.0, %v4221
        %v4223 = vpop.f32.mrb[0].mxu0
        %4224 = vmatprep.mubr.bf16.mxu0 0
        %4225 = vmatmul.mubr.bf16.gmra.mrb[0].mxu0 %v4126
        %v4226 = vpop.f32.mrb[0].mxu0
        %v4227 = vadd.f32 0.0, %v4226
        %v4228 = vpop.f32.mrb[0].mxu0
        %v4229 = vpop.f32.mrb[0].mxu0
        %v4230 = vadd.f32 0.0, %v4229
        %v4231 = vpop.f32.mrb[0].mxu0
        %4232 = vmatprep.mubr.bf16.mxu0 0
        %4233 = vmatmul.mubr.bf16.gmra.mrb[0].mxu0 %v4129
        %v4234 = vpop.f32.mrb[0].mxu0
        %v4235 = vadd.f32 0.0, %v4234
        %v4236 = vpop.f32.mrb[0].mxu0
        %v4237 = vpop.f32.mrb[0].mxu0
        %v4238 = vadd.f32 0.0, %v4237
        %v4239 = vpop.f32.mrb[0].mxu0
        %4240 = vmatprep.mubr.bf16.mxu0 0
        %4241 = vmatmul.mubr.bf16.gmra.mrb[0].mxu0 %v4132
        %v4242 = vpop.f32.mrb[0].mxu0
        %v4243 = vadd.f32 0.0, %v4242
        %v4244 = vpop.f32.mrb[0].mxu0
        %v4245 = vpop.f32.mrb[0].mxu0
        %v4246 = vadd.f32 0.0, %v4245
        %v4247 = vpop.f32.mrb[0].mxu0
        %4248 = vmatprep.mubr.bf16.mxu0 0
        %4249 = vmatmul.mubr.bf16.gmra.mrb[0].mxu0 %v4135
        %v4250 = vpop.f32.mrb[0].mxu0
        %v4251 = vadd.f32 0.0, %v4250
        %v4252 = vpop.f32.mrb[0].mxu0
        %v4253 = vpop.f32.mrb[0].mxu0
        %v4254 = vadd.f32 0.0, %v4253
        %v4255 = vpop.f32.mrb[0].mxu0
        %4256 = vmatprep.mubr.bf16.mxu0 0
        %4257 = vmatmul.mubr.bf16.gmra.mrb[0].mxu0 %v4138
        %v4258 = vpop.f32.mrb[0].mxu0
        %v4259 = vadd.f32 0.0, %v4258
        %v4260 = vpop.f32.mrb[0].mxu0
        %v4261 = vpop.f32.mrb[0].mxu0
        %v4262 = vadd.f32 0.0, %v4261
        %v4263 = vpop.f32.mrb[0].mxu0
        %4264 = vmatprep.mubr.bf16.mxu0 0
        %4265 = vmatmul.mubr.bf16.gmra.mrb[0].mxu0 %v4141
        %v4266 = vpop.f32.mrb[0].mxu0
        %v4267 = vadd.f32 0.0, %v4266
        %v4268 = vpop.f32.mrb[0].mxu0
        %v4269 = vpop.f32.mrb[0].mxu0
        %v4270 = vadd.f32 0.0, %v4269
        %v4271 = vpop.f32.mrb[0].mxu0
        %4272 = vmatprep.mubr.bf16.mxu0 0
        %4273 = vmatmul.mubr.bf16.gmra.mrb[0].mxu0 %v4144
        %v4274 = vpop.f32.mrb[0].mxu0
        %v4275 = vadd.f32 0.0, %v4274
        %v4276 = vpop.f32.mrb[0].mxu0
        %v4277 = vpop.f32.mrb[0].mxu0
        %v4278 = vadd.f32 0.0, %v4277
        %v4279 = vpop.f32.mrb[0].mxu0
        %4280 = vmatprep.mubr.bf16.mxu0 0
        %4281 = vmatmul.mubr.bf16.gmra.mrb[0].mxu0 %v4147
        %v4282 = vpop.f32.mrb[0].mxu0
        %v4283 = vadd.f32 0.0, %v4282
        %v4284 = vpop.f32.mrb[0].mxu0
        %v4285 = vpop.f32.mrb[0].mxu0
        %v4286 = vadd.f32 0.0, %v4285
        %v4287 = vpop.f32.mrb[0].mxu0
        %4288 = vmatprep.mubr.bf16.mxu0 0
        %4289 = vmatmul.mubr.bf16.gmra.mrb[0].mxu0 %v4150
        %v4290 = vpop.f32.mrb[0].mxu0
        %v4291 = vadd.f32 0.0, %v4290
        %v4292 = vpop.f32.mrb[0].mxu0
        %v4293 = vpop.f32.mrb[0].mxu0
        %v4294 = vadd.f32 0.0, %v4293
        %v4295 = vpop.f32.mrb[0].mxu0
        %4296 = vmatprep.mubr.bf16.mxu0 0
        %4297 = vmatmul.mubr.bf16.gmra.mrb[0].mxu0 %v4153
        %v4298 = vpop.f32.mrb[0].mxu0
        %v4299 = vadd.f32 0.0, %v4298
        %v4300 = vpop.f32.mrb[0].mxu0
        %v4301 = vpop.f32.mrb[0].mxu0
        %v4302 = vadd.f32 0.0, %v4301
        %v4303 = vpop.f32.mrb[0].mxu0
        %4304 = vmatprep.mubr.bf16.mxu0 0
        %4305 = vmatmul.mubr.bf16.gmra.mrb[0].mxu0 %v4156
        %v4306 = vpop.f32.mrb[0].mxu0
        %v4307 = vadd.f32 0.0, %v4306
        %v4308 = vpop.f32.mrb[0].mxu0
        %v4309 = vpop.f32.mrb[0].mxu0
        %v4310 = vadd.f32 0.0, %v4309
        %v4311 = vpop.f32.mrb[0].mxu0
        %4312 = vmatprep.mubr.bf16.mxu0 0
        %4313 = vmatmul.mubr.bf16.gmra.mrb[0].mxu0 %v4159
        %v4314 = vpop.f32.mrb[0].mxu0
        %v4315 = vadd.f32 0.0, %v4314
        %v4316 = vpop.f32.mrb[0].mxu0
        %v4317 = vpop.f32.mrb[0].mxu0
        %v4318 = vadd.f32 0.0, %v4317
        %v4319 = vpop.f32.mrb[0].mxu0
        %4320 = vmatprep.mubr.bf16.mxu0 0
        %4321 = vmatmul.mubr.bf16.gmra.mrb[0].mxu0 %v4162
        %v4322 = vpop.f32.mrb[0].mxu0
        %v4323 = vadd.f32 0.0, %v4322
        %v4324 = vpop.f32.mrb[0].mxu0
        %v4325 = vpop.f32.mrb[0].mxu0
        %v4326 = vadd.f32 0.0, %v4325
        %v4327 = vpop.f32.mrb[0].mxu0
        %4328 = vdwg.mxu0
        %v4329 = vsel %vm1051, %v4203, 0.0
        %4330 = vadd.xlane.f32.xlu0 %v4329
        %v4331 = vpop.xlane.xlu0 %4330
        %v4332 = vsel %vm1051, %v4206, 0.0
        %4333 = vadd.xlane.f32.xlu0 %v4332
        %v4334 = vpop.xlane.xlu0 %4333
        %v4335 = vsel %vm1051, %v4211, 0.0
        %4336 = vadd.xlane.f32.xlu0 %v4335
        %v4337 = vpop.xlane.xlu0 %4336
        %v4338 = vsel %vm1051, %v4214, 0.0
        %4339 = vadd.xlane.f32.xlu0 %v4338
        %v4340 = vpop.xlane.xlu0 %4339
        %v4341 = vsel %vm1051, %v4219, 0.0
        %4342 = vadd.xlane.f32.xlu0 %v4341
        %v4343 = vpop.xlane.xlu0 %4342
        %v4344 = vsel %vm1051, %v4222, 0.0
        %4345 = vadd.xlane.f32.xlu0 %v4344
        %v4346 = vpop.xlane.xlu0 %4345
        %v4347 = vsel %vm1051, %v4227, 0.0
        %4348 = vadd.xlane.f32.xlu0 %v4347
        %v4349 = vpop.xlane.xlu0 %4348
        %v4350 = vsel %vm1051, %v4230, 0.0
        %4351 = vadd.xlane.f32.xlu0 %v4350
        %v4352 = vpop.xlane.xlu0 %4351
        %v4353 = vsel %vm1051, %v4235, 0.0
        %4354 = vadd.xlane.f32.xlu0 %v4353
        %v4355 = vpop.xlane.xlu0 %4354
        %v4356 = vsel %vm1051, %v4238, 0.0
        %4357 = vadd.xlane.f32.xlu0 %v4356
        %v4358 = vpop.xlane.xlu0 %4357
        %v4359 = vsel %vm1051, %v4243, 0.0
        %4360 = vadd.xlane.f32.xlu0 %v4359
        %v4361 = vpop.xlane.xlu0 %4360
        %v4362 = vsel %vm1051, %v4246, 0.0
        %4363 = vadd.xlane.f32.xlu0 %v4362
        %v4364 = vpop.xlane.xlu0 %4363
        %v4365 = vsel %vm1051, %v4251, 0.0
        %4366 = vadd.xlane.f32.xlu0 %v4365
        %v4367 = vpop.xlane.xlu0 %4366
        %v4368 = vsel %vm1051, %v4254, 0.0
        %4369 = vadd.xlane.f32.xlu0 %v4368
        %v4370 = vpop.xlane.xlu0 %4369
        %v4371 = vsel %vm1051, %v4259, 0.0
        %4372 = vadd.xlane.f32.xlu0 %v4371
        %v4373 = vpop.xlane.xlu0 %4372
        %v4374 = vsel %vm1051, %v4262, 0.0
        %4375 = vadd.xlane.f32.xlu0 %v4374
        %v4376 = vpop.xlane.xlu0 %4375
        %v4377 = vsel %vm1051, %v4267, 0.0
        %4378 = vadd.xlane.f32.xlu0 %v4377
        %v4379 = vpop.xlane.xlu0 %4378
        %v4380 = vsel %vm1051, %v4270, 0.0
        %4381 = vadd.xlane.f32.xlu0 %v4380
        %v4382 = vpop.xlane.xlu0 %4381
        %v4383 = vsel %vm1051, %v4275, 0.0
        %4384 = vadd.xlane.f32.xlu0 %v4383
        %v4385 = vpop.xlane.xlu0 %4384
        %v4386 = vsel %vm1051, %v4278, 0.0
        %4387 = vadd.xlane.f32.xlu0 %v4386
        %v4388 = vpop.xlane.xlu0 %4387
        %v4389 = vsel %vm1051, %v4283, 0.0
        %4390 = vadd.xlane.f32.xlu0 %v4389
        %v4391 = vpop.xlane.xlu0 %4390
        %v4392 = vsel %vm1051, %v4286, 0.0
        %4393 = vadd.xlane.f32.xlu0 %v4392
        %v4394 = vpop.xlane.xlu0 %4393
        %v4395 = vsel %vm1051, %v4291, 0.0
        %4396 = vadd.xlane.f32.xlu0 %v4395
        %v4397 = vpop.xlane.xlu0 %4396
        %v4398 = vsel %vm1051, %v4294, 0.0
        %4399 = vadd.xlane.f32.xlu0 %v4398
        %v4400 = vpop.xlane.xlu0 %4399
        %v4401 = vsel %vm1051, %v4299, 0.0
        %4402 = vadd.xlane.f32.xlu0 %v4401
        %v4403 = vpop.xlane.xlu0 %4402
        %v4404 = vsel %vm1051, %v4302, 0.0
        %4405 = vadd.xlane.f32.xlu0 %v4404
        %v4406 = vpop.xlane.xlu0 %4405
        %v4407 = vsel %vm1051, %v4307, 0.0
        %4408 = vadd.xlane.f32.xlu0 %v4407
        %v4409 = vpop.xlane.xlu0 %4408
        %v4410 = vsel %vm1051, %v4310, 0.0
        %4411 = vadd.xlane.f32.xlu0 %v4410
        %v4412 = vpop.xlane.xlu0 %4411
        %v4413 = vsel %vm1051, %v4315, 0.0
        %4414 = vadd.xlane.f32.xlu0 %v4413
        %v4415 = vpop.xlane.xlu0 %4414
        %v4416 = vsel %vm1051, %v4318, 0.0
        %4417 = vadd.xlane.f32.xlu0 %v4416
        %v4418 = vpop.xlane.xlu0 %4417
        %v4419 = vsel %vm1051, %v4323, 0.0
        %4420 = vadd.xlane.f32.xlu0 %v4419
        %v4421 = vpop.xlane.xlu0 %4420
        %v4422 = vsel %vm1051, %v4326, 0.0
        %4423 = vadd.xlane.f32.xlu0 %v4422
        %v4424 = vpop.xlane.xlu0 %4423
        %v4425 = vmul.f32 %v4331, %v1148
        %v4426 = vmul.f32 %v4334, %v1148
        %v4427 = vmul.f32 %v4337, %v1148
        %v4428 = vmul.f32 %v4340, %v1148
        %v4429 = vmul.f32 %v4343, %v1148
        %v4430 = vmul.f32 %v4346, %v1148
        %v4431 = vmul.f32 %v4349, %v1148
        %v4432 = vmul.f32 %v4352, %v1148
        %v4433 = vmul.f32 %v4355, %v1148
        %v4434 = vmul.f32 %v4358, %v1148
        %v4435 = vmul.f32 %v4361, %v1148
        %v4436 = vmul.f32 %v4364, %v1148
        %v4437 = vmul.f32 %v4367, %v1148
        %v4438 = vmul.f32 %v4370, %v1148
        %v4439 = vmul.f32 %v4373, %v1148
        %v4440 = vmul.f32 %v4376, %v1148
        %v4441 = vmul.f32 %v4379, %v1148
        %v4442 = vmul.f32 %v4382, %v1148
        %v4443 = vmul.f32 %v4385, %v1148
        %v4444 = vmul.f32 %v4388, %v1148
        %v4445 = vmul.f32 %v4391, %v1148
        %v4446 = vmul.f32 %v4394, %v1148
        %v4447 = vmul.f32 %v4397, %v1148
        %v4448 = vmul.f32 %v4400, %v1148
        %v4449 = vmul.f32 %v4403, %v1148
        %v4450 = vmul.f32 %v4406, %v1148
        %v4451 = vmul.f32 %v4409, %v1148
        %v4452 = vmul.f32 %v4412, %v1148
        %v4453 = vmul.f32 %v4415, %v1148
        %v4454 = vmul.f32 %v4418, %v1148
        %v4455 = vmul.f32 %v4421, %v1148
        %v4456 = vmul.f32 %v4424, %v1148
        %v4457 = vsub.f32 %v4203, %v4425
        %v4458 = vsub.f32 %v4206, %v4426
        %v4459 = vsub.f32 %v4211, %v4427
        %v4460 = vsub.f32 %v4214, %v4428
        %v4461 = vsub.f32 %v4219, %v4429
        %v4462 = vsub.f32 %v4222, %v4430
        %v4463 = vsub.f32 %v4227, %v4431
        %v4464 = vsub.f32 %v4230, %v4432
        %v4465 = vsub.f32 %v4235, %v4433
        %v4466 = vsub.f32 %v4238, %v4434
        %v4467 = vsub.f32 %v4243, %v4435
        %v4468 = vsub.f32 %v4246, %v4436
        %v4469 = vsub.f32 %v4251, %v4437
        %v4470 = vsub.f32 %v4254, %v4438
        %v4471 = vsub.f32 %v4259, %v4439
        %v4472 = vsub.f32 %v4262, %v4440
        %v4473 = vsub.f32 %v4267, %v4441
        %v4474 = vsub.f32 %v4270, %v4442
        %v4475 = vsub.f32 %v4275, %v4443
        %v4476 = vsub.f32 %v4278, %v4444
        %v4477 = vsub.f32 %v4283, %v4445
        %v4478 = vsub.f32 %v4286, %v4446
        %v4479 = vsub.f32 %v4291, %v4447
        %v4480 = vsub.f32 %v4294, %v4448
        %v4481 = vsub.f32 %v4299, %v4449
        %v4482 = vsub.f32 %v4302, %v4450
        %v4483 = vsub.f32 %v4307, %v4451
        %v4484 = vsub.f32 %v4310, %v4452
        %v4485 = vsub.f32 %v4315, %v4453
        %v4486 = vsub.f32 %v4318, %v4454
        %v4487 = vsub.f32 %v4323, %v4455
        %v4488 = vsub.f32 %v4326, %v4456
        %v4489 = vmul.f32 %v4457, %v4457
        %v4490 = vmul.f32 %v4458, %v4458
        %v4491 = vmul.f32 %v4459, %v4459
        %v4492 = vmul.f32 %v4460, %v4460
        %v4493 = vmul.f32 %v4461, %v4461
        %v4494 = vmul.f32 %v4462, %v4462
        %v4495 = vmul.f32 %v4463, %v4463
        %v4496 = vmul.f32 %v4464, %v4464
        %v4497 = vmul.f32 %v4465, %v4465
        %v4498 = vmul.f32 %v4466, %v4466
        %v4499 = vmul.f32 %v4467, %v4467
        %v4500 = vmul.f32 %v4468, %v4468
        %v4501 = vmul.f32 %v4469, %v4469
        %v4502 = vmul.f32 %v4470, %v4470
        %v4503 = vmul.f32 %v4471, %v4471
        %v4504 = vmul.f32 %v4472, %v4472
        %v4505 = vmul.f32 %v4473, %v4473
        %v4506 = vmul.f32 %v4474, %v4474
        %v4507 = vmul.f32 %v4475, %v4475
        %v4508 = vmul.f32 %v4476, %v4476
        %v4509 = vmul.f32 %v4477, %v4477
        %v4510 = vmul.f32 %v4478, %v4478
        %v4511 = vmul.f32 %v4479, %v4479
        %v4512 = vmul.f32 %v4480, %v4480
        %v4513 = vmul.f32 %v4481, %v4481
        %v4514 = vmul.f32 %v4482, %v4482
        %v4515 = vmul.f32 %v4483, %v4483
        %v4516 = vmul.f32 %v4484, %v4484
        %v4517 = vmul.f32 %v4485, %v4485
        %v4518 = vmul.f32 %v4486, %v4486
        %v4519 = vmul.f32 %v4487, %v4487
        %v4520 = vmul.f32 %v4488, %v4488
        %v4521 = vsel %vm1051, %v4489, 0.0
        %4522 = vadd.xlane.f32.xlu0 %v4521
        %v4523 = vpop.xlane.xlu0 %4522
        %v4524 = vsel %vm1051, %v4490, 0.0
        %4525 = vadd.xlane.f32.xlu0 %v4524
        %v4526 = vpop.xlane.xlu0 %4525
        %v4527 = vsel %vm1051, %v4491, 0.0
        %4528 = vadd.xlane.f32.xlu0 %v4527
        %v4529 = vpop.xlane.xlu0 %4528
        %v4530 = vsel %vm1051, %v4492, 0.0
        %4531 = vadd.xlane.f32.xlu0 %v4530
        %v4532 = vpop.xlane.xlu0 %4531
        %v4533 = vsel %vm1051, %v4493, 0.0
        %4534 = vadd.xlane.f32.xlu0 %v4533
        %v4535 = vpop.xlane.xlu0 %4534
        %v4536 = vsel %vm1051, %v4494, 0.0
        %4537 = vadd.xlane.f32.xlu0 %v4536
        %v4538 = vpop.xlane.xlu0 %4537
        %v4539 = vsel %vm1051, %v4495, 0.0
        %4540 = vadd.xlane.f32.xlu0 %v4539
        %v4541 = vpop.xlane.xlu0 %4540
        %v4542 = vsel %vm1051, %v4496, 0.0
        %4543 = vadd.xlane.f32.xlu0 %v4542
        %v4544 = vpop.xlane.xlu0 %4543
        %v4545 = vsel %vm1051, %v4497, 0.0
        %4546 = vadd.xlane.f32.xlu0 %v4545
        %v4547 = vpop.xlane.xlu0 %4546
        %v4548 = vsel %vm1051, %v4498, 0.0
        %4549 = vadd.xlane.f32.xlu0 %v4548
        %v4550 = vpop.xlane.xlu0 %4549
        %v4551 = vsel %vm1051, %v4499, 0.0
        %4552 = vadd.xlane.f32.xlu0 %v4551
        %v4553 = vpop.xlane.xlu0 %4552
        %v4554 = vsel %vm1051, %v4500, 0.0
        %4555 = vadd.xlane.f32.xlu0 %v4554
        %v4556 = vpop.xlane.xlu0 %4555
        %v4557 = vsel %vm1051, %v4501, 0.0
        %4558 = vadd.xlane.f32.xlu0 %v4557
        %v4559 = vpop.xlane.xlu0 %4558
        %v4560 = vsel %vm1051, %v4502, 0.0
        %4561 = vadd.xlane.f32.xlu0 %v4560
        %v4562 = vpop.xlane.xlu0 %4561
        %v4563 = vsel %vm1051, %v4503, 0.0
        %4564 = vadd.xlane.f32.xlu0 %v4563
        %v4565 = vpop.xlane.xlu0 %4564
        %v4566 = vsel %vm1051, %v4504, 0.0
        %4567 = vadd.xlane.f32.xlu0 %v4566
        %v4568 = vpop.xlane.xlu0 %4567
        %v4569 = vsel %vm1051, %v4505, 0.0
        %4570 = vadd.xlane.f32.xlu0 %v4569
        %v4571 = vpop.xlane.xlu0 %4570
        %v4572 = vsel %vm1051, %v4506, 0.0
        %4573 = vadd.xlane.f32.xlu0 %v4572
        %v4574 = vpop.xlane.xlu0 %4573
        %v4575 = vsel %vm1051, %v4507, 0.0
        %4576 = vadd.xlane.f32.xlu0 %v4575
        %v4577 = vpop.xlane.xlu0 %4576
        %v4578 = vsel %vm1051, %v4508, 0.0
        %4579 = vadd.xlane.f32.xlu0 %v4578
        %v4580 = vpop.xlane.xlu0 %4579
        %v4581 = vsel %vm1051, %v4509, 0.0
        %4582 = vadd.xlane.f32.xlu0 %v4581
        %v4583 = vpop.xlane.xlu0 %4582
        %v4584 = vsel %vm1051, %v4510, 0.0
        %4585 = vadd.xlane.f32.xlu0 %v4584
        %v4586 = vpop.xlane.xlu0 %4585
        %v4587 = vsel %vm1051, %v4511, 0.0
        %4588 = vadd.xlane.f32.xlu0 %v4587
        %v4589 = vpop.xlane.xlu0 %4588
        %v4590 = vsel %vm1051, %v4512, 0.0
        %4591 = vadd.xlane.f32.xlu0 %v4590
        %v4592 = vpop.xlane.xlu0 %4591
        %v4593 = vsel %vm1051, %v4513, 0.0
        %4594 = vadd.xlane.f32.xlu0 %v4593
        %v4595 = vpop.xlane.xlu0 %4594
        %v4596 = vsel %vm1051, %v4514, 0.0
        %4597 = vadd.xlane.f32.xlu0 %v4596
        %v4598 = vpop.xlane.xlu0 %4597
        %v4599 = vsel %vm1051, %v4515, 0.0
        %4600 = vadd.xlane.f32.xlu0 %v4599
        %v4601 = vpop.xlane.xlu0 %4600
        %v4602 = vsel %vm1051, %v4516, 0.0
        %4603 = vadd.xlane.f32.xlu0 %v4602
        %v4604 = vpop.xlane.xlu0 %4603
        %v4605 = vsel %vm1051, %v4517, 0.0
        %4606 = vadd.xlane.f32.xlu0 %v4605
        %v4607 = vpop.xlane.xlu0 %4606
        %v4608 = vsel %vm1051, %v4518, 0.0
        %4609 = vadd.xlane.f32.xlu0 %v4608
        %v4610 = vpop.xlane.xlu0 %4609
        %v4611 = vsel %vm1051, %v4519, 0.0
        %4612 = vadd.xlane.f32.xlu0 %v4611
        %v4613 = vpop.xlane.xlu0 %4612
        %v4614 = vsel %vm1051, %v4520, 0.0
        %4615 = vadd.xlane.f32.xlu0 %v4614
        %v4616 = vpop.xlane.xlu0 %4615
        %v4617 = vmul.f32 %v4523, %v1148
        %v4618 = vmul.f32 %v4526, %v1148
        %v4619 = vmul.f32 %v4529, %v1148
        %v4620 = vmul.f32 %v4532, %v1148
        %v4621 = vmul.f32 %v4535, %v1148
        %v4622 = vmul.f32 %v4538, %v1148
        %v4623 = vmul.f32 %v4541, %v1148
        %v4624 = vmul.f32 %v4544, %v1148
        %v4625 = vmul.f32 %v4547, %v1148
        %v4626 = vmul.f32 %v4550, %v1148
        %v4627 = vmul.f32 %v4553, %v1148
        %v4628 = vmul.f32 %v4556, %v1148
        %v4629 = vmul.f32 %v4559, %v1148
        %v4630 = vmul.f32 %v4562, %v1148
        %v4631 = vmul.f32 %v4565, %v1148
        %v4632 = vmul.f32 %v4568, %v1148
        %v4633 = vmul.f32 %v4571, %v1148
        %v4634 = vmul.f32 %v4574, %v1148
        %v4635 = vmul.f32 %v4577, %v1148
        %v4636 = vmul.f32 %v4580, %v1148
        %v4637 = vmul.f32 %v4583, %v1148
        %v4638 = vmul.f32 %v4586, %v1148
        %v4639 = vmul.f32 %v4589, %v1148
        %v4640 = vmul.f32 %v4592, %v1148
        %v4641 = vmul.f32 %v4595, %v1148
        %v4642 = vmul.f32 %v4598, %v1148
        %v4643 = vmul.f32 %v4601, %v1148
        %v4644 = vmul.f32 %v4604, %v1148
        %v4645 = vmul.f32 %v4607, %v1148
        %v4646 = vmul.f32 %v4610, %v1148
        %v4647 = vmul.f32 %v4613, %v1148
        %v4648 = vmul.f32 %v4616, %v1148
        %v4649 = vadd.f32 %v4617, 1e-06
        %v4650 = vadd.f32 %v4618, 1e-06
        %v4651 = vadd.f32 %v4619, 1e-06
        %v4652 = vadd.f32 %v4620, 1e-06
        %v4653 = vadd.f32 %v4621, 1e-06
        %v4654 = vadd.f32 %v4622, 1e-06
        %v4655 = vadd.f32 %v4623, 1e-06
        %v4656 = vadd.f32 %v4624, 1e-06
        %v4657 = vadd.f32 %v4625, 1e-06
        %v4658 = vadd.f32 %v4626, 1e-06
        %v4659 = vadd.f32 %v4627, 1e-06
        %v4660 = vadd.f32 %v4628, 1e-06
        %v4661 = vadd.f32 %v4629, 1e-06
        %v4662 = vadd.f32 %v4630, 1e-06
        %v4663 = vadd.f32 %v4631, 1e-06
        %v4664 = vadd.f32 %v4632, 1e-06
        %v4665 = vadd.f32 %v4633, 1e-06
        %v4666 = vadd.f32 %v4634, 1e-06
        %v4667 = vadd.f32 %v4635, 1e-06
        %v4668 = vadd.f32 %v4636, 1e-06
        %v4669 = vadd.f32 %v4637, 1e-06
        %v4670 = vadd.f32 %v4638, 1e-06
        %v4671 = vadd.f32 %v4639, 1e-06
        %v4672 = vadd.f32 %v4640, 1e-06
        %v4673 = vadd.f32 %v4641, 1e-06
        %v4674 = vadd.f32 %v4642, 1e-06
        %v4675 = vadd.f32 %v4643, 1e-06
        %v4676 = vadd.f32 %v4644, 1e-06
        %v4677 = vadd.f32 %v4645, 1e-06
        %v4678 = vadd.f32 %v4646, 1e-06
        %v4679 = vadd.f32 %v4647, 1e-06
        %v4680 = vadd.f32 %v4648, 1e-06
        %v4681 = vrsqrt.pop %v4649
        %v4682 = vrsqrt.pop %v4650
        %v4683 = vrsqrt.pop %v4651
        %v4684 = vrsqrt.pop %v4652
        %v4685 = vrsqrt.pop %v4653
        %v4686 = vrsqrt.pop %v4654
        %v4687 = vrsqrt.pop %v4655
        %v4688 = vrsqrt.pop %v4656
        %v4689 = vrsqrt.pop %v4657
        %v4690 = vrsqrt.pop %v4658
        %v4691 = vrsqrt.pop %v4659
        %v4692 = vrsqrt.pop %v4660
        %v4693 = vrsqrt.pop %v4661
        %v4694 = vrsqrt.pop %v4662
        %v4695 = vrsqrt.pop %v4663
        %v4696 = vrsqrt.pop %v4664
        %v4697 = vrsqrt.pop %v4665
        %v4698 = vrsqrt.pop %v4666
        %v4699 = vrsqrt.pop %v4667
        %v4700 = vrsqrt.pop %v4668
        %v4701 = vrsqrt.pop %v4669
        %v4702 = vrsqrt.pop %v4670
        %v4703 = vrsqrt.pop %v4671
        %v4704 = vrsqrt.pop %v4672
        %v4705 = vrsqrt.pop %v4673
        %v4706 = vrsqrt.pop %v4674
        %v4707 = vrsqrt.pop %v4675
        %v4708 = vrsqrt.pop %v4676
        %v4709 = vrsqrt.pop %v4677
        %v4710 = vrsqrt.pop %v4678
        %v4711 = vrsqrt.pop %v4679
        %v4712 = vrsqrt.pop %v4680
        %v4713 = vmul.f32 %v4457, %v4681
        %v4714 = vmul.f32 %v4458, %v4682
        %v4715 = vmul.f32 %v4459, %v4683
        %v4716 = vmul.f32 %v4460, %v4684
        %v4717 = vmul.f32 %v4461, %v4685
        %v4718 = vmul.f32 %v4462, %v4686
        %v4719 = vmul.f32 %v4463, %v4687
        %v4720 = vmul.f32 %v4464, %v4688
        %v4721 = vmul.f32 %v4465, %v4689
        %v4722 = vmul.f32 %v4466, %v4690
        %v4723 = vmul.f32 %v4467, %v4691
        %v4724 = vmul.f32 %v4468, %v4692
        %v4725 = vmul.f32 %v4469, %v4693
        %v4726 = vmul.f32 %v4470, %v4694
        %v4727 = vmul.f32 %v4471, %v4695
        %v4728 = vmul.f32 %v4472, %v4696
        %v4729 = vmul.f32 %v4473, %v4697
        %v4730 = vmul.f32 %v4474, %v4698
        %v4731 = vmul.f32 %v4475, %v4699
        %v4732 = vmul.f32 %v4476, %v4700
        %v4733 = vmul.f32 %v4477, %v4701
        %v4734 = vmul.f32 %v4478, %v4702
        %v4735 = vmul.f32 %v4479, %v4703
        %v4736 = vmul.f32 %v4480, %v4704
        %v4737 = vmul.f32 %v4481, %v4705
        %v4738 = vmul.f32 %v4482, %v4706
        %v4739 = vmul.f32 %v4483, %v4707
        %v4740 = vmul.f32 %v4484, %v4708
        %v4741 = vmul.f32 %v4485, %v4709
        %v4742 = vmul.f32 %v4486, %v4710
        %v4743 = vmul.f32 %v4487, %v4711
        %v4744 = vmul.f32 %v4488, %v4712
        %v4745 = vpack.c.bf16 %v4714, %v4713
        %v4746 = vpack.c.bf16 %v4716, %v4715
        %v4747 = vpack.c.bf16 %v4718, %v4717
        %v4748 = vpack.c.bf16 %v4720, %v4719
        %v4749 = vpack.c.bf16 %v4722, %v4721
        %v4750 = vpack.c.bf16 %v4724, %v4723
        %v4751 = vpack.c.bf16 %v4726, %v4725
        %v4752 = vpack.c.bf16 %v4728, %v4727
        %v4753 = vpack.c.bf16 %v4730, %v4729
        %v4754 = vpack.c.bf16 %v4732, %v4731
        %v4755 = vpack.c.bf16 %v4734, %v4733
        %v4756 = vpack.c.bf16 %v4736, %v4735
        %v4757 = vpack.c.bf16 %v4738, %v4737
        %v4758 = vpack.c.bf16 %v4740, %v4739
        %v4759 = vpack.c.bf16 %v4742, %v4741
        %v4760 = vpack.c.bf16 %v4744, %v4743
        %s4761 = scalar_lea.vmem %s10, 12
        %v4762 = vld [vmem:[%s4761] sm:$0xf]
        %v4764 = vsel %vm1051, %v4745, 0
        %v4767 = vsel %vm1051, %v4746, 0
        %v4770 = vsel %vm1051, %v4747, 0
        %v4773 = vsel %vm1051, %v4748, 0
        %v4776 = vsel %vm1051, %v4749, 0
        %v4779 = vsel %vm1051, %v4750, 0
        %v4782 = vsel %vm1051, %v4751, 0
        %v4785 = vsel %vm1051, %v4752, 0
        %v4788 = vsel %vm1051, %v4753, 0
        %v4791 = vsel %vm1051, %v4754, 0
        %v4794 = vsel %vm1051, %v4755, 0
        %v4797 = vsel %vm1051, %v4756, 0
        %v4800 = vsel %vm1051, %v4757, 0
        %v4803 = vsel %vm1051, %v4758, 0
        %v4806 = vsel %vm1051, %v4759, 0
        %v4809 = vsel %vm1051, %v4760, 0
        %v4812 = vsel %vm1534, %v4762, 0
        %4814 = vmatprep.subr.bf16.mxu0 0
        %4815 = vmatpush1.bf16.msra.mxu0 %v4812
        %4816 = vmatprep.subr.bf16.mxu0 0
        %4817 = vmatpush1.bf16.msra.mxu0 0
        %4818 = vmatprep.subr.bf16.mxu0 0
        %4819 = vmatpush1.bf16.msra.mxu0 0
        %4820 = vmatprep.subr.bf16.mxu0 0
        %4821 = vmatpush1.bf16.msra.mxu0 0
        %4822 = vmatprep.subr.bf16.mxu0 0
        %4823 = vmatpush1.bf16.msra.mxu0 0
        %4824 = vmatprep.subr.bf16.mxu0 0
        %4825 = vmatpush1.bf16.msra.mxu0 0
        %4826 = vmatprep.subr.bf16.mxu0 0
        %4827 = vmatpush1.bf16.msra.mxu0 0
        %4828 = vmatprep.subr.bf16.mxu0 0
        %4829 = vmatpush1.bf16.msra.mxu0 0
        %4830 = vmatprep.subr.bf16.mxu0 0
        %4831 = vmatpush1.bf16.msra.mxu0 0
        %4832 = vmatprep.subr.bf16.mxu0 0
        %4833 = vmatpush1.bf16.msra.mxu0 0
        %4834 = vmatprep.subr.bf16.mxu0 0
        %4835 = vmatpush1.bf16.msra.mxu0 0
        %4836 = vmatprep.subr.bf16.mxu0 0
        %4837 = vmatpush1.bf16.msra.mxu0 0
        %4838 = vmatprep.subr.bf16.mxu0 0
        %4839 = vmatpush1.bf16.msra.mxu0 0
        %4840 = vmatprep.subr.bf16.mxu0 0
        %4841 = vmatpush1.bf16.msra.mxu0 0
        %4842 = vmatprep.subr.bf16.mxu0 0
        %4843 = vmatpush1.bf16.msra.mxu0 0
        %4844 = vmatprep.subr.bf16.mxu0 0
        %4845 = vmatpush1.bf16.msra.mxu0 0
        %4846 = vmatprep.mubr.bf16.mxu0 0
        %4847 = vmatmul.mubr.bf16.gmra.mrb[0].mxu0 %v4764
        %v4848 = vpop.f32.mrb[0].mxu0
        %v4849 = vadd.f32 0.0, %v4848
        %v4850 = vpop.f32.mrb[0].mxu0
        %v4851 = vpop.f32.mrb[0].mxu0
        %v4852 = vadd.f32 0.0, %v4851
        %v4853 = vpop.f32.mrb[0].mxu0
        %4854 = vmatprep.mubr.bf16.mxu0 0
        %4855 = vmatmul.mubr.bf16.gmra.mrb[0].mxu0 %v4767
        %v4856 = vpop.f32.mrb[0].mxu0
        %v4857 = vadd.f32 0.0, %v4856
        %v4858 = vpop.f32.mrb[0].mxu0
        %v4859 = vpop.f32.mrb[0].mxu0
        %v4860 = vadd.f32 0.0, %v4859
        %v4861 = vpop.f32.mrb[0].mxu0
        %4862 = vmatprep.mubr.bf16.mxu0 0
        %4863 = vmatmul.mubr.bf16.gmra.mrb[0].mxu0 %v4770
        %v4864 = vpop.f32.mrb[0].mxu0
        %v4865 = vadd.f32 0.0, %v4864
        %v4866 = vpop.f32.mrb[0].mxu0
        %v4867 = vpop.f32.mrb[0].mxu0
        %v4868 = vadd.f32 0.0, %v4867
        %v4869 = vpop.f32.mrb[0].mxu0
        %4870 = vmatprep.mubr.bf16.mxu0 0
        %4871 = vmatmul.mubr.bf16.gmra.mrb[0].mxu0 %v4773
        %v4872 = vpop.f32.mrb[0].mxu0
        %v4873 = vadd.f32 0.0, %v4872
        %v4874 = vpop.f32.mrb[0].mxu0
        %v4875 = vpop.f32.mrb[0].mxu0
        %v4876 = vadd.f32 0.0, %v4875
        %v4877 = vpop.f32.mrb[0].mxu0
        %4878 = vmatprep.mubr.bf16.mxu0 0
        %4879 = vmatmul.mubr.bf16.gmra.mrb[0].mxu0 %v4776
        %v4880 = vpop.f32.mrb[0].mxu0
        %v4881 = vadd.f32 0.0, %v4880
        %v4882 = vpop.f32.mrb[0].mxu0
        %v4883 = vpop.f32.mrb[0].mxu0
        %v4884 = vadd.f32 0.0, %v4883
        %v4885 = vpop.f32.mrb[0].mxu0
        %4886 = vmatprep.mubr.bf16.mxu0 0
        %4887 = vmatmul.mubr.bf16.gmra.mrb[0].mxu0 %v4779
        %v4888 = vpop.f32.mrb[0].mxu0
        %v4889 = vadd.f32 0.0, %v4888
        %v4890 = vpop.f32.mrb[0].mxu0
        %v4891 = vpop.f32.mrb[0].mxu0
        %v4892 = vadd.f32 0.0, %v4891
        %v4893 = vpop.f32.mrb[0].mxu0
        %4894 = vmatprep.mubr.bf16.mxu0 0
        %4895 = vmatmul.mubr.bf16.gmra.mrb[0].mxu0 %v4782
        %v4896 = vpop.f32.mrb[0].mxu0
        %v4897 = vadd.f32 0.0, %v4896
        %v4898 = vpop.f32.mrb[0].mxu0
        %v4899 = vpop.f32.mrb[0].mxu0
        %v4900 = vadd.f32 0.0, %v4899
        %v4901 = vpop.f32.mrb[0].mxu0
        %4902 = vmatprep.mubr.bf16.mxu0 0
        %4903 = vmatmul.mubr.bf16.gmra.mrb[0].mxu0 %v4785
        %v4904 = vpop.f32.mrb[0].mxu0
        %v4905 = vadd.f32 0.0, %v4904
        %v4906 = vpop.f32.mrb[0].mxu0
        %v4907 = vpop.f32.mrb[0].mxu0
        %v4908 = vadd.f32 0.0, %v4907
        %v4909 = vpop.f32.mrb[0].mxu0
        %4910 = vmatprep.mubr.bf16.mxu0 0
        %4911 = vmatmul.mubr.bf16.gmra.mrb[0].mxu0 %v4788
        %v4912 = vpop.f32.mrb[0].mxu0
        %v4913 = vadd.f32 0.0, %v4912
        %v4914 = vpop.f32.mrb[0].mxu0
        %v4915 = vpop.f32.mrb[0].mxu0
        %v4916 = vadd.f32 0.0, %v4915
        %v4917 = vpop.f32.mrb[0].mxu0
        %4918 = vmatprep.mubr.bf16.mxu0 0
        %4919 = vmatmul.mubr.bf16.gmra.mrb[0].mxu0 %v4791
        %v4920 = vpop.f32.mrb[0].mxu0
        %v4921 = vadd.f32 0.0, %v4920
        %v4922 = vpop.f32.mrb[0].mxu0
        %v4923 = vpop.f32.mrb[0].mxu0
        %v4924 = vadd.f32 0.0, %v4923
        %v4925 = vpop.f32.mrb[0].mxu0
        %4926 = vmatprep.mubr.bf16.mxu0 0
        %4927 = vmatmul.mubr.bf16.gmra.mrb[0].mxu0 %v4794
        %v4928 = vpop.f32.mrb[0].mxu0
        %v4929 = vadd.f32 0.0, %v4928
        %v4930 = vpop.f32.mrb[0].mxu0
        %v4931 = vpop.f32.mrb[0].mxu0
        %v4932 = vadd.f32 0.0, %v4931
        %v4933 = vpop.f32.mrb[0].mxu0
        %4934 = vmatprep.mubr.bf16.mxu0 0
        %4935 = vmatmul.mubr.bf16.gmra.mrb[0].mxu0 %v4797
        %v4936 = vpop.f32.mrb[0].mxu0
        %v4937 = vadd.f32 0.0, %v4936
        %v4938 = vpop.f32.mrb[0].mxu0
        %v4939 = vpop.f32.mrb[0].mxu0
        %v4940 = vadd.f32 0.0, %v4939
        %v4941 = vpop.f32.mrb[0].mxu0
        %4942 = vmatprep.mubr.bf16.mxu0 0
        %4943 = vmatmul.mubr.bf16.gmra.mrb[0].mxu0 %v4800
        %v4944 = vpop.f32.mrb[0].mxu0
        %v4945 = vadd.f32 0.0, %v4944
        %v4946 = vpop.f32.mrb[0].mxu0
        %v4947 = vpop.f32.mrb[0].mxu0
        %v4948 = vadd.f32 0.0, %v4947
        %v4949 = vpop.f32.mrb[0].mxu0
        %4950 = vmatprep.mubr.bf16.mxu0 0
        %4951 = vmatmul.mubr.bf16.gmra.mrb[0].mxu0 %v4803
        %v4952 = vpop.f32.mrb[0].mxu0
        %v4953 = vadd.f32 0.0, %v4952
        %v4954 = vpop.f32.mrb[0].mxu0
        %v4955 = vpop.f32.mrb[0].mxu0
        %v4956 = vadd.f32 0.0, %v4955
        %v4957 = vpop.f32.mrb[0].mxu0
        %4958 = vmatprep.mubr.bf16.mxu0 0
        %4959 = vmatmul.mubr.bf16.gmra.mrb[0].mxu0 %v4806
        %v4960 = vpop.f32.mrb[0].mxu0
        %v4961 = vadd.f32 0.0, %v4960
        %v4962 = vpop.f32.mrb[0].mxu0
        %v4963 = vpop.f32.mrb[0].mxu0
        %v4964 = vadd.f32 0.0, %v4963
        %v4965 = vpop.f32.mrb[0].mxu0
        %4966 = vmatprep.mubr.bf16.mxu0 0
        %4967 = vmatmul.mubr.bf16.gmra.mrb[0].mxu0 %v4809
        %v4968 = vpop.f32.mrb[0].mxu0
        %v4969 = vadd.f32 0.0, %v4968
        %v4970 = vpop.f32.mrb[0].mxu0
        %v4971 = vpop.f32.mrb[0].mxu0
        %v4972 = vadd.f32 0.0, %v4971
        %v4973 = vpop.f32.mrb[0].mxu0
        %4974 = vdwg.mxu0
        %v4975 = vadd.f32 %v3904, %v4849
        %v4976 = vadd.f32 %v3905, %v4852
        %v4977 = vadd.f32 %v3906, %v4857
        %v4978 = vadd.f32 %v3907, %v4860
        %v4979 = vadd.f32 %v3908, %v4865
        %v4980 = vadd.f32 %v3909, %v4868
        %v4981 = vadd.f32 %v3910, %v4873
        %v4982 = vadd.f32 %v3911, %v4876
        %v4983 = vadd.f32 %v3912, %v4881
        %v4984 = vadd.f32 %v3913, %v4884
        %v4985 = vadd.f32 %v3914, %v4889
        %v4986 = vadd.f32 %v3915, %v4892
        %v4987 = vadd.f32 %v3916, %v4897
        %v4988 = vadd.f32 %v3917, %v4900
        %v4989 = vadd.f32 %v3918, %v4905
        %v4990 = vadd.f32 %v3919, %v4908
        %v4991 = vadd.f32 %v3920, %v4913
        %v4992 = vadd.f32 %v3921, %v4916
        %v4993 = vadd.f32 %v3922, %v4921
        %v4994 = vadd.f32 %v3923, %v4924
        %v4995 = vadd.f32 %v3924, %v4929
        %v4996 = vadd.f32 %v3925, %v4932
        %v4997 = vadd.f32 %v3926, %v4937
        %v4998 = vadd.f32 %v3927, %v4940
        %v4999 = vadd.f32 %v3928, %v4945
        %v5000 = vadd.f32 %v3929, %v4948
        %v5001 = vadd.f32 %v3930, %v4953
        %v5002 = vadd.f32 %v3931, %v4956
        %v5003 = vadd.f32 %v3932, %v4961
        %v5004 = vadd.f32 %v3933, %v4964
        %v5005 = vadd.f32 %v3934, %v4969
        %v5006 = vadd.f32 %v3935, %v4972
        %v5007 = vsel %vm659, %v4975, 0.0
        %5008 = vadd.xlane.f32.xlu0 %v5007
        %v5009 = vpop.xlane.xlu0 %5008
        %v5010 = vsel %vm659, %v4976, 0.0
        %5011 = vadd.xlane.f32.xlu0 %v5010
        %v5012 = vpop.xlane.xlu0 %5011
        %v5013 = vsel %vm659, %v4977, 0.0
        %5014 = vadd.xlane.f32.xlu0 %v5013
        %v5015 = vpop.xlane.xlu0 %5014
        %v5016 = vsel %vm659, %v4978, 0.0
        %5017 = vadd.xlane.f32.xlu0 %v5016
        %v5018 = vpop.xlane.xlu0 %5017
        %v5019 = vsel %vm659, %v4979, 0.0
        %5020 = vadd.xlane.f32.xlu0 %v5019
        %v5021 = vpop.xlane.xlu0 %5020
        %v5022 = vsel %vm659, %v4980, 0.0
        %5023 = vadd.xlane.f32.xlu0 %v5022
        %v5024 = vpop.xlane.xlu0 %5023
        %v5025 = vsel %vm659, %v4981, 0.0
        %5026 = vadd.xlane.f32.xlu0 %v5025
        %v5027 = vpop.xlane.xlu0 %5026
        %v5028 = vsel %vm659, %v4982, 0.0
        %5029 = vadd.xlane.f32.xlu0 %v5028
        %v5030 = vpop.xlane.xlu0 %5029
        %v5031 = vsel %vm659, %v4983, 0.0
        %5032 = vadd.xlane.f32.xlu0 %v5031
        %v5033 = vpop.xlane.xlu0 %5032
        %v5034 = vsel %vm659, %v4984, 0.0
        %5035 = vadd.xlane.f32.xlu0 %v5034
        %v5036 = vpop.xlane.xlu0 %5035
        %v5037 = vsel %vm659, %v4985, 0.0
        %5038 = vadd.xlane.f32.xlu0 %v5037
        %v5039 = vpop.xlane.xlu0 %5038
        %v5040 = vsel %vm659, %v4986, 0.0
        %5041 = vadd.xlane.f32.xlu0 %v5040
        %v5042 = vpop.xlane.xlu0 %5041
        %v5043 = vsel %vm659, %v4987, 0.0
        %5044 = vadd.xlane.f32.xlu0 %v5043
        %v5045 = vpop.xlane.xlu0 %5044
        %v5046 = vsel %vm659, %v4988, 0.0
        %5047 = vadd.xlane.f32.xlu0 %v5046
        %v5048 = vpop.xlane.xlu0 %5047
        %v5049 = vsel %vm659, %v4989, 0.0
        %5050 = vadd.xlane.f32.xlu0 %v5049
        %v5051 = vpop.xlane.xlu0 %5050
        %v5052 = vsel %vm659, %v4990, 0.0
        %5053 = vadd.xlane.f32.xlu0 %v5052
        %v5054 = vpop.xlane.xlu0 %5053
        %v5055 = vsel %vm659, %v4991, 0.0
        %5056 = vadd.xlane.f32.xlu0 %v5055
        %v5057 = vpop.xlane.xlu0 %5056
        %v5058 = vsel %vm659, %v4992, 0.0
        %5059 = vadd.xlane.f32.xlu0 %v5058
        %v5060 = vpop.xlane.xlu0 %5059
        %v5061 = vsel %vm659, %v4993, 0.0
        %5062 = vadd.xlane.f32.xlu0 %v5061
        %v5063 = vpop.xlane.xlu0 %5062
        %v5064 = vsel %vm659, %v4994, 0.0
        %5065 = vadd.xlane.f32.xlu0 %v5064
        %v5066 = vpop.xlane.xlu0 %5065
        %v5067 = vsel %vm659, %v4995, 0.0
        %5068 = vadd.xlane.f32.xlu0 %v5067
        %v5069 = vpop.xlane.xlu0 %5068
        %v5070 = vsel %vm659, %v4996, 0.0
        %5071 = vadd.xlane.f32.xlu0 %v5070
        %v5072 = vpop.xlane.xlu0 %5071
        %v5073 = vsel %vm659, %v4997, 0.0
        %5074 = vadd.xlane.f32.xlu0 %v5073
        %v5075 = vpop.xlane.xlu0 %5074
        %v5076 = vsel %vm659, %v4998, 0.0
        %5077 = vadd.xlane.f32.xlu0 %v5076
        %v5078 = vpop.xlane.xlu0 %5077
        %v5079 = vsel %vm659, %v4999, 0.0
        %5080 = vadd.xlane.f32.xlu0 %v5079
        %v5081 = vpop.xlane.xlu0 %5080
        %v5082 = vsel %vm659, %v5000, 0.0
        %5083 = vadd.xlane.f32.xlu0 %v5082
        %v5084 = vpop.xlane.xlu0 %5083
        %v5085 = vsel %vm659, %v5001, 0.0
        %5086 = vadd.xlane.f32.xlu0 %v5085
        %v5087 = vpop.xlane.xlu0 %5086
        %v5088 = vsel %vm659, %v5002, 0.0
        %5089 = vadd.xlane.f32.xlu0 %v5088
        %v5090 = vpop.xlane.xlu0 %5089
        %v5091 = vsel %vm659, %v5003, 0.0
        %5092 = vadd.xlane.f32.xlu0 %v5091
        %v5093 = vpop.xlane.xlu0 %5092
        %v5094 = vsel %vm659, %v5004, 0.0
        %5095 = vadd.xlane.f32.xlu0 %v5094
        %v5096 = vpop.xlane.xlu0 %5095
        %v5097 = vsel %vm659, %v5005, 0.0
        %5098 = vadd.xlane.f32.xlu0 %v5097
        %v5099 = vpop.xlane.xlu0 %5098
        %v5100 = vsel %vm659, %v5006, 0.0
        %5101 = vadd.xlane.f32.xlu0 %v5100
        %v5102 = vpop.xlane.xlu0 %5101
        %v5103 = vrcp.pop 32.0
        %v5104 = vmul.f32 %v5009, %v5103
        %v5105 = vmul.f32 %v5012, %v5103
        %v5106 = vmul.f32 %v5015, %v5103
        %v5107 = vmul.f32 %v5018, %v5103
        %v5108 = vmul.f32 %v5021, %v5103
        %v5109 = vmul.f32 %v5024, %v5103
        %v5110 = vmul.f32 %v5027, %v5103
        %v5111 = vmul.f32 %v5030, %v5103
        %v5112 = vmul.f32 %v5033, %v5103
        %v5113 = vmul.f32 %v5036, %v5103
        %v5114 = vmul.f32 %v5039, %v5103
        %v5115 = vmul.f32 %v5042, %v5103
        %v5116 = vmul.f32 %v5045, %v5103
        %v5117 = vmul.f32 %v5048, %v5103
        %v5118 = vmul.f32 %v5051, %v5103
        %v5119 = vmul.f32 %v5054, %v5103
        %v5120 = vmul.f32 %v5057, %v5103
        %v5121 = vmul.f32 %v5060, %v5103
        %v5122 = vmul.f32 %v5063, %v5103
        %v5123 = vmul.f32 %v5066, %v5103
        %v5124 = vmul.f32 %v5069, %v5103
        %v5125 = vmul.f32 %v5072, %v5103
        %v5126 = vmul.f32 %v5075, %v5103
        %v5127 = vmul.f32 %v5078, %v5103
        %v5128 = vmul.f32 %v5081, %v5103
        %v5129 = vmul.f32 %v5084, %v5103
        %v5130 = vmul.f32 %v5087, %v5103
        %v5131 = vmul.f32 %v5090, %v5103
        %v5132 = vmul.f32 %v5093, %v5103
        %v5133 = vmul.f32 %v5096, %v5103
        %v5134 = vmul.f32 %v5099, %v5103
        %v5135 = vmul.f32 %v5102, %v5103
        %v5136 = vsub.f32 %v4975, %v5104
        %v5137 = vsub.f32 %v4976, %v5105
        %v5138 = vsub.f32 %v4977, %v5106
        %v5139 = vsub.f32 %v4978, %v5107
        %v5140 = vsub.f32 %v4979, %v5108
        %v5141 = vsub.f32 %v4980, %v5109
        %v5142 = vsub.f32 %v4981, %v5110
        %v5143 = vsub.f32 %v4982, %v5111
        %v5144 = vsub.f32 %v4983, %v5112
        %v5145 = vsub.f32 %v4984, %v5113
        %v5146 = vsub.f32 %v4985, %v5114
        %v5147 = vsub.f32 %v4986, %v5115
        %v5148 = vsub.f32 %v4987, %v5116
        %v5149 = vsub.f32 %v4988, %v5117
        %v5150 = vsub.f32 %v4989, %v5118
        %v5151 = vsub.f32 %v4990, %v5119
        %v5152 = vsub.f32 %v4991, %v5120
        %v5153 = vsub.f32 %v4992, %v5121
        %v5154 = vsub.f32 %v4993, %v5122
        %v5155 = vsub.f32 %v4994, %v5123
        %v5156 = vsub.f32 %v4995, %v5124
        %v5157 = vsub.f32 %v4996, %v5125
        %v5158 = vsub.f32 %v4997, %v5126
        %v5159 = vsub.f32 %v4998, %v5127
        %v5160 = vsub.f32 %v4999, %v5128
        %v5161 = vsub.f32 %v5000, %v5129
        %v5162 = vsub.f32 %v5001, %v5130
        %v5163 = vsub.f32 %v5002, %v5131
        %v5164 = vsub.f32 %v5003, %v5132
        %v5165 = vsub.f32 %v5004, %v5133
        %v5166 = vsub.f32 %v5005, %v5134
        %v5167 = vsub.f32 %v5006, %v5135
        %v5168 = vmul.f32 %v5136, %v5136
        %v5169 = vmul.f32 %v5137, %v5137
        %v5170 = vmul.f32 %v5138, %v5138
        %v5171 = vmul.f32 %v5139, %v5139
        %v5172 = vmul.f32 %v5140, %v5140
        %v5173 = vmul.f32 %v5141, %v5141
        %v5174 = vmul.f32 %v5142, %v5142
        %v5175 = vmul.f32 %v5143, %v5143
        %v5176 = vmul.f32 %v5144, %v5144
        %v5177 = vmul.f32 %v5145, %v5145
        %v5178 = vmul.f32 %v5146, %v5146
        %v5179 = vmul.f32 %v5147, %v5147
        %v5180 = vmul.f32 %v5148, %v5148
        %v5181 = vmul.f32 %v5149, %v5149
        %v5182 = vmul.f32 %v5150, %v5150
        %v5183 = vmul.f32 %v5151, %v5151
        %v5184 = vmul.f32 %v5152, %v5152
        %v5185 = vmul.f32 %v5153, %v5153
        %v5186 = vmul.f32 %v5154, %v5154
        %v5187 = vmul.f32 %v5155, %v5155
        %v5188 = vmul.f32 %v5156, %v5156
        %v5189 = vmul.f32 %v5157, %v5157
        %v5190 = vmul.f32 %v5158, %v5158
        %v5191 = vmul.f32 %v5159, %v5159
        %v5192 = vmul.f32 %v5160, %v5160
        %v5193 = vmul.f32 %v5161, %v5161
        %v5194 = vmul.f32 %v5162, %v5162
        %v5195 = vmul.f32 %v5163, %v5163
        %v5196 = vmul.f32 %v5164, %v5164
        %v5197 = vmul.f32 %v5165, %v5165
        %v5198 = vmul.f32 %v5166, %v5166
        %v5199 = vmul.f32 %v5167, %v5167
        %v5200 = vsel %vm659, %v5168, 0.0
        %5201 = vadd.xlane.f32.xlu0 %v5200
        %v5202 = vpop.xlane.xlu0 %5201
        %v5203 = vsel %vm659, %v5169, 0.0
        %5204 = vadd.xlane.f32.xlu0 %v5203
        %v5205 = vpop.xlane.xlu0 %5204
        %v5206 = vsel %vm659, %v5170, 0.0
        %5207 = vadd.xlane.f32.xlu0 %v5206
        %v5208 = vpop.xlane.xlu0 %5207
        %v5209 = vsel %vm659, %v5171, 0.0
        %5210 = vadd.xlane.f32.xlu0 %v5209
        %v5211 = vpop.xlane.xlu0 %5210
        %v5212 = vsel %vm659, %v5172, 0.0
        %5213 = vadd.xlane.f32.xlu0 %v5212
        %v5214 = vpop.xlane.xlu0 %5213
        %v5215 = vsel %vm659, %v5173, 0.0
        %5216 = vadd.xlane.f32.xlu0 %v5215
        %v5217 = vpop.xlane.xlu0 %5216
        %v5218 = vsel %vm659, %v5174, 0.0
        %5219 = vadd.xlane.f32.xlu0 %v5218
        %v5220 = vpop.xlane.xlu0 %5219
        %v5221 = vsel %vm659, %v5175, 0.0
        %5222 = vadd.xlane.f32.xlu0 %v5221
        %v5223 = vpop.xlane.xlu0 %5222
        %v5224 = vsel %vm659, %v5176, 0.0
        %5225 = vadd.xlane.f32.xlu0 %v5224
        %v5226 = vpop.xlane.xlu0 %5225
        %v5227 = vsel %vm659, %v5177, 0.0
        %5228 = vadd.xlane.f32.xlu0 %v5227
        %v5229 = vpop.xlane.xlu0 %5228
        %v5230 = vsel %vm659, %v5178, 0.0
        %5231 = vadd.xlane.f32.xlu0 %v5230
        %v5232 = vpop.xlane.xlu0 %5231
        %v5233 = vsel %vm659, %v5179, 0.0
        %5234 = vadd.xlane.f32.xlu0 %v5233
        %v5235 = vpop.xlane.xlu0 %5234
        %v5236 = vsel %vm659, %v5180, 0.0
        %5237 = vadd.xlane.f32.xlu0 %v5236
        %v5238 = vpop.xlane.xlu0 %5237
        %v5239 = vsel %vm659, %v5181, 0.0
        %5240 = vadd.xlane.f32.xlu0 %v5239
        %v5241 = vpop.xlane.xlu0 %5240
        %v5242 = vsel %vm659, %v5182, 0.0
        %5243 = vadd.xlane.f32.xlu0 %v5242
        %v5244 = vpop.xlane.xlu0 %5243
        %v5245 = vsel %vm659, %v5183, 0.0
        %5246 = vadd.xlane.f32.xlu0 %v5245
        %v5247 = vpop.xlane.xlu0 %5246
        %v5248 = vsel %vm659, %v5184, 0.0
        %5249 = vadd.xlane.f32.xlu0 %v5248
        %v5250 = vpop.xlane.xlu0 %5249
        %v5251 = vsel %vm659, %v5185, 0.0
        %5252 = vadd.xlane.f32.xlu0 %v5251
        %v5253 = vpop.xlane.xlu0 %5252
        %v5254 = vsel %vm659, %v5186, 0.0
        %5255 = vadd.xlane.f32.xlu0 %v5254
        %v5256 = vpop.xlane.xlu0 %5255
        %v5257 = vsel %vm659, %v5187, 0.0
        %5258 = vadd.xlane.f32.xlu0 %v5257
        %v5259 = vpop.xlane.xlu0 %5258
        %v5260 = vsel %vm659, %v5188, 0.0
        %5261 = vadd.xlane.f32.xlu0 %v5260
        %v5262 = vpop.xlane.xlu0 %5261
        %v5263 = vsel %vm659, %v5189, 0.0
        %5264 = vadd.xlane.f32.xlu0 %v5263
        %v5265 = vpop.xlane.xlu0 %5264
        %v5266 = vsel %vm659, %v5190, 0.0
        %5267 = vadd.xlane.f32.xlu0 %v5266
        %v5268 = vpop.xlane.xlu0 %5267
        %v5269 = vsel %vm659, %v5191, 0.0
        %5270 = vadd.xlane.f32.xlu0 %v5269
        %v5271 = vpop.xlane.xlu0 %5270
        %v5272 = vsel %vm659, %v5192, 0.0
        %5273 = vadd.xlane.f32.xlu0 %v5272
        %v5274 = vpop.xlane.xlu0 %5273
        %v5275 = vsel %vm659, %v5193, 0.0
        %5276 = vadd.xlane.f32.xlu0 %v5275
        %v5277 = vpop.xlane.xlu0 %5276
        %v5278 = vsel %vm659, %v5194, 0.0
        %5279 = vadd.xlane.f32.xlu0 %v5278
        %v5280 = vpop.xlane.xlu0 %5279
        %v5281 = vsel %vm659, %v5195, 0.0
        %5282 = vadd.xlane.f32.xlu0 %v5281
        %v5283 = vpop.xlane.xlu0 %5282
        %v5284 = vsel %vm659, %v5196, 0.0
        %5285 = vadd.xlane.f32.xlu0 %v5284
        %v5286 = vpop.xlane.xlu0 %5285
        %v5287 = vsel %vm659, %v5197, 0.0
        %5288 = vadd.xlane.f32.xlu0 %v5287
        %v5289 = vpop.xlane.xlu0 %5288
        %v5290 = vsel %vm659, %v5198, 0.0
        %5291 = vadd.xlane.f32.xlu0 %v5290
        %v5292 = vpop.xlane.xlu0 %5291
        %v5293 = vsel %vm659, %v5199, 0.0
        %5294 = vadd.xlane.f32.xlu0 %v5293
        %v5295 = vpop.xlane.xlu0 %5294
        %v5296 = vmul.f32 %v5202, %v5103
        %v5297 = vmul.f32 %v5205, %v5103
        %v5298 = vmul.f32 %v5208, %v5103
        %v5299 = vmul.f32 %v5211, %v5103
        %v5300 = vmul.f32 %v5214, %v5103
        %v5301 = vmul.f32 %v5217, %v5103
        %v5302 = vmul.f32 %v5220, %v5103
        %v5303 = vmul.f32 %v5223, %v5103
        %v5304 = vmul.f32 %v5226, %v5103
        %v5305 = vmul.f32 %v5229, %v5103
        %v5306 = vmul.f32 %v5232, %v5103
        %v5307 = vmul.f32 %v5235, %v5103
        %v5308 = vmul.f32 %v5238, %v5103
        %v5309 = vmul.f32 %v5241, %v5103
        %v5310 = vmul.f32 %v5244, %v5103
        %v5311 = vmul.f32 %v5247, %v5103
        %v5312 = vmul.f32 %v5250, %v5103
        %v5313 = vmul.f32 %v5253, %v5103
        %v5314 = vmul.f32 %v5256, %v5103
        %v5315 = vmul.f32 %v5259, %v5103
        %v5316 = vmul.f32 %v5262, %v5103
        %v5317 = vmul.f32 %v5265, %v5103
        %v5318 = vmul.f32 %v5268, %v5103
        %v5319 = vmul.f32 %v5271, %v5103
        %v5320 = vmul.f32 %v5274, %v5103
        %v5321 = vmul.f32 %v5277, %v5103
        %v5322 = vmul.f32 %v5280, %v5103
        %v5323 = vmul.f32 %v5283, %v5103
        %v5324 = vmul.f32 %v5286, %v5103
        %v5325 = vmul.f32 %v5289, %v5103
        %v5326 = vmul.f32 %v5292, %v5103
        %v5327 = vmul.f32 %v5295, %v5103
        %v5328 = vadd.f32 %v5296, 1e-06
        %v5329 = vadd.f32 %v5297, 1e-06
        %v5330 = vadd.f32 %v5298, 1e-06
        %v5331 = vadd.f32 %v5299, 1e-06
        %v5332 = vadd.f32 %v5300, 1e-06
        %v5333 = vadd.f32 %v5301, 1e-06
        %v5334 = vadd.f32 %v5302, 1e-06
        %v5335 = vadd.f32 %v5303, 1e-06
        %v5336 = vadd.f32 %v5304, 1e-06
        %v5337 = vadd.f32 %v5305, 1e-06
        %v5338 = vadd.f32 %v5306, 1e-06
        %v5339 = vadd.f32 %v5307, 1e-06
        %v5340 = vadd.f32 %v5308, 1e-06
        %v5341 = vadd.f32 %v5309, 1e-06
        %v5342 = vadd.f32 %v5310, 1e-06
        %v5343 = vadd.f32 %v5311, 1e-06
        %v5344 = vadd.f32 %v5312, 1e-06
        %v5345 = vadd.f32 %v5313, 1e-06
        %v5346 = vadd.f32 %v5314, 1e-06
        %v5347 = vadd.f32 %v5315, 1e-06
        %v5348 = vadd.f32 %v5316, 1e-06
        %v5349 = vadd.f32 %v5317, 1e-06
        %v5350 = vadd.f32 %v5318, 1e-06
        %v5351 = vadd.f32 %v5319, 1e-06
        %v5352 = vadd.f32 %v5320, 1e-06
        %v5353 = vadd.f32 %v5321, 1e-06
        %v5354 = vadd.f32 %v5322, 1e-06
        %v5355 = vadd.f32 %v5323, 1e-06
        %v5356 = vadd.f32 %v5324, 1e-06
        %v5357 = vadd.f32 %v5325, 1e-06
        %v5358 = vadd.f32 %v5326, 1e-06
        %v5359 = vadd.f32 %v5327, 1e-06
        %v5360 = vrsqrt.pop %v5328
        %v5361 = vrsqrt.pop %v5329
        %v5362 = vrsqrt.pop %v5330
        %v5363 = vrsqrt.pop %v5331
        %v5364 = vrsqrt.pop %v5332
        %v5365 = vrsqrt.pop %v5333
        %v5366 = vrsqrt.pop %v5334
        %v5367 = vrsqrt.pop %v5335
        %v5368 = vrsqrt.pop %v5336
        %v5369 = vrsqrt.pop %v5337
        %v5370 = vrsqrt.pop %v5338
        %v5371 = vrsqrt.pop %v5339
        %v5372 = vrsqrt.pop %v5340
        %v5373 = vrsqrt.pop %v5341
        %v5374 = vrsqrt.pop %v5342
        %v5375 = vrsqrt.pop %v5343
        %v5376 = vrsqrt.pop %v5344
        %v5377 = vrsqrt.pop %v5345
        %v5378 = vrsqrt.pop %v5346
        %v5379 = vrsqrt.pop %v5347
        %v5380 = vrsqrt.pop %v5348
        %v5381 = vrsqrt.pop %v5349
        %v5382 = vrsqrt.pop %v5350
        %v5383 = vrsqrt.pop %v5351
        %v5384 = vrsqrt.pop %v5352
        %v5385 = vrsqrt.pop %v5353
        %v5386 = vrsqrt.pop %v5354
        %v5387 = vrsqrt.pop %v5355
        %v5388 = vrsqrt.pop %v5356
        %v5389 = vrsqrt.pop %v5357
        %v5390 = vrsqrt.pop %v5358
        %v5391 = vrsqrt.pop %v5359
        %v5392 = vmul.f32 %v5136, %v5360
        %v5393 = vmul.f32 %v5137, %v5361
        %v5394 = vmul.f32 %v5138, %v5362
        %v5395 = vmul.f32 %v5139, %v5363
        %v5396 = vmul.f32 %v5140, %v5364
        %v5397 = vmul.f32 %v5141, %v5365
        %v5398 = vmul.f32 %v5142, %v5366
        %v5399 = vmul.f32 %v5143, %v5367
        %v5400 = vmul.f32 %v5144, %v5368
        %v5401 = vmul.f32 %v5145, %v5369
        %v5402 = vmul.f32 %v5146, %v5370
        %v5403 = vmul.f32 %v5147, %v5371
        %v5404 = vmul.f32 %v5148, %v5372
        %v5405 = vmul.f32 %v5149, %v5373
        %v5406 = vmul.f32 %v5150, %v5374
        %v5407 = vmul.f32 %v5151, %v5375
        %v5408 = vmul.f32 %v5152, %v5376
        %v5409 = vmul.f32 %v5153, %v5377
        %v5410 = vmul.f32 %v5154, %v5378
        %v5411 = vmul.f32 %v5155, %v5379
        %v5412 = vmul.f32 %v5156, %v5380
        %v5413 = vmul.f32 %v5157, %v5381
        %v5414 = vmul.f32 %v5158, %v5382
        %v5415 = vmul.f32 %v5159, %v5383
        %v5416 = vmul.f32 %v5160, %v5384
        %v5417 = vmul.f32 %v5161, %v5385
        %v5418 = vmul.f32 %v5162, %v5386
        %v5419 = vmul.f32 %v5163, %v5387
        %v5420 = vmul.f32 %v5164, %v5388
        %v5421 = vmul.f32 %v5165, %v5389
        %v5422 = vmul.f32 %v5166, %v5390
        %v5423 = vmul.f32 %v5167, %v5391
        %v5424 = vld [vmem:[%s12] sm:$0x1]
        %v5426 = vlaneseq
        %v5427 = vshrl.u32 %v5426, 7
        %v5428 = vsub.s32 0, %v5427
        %v5429 = vrot.slane %v5424, %v5428
        %v5431 = vmul.f32 %v5392, %v5429
        %v5432 = vmul.f32 %v5393, %v5429
        %v5433 = vmul.f32 %v5394, %v5429
        %v5434 = vmul.f32 %v5395, %v5429
        %v5435 = vmul.f32 %v5396, %v5429
        %v5436 = vmul.f32 %v5397, %v5429
        %v5437 = vmul.f32 %v5398, %v5429
        %v5438 = vmul.f32 %v5399, %v5429
        %v5439 = vmul.f32 %v5400, %v5429
        %v5440 = vmul.f32 %v5401, %v5429
        %v5441 = vmul.f32 %v5402, %v5429
        %v5442 = vmul.f32 %v5403, %v5429
        %v5443 = vmul.f32 %v5404, %v5429
        %v5444 = vmul.f32 %v5405, %v5429
        %v5445 = vmul.f32 %v5406, %v5429
        %v5446 = vmul.f32 %v5407, %v5429
        %v5447 = vmul.f32 %v5408, %v5429
        %v5448 = vmul.f32 %v5409, %v5429
        %v5449 = vmul.f32 %v5410, %v5429
        %v5450 = vmul.f32 %v5411, %v5429
        %v5451 = vmul.f32 %v5412, %v5429
        %v5452 = vmul.f32 %v5413, %v5429
        %v5453 = vmul.f32 %v5414, %v5429
        %v5454 = vmul.f32 %v5415, %v5429
        %v5455 = vmul.f32 %v5416, %v5429
        %v5456 = vmul.f32 %v5417, %v5429
        %v5457 = vmul.f32 %v5418, %v5429
        %v5458 = vmul.f32 %v5419, %v5429
        %v5459 = vmul.f32 %v5420, %v5429
        %v5460 = vmul.f32 %v5421, %v5429
        %v5461 = vmul.f32 %v5422, %v5429
        %v5462 = vmul.f32 %v5423, %v5429
        %v5463 = vld [vmem:[%s13] sm:$0x1]
        %v5465 = vlaneseq
        %v5466 = vshrl.u32 %v5465, 7
        %v5467 = vsub.s32 0, %v5466
        %v5468 = vrot.slane %v5463, %v5467
        %v5470 = vadd.f32 %v5431, %v5468
        %v5471 = vadd.f32 %v5432, %v5468
        %v5472 = vadd.f32 %v5433, %v5468
        %v5473 = vadd.f32 %v5434, %v5468
        %v5474 = vadd.f32 %v5435, %v5468
        %v5475 = vadd.f32 %v5436, %v5468
        %v5476 = vadd.f32 %v5437, %v5468
        %v5477 = vadd.f32 %v5438, %v5468
        %v5478 = vadd.f32 %v5439, %v5468
        %v5479 = vadd.f32 %v5440, %v5468
        %v5480 = vadd.f32 %v5441, %v5468
        %v5481 = vadd.f32 %v5442, %v5468
        %v5482 = vadd.f32 %v5443, %v5468
        %v5483 = vadd.f32 %v5444, %v5468
        %v5484 = vadd.f32 %v5445, %v5468
        %v5485 = vadd.f32 %v5446, %v5468
        %v5486 = vadd.f32 %v5447, %v5468
        %v5487 = vadd.f32 %v5448, %v5468
        %v5488 = vadd.f32 %v5449, %v5468
        %v5489 = vadd.f32 %v5450, %v5468
        %v5490 = vadd.f32 %v5451, %v5468
        %v5491 = vadd.f32 %v5452, %v5468
        %v5492 = vadd.f32 %v5453, %v5468
        %v5493 = vadd.f32 %v5454, %v5468
        %v5494 = vadd.f32 %v5455, %v5468
        %v5495 = vadd.f32 %v5456, %v5468
        %v5496 = vadd.f32 %v5457, %v5468
        %v5497 = vadd.f32 %v5458, %v5468
        %v5498 = vadd.f32 %v5459, %v5468
        %v5499 = vadd.f32 %v5460, %v5468
        %v5500 = vadd.f32 %v5461, %v5468
        %v5501 = vadd.f32 %v5462, %v5468
        %5502 = vst.msk [vmem:[%s503] sm:$0xff] %vm659, %v5470
        %5503 = vst.msk [vmem:[%s503 + $0x8] sm:$0xff] %vm659, %v5471
        %5504 = vst.msk [vmem:[%s503 + $0x10] sm:$0xff] %vm659, %v5472
        %5505 = vst.msk [vmem:[%s503 + $0x18] sm:$0xff] %vm659, %v5473
        %5506 = vst.msk [vmem:[%s503 + $0x20] sm:$0xff] %vm659, %v5474
        %5507 = vst.msk [vmem:[%s503 + $0x28] sm:$0xff] %vm659, %v5475
        %5508 = vst.msk [vmem:[%s503 + $0x30] sm:$0xff] %vm659, %v5476
        %5509 = vst.msk [vmem:[%s503 + $0x38] sm:$0xff] %vm659, %v5477
        %5510 = vst.msk [vmem:[%s503 + $0x40] sm:$0xff] %vm659, %v5478
        %5511 = vst.msk [vmem:[%s503 + $0x48] sm:$0xff] %vm659, %v5479
        %5512 = vst.msk [vmem:[%s503 + $0x50] sm:$0xff] %vm659, %v5480
        %5513 = vst.msk [vmem:[%s503 + $0x58] sm:$0xff] %vm659, %v5481
        %5514 = vst.msk [vmem:[%s503 + $0x60] sm:$0xff] %vm659, %v5482
        %5515 = vst.msk [vmem:[%s503 + $0x68] sm:$0xff] %vm659, %v5483
        %5516 = vst.msk [vmem:[%s503 + $0x70] sm:$0xff] %vm659, %v5484
        %5517 = vst.msk [vmem:[%s503 + $0x78] sm:$0xff] %vm659, %v5485
        %5518 = vst.msk [vmem:[%s503 + $0x80] sm:$0xff] %vm659, %v5486
        %5519 = vst.msk [vmem:[%s503 + $0x88] sm:$0xff] %vm659, %v5487
        %5520 = vst.msk [vmem:[%s503 + $0x90] sm:$0xff] %vm659, %v5488
        %5521 = vst.msk [vmem:[%s503 + $0x98] sm:$0xff] %vm659, %v5489
        %5522 = vst.msk [vmem:[%s503 + $0xa0] sm:$0xff] %vm659, %v5490
        %5523 = vst.msk [vmem:[%s503 + $0xa8] sm:$0xff] %vm659, %v5491
        %5524 = vst.msk [vmem:[%s503 + $0xb0] sm:$0xff] %vm659, %v5492
        %5525 = vst.msk [vmem:[%s503 + $0xb8] sm:$0xff] %vm659, %v5493
        %5526 = vst.msk [vmem:[%s503 + $0xc0] sm:$0xff] %vm659, %v5494
        %5527 = vst.msk [vmem:[%s503 + $0xc8] sm:$0xff] %vm659, %v5495
        %5528 = vst.msk [vmem:[%s503 + $0xd0] sm:$0xff] %vm659, %v5496
        %5529 = vst.msk [vmem:[%s503 + $0xd8] sm:$0xff] %vm659, %v5497
        %5530 = vst.msk [vmem:[%s503 + $0xe0] sm:$0xff] %vm659, %v5498
        %5531 = vst.msk [vmem:[%s503 + $0xe8] sm:$0xff] %vm659, %v5499
        %5532 = vst.msk [vmem:[%s503 + $0xf0] sm:$0xff] %vm659, %v5500
        %5533 = vst.msk [vmem:[%s503 + $0xf8] sm:$0xff] %vm659, %v5501
        %s5534 = sand.u32 %s350, 1
        %s5535 = scalar_lea.sflag [#allocation3], %s5534
        %s5536 = sand.u32 %s350, 1
        %s5537 = smul.addr %s5536, 256
        %s5538 = scalar_lea.vmem [#allocation2], %s5537
        // Predicated region
        $region77: #{psp_pooling.1} parent=75 // pred_check
          %p5539 = pneg %p360
        $region78: #{psp_pooling.1} parent=75 // pred_check_branch
          %5541 = sbr.rel (%p5539) target = $region80
        $region79: #{psp_pooling.1} parent=75 // pred_region
          %s5543 = ssub.s32 4096, 4096
          %5544 = vsyncadd %s5535, %s5543
          %s5545 = smul.addr %s28, 32
          %s5546 = smul.addr %s5545, 128
          %s5547 = scalar_lea.hbm %s14, %s5546
          %s5548 = sshll.u32 %s5538, 4
          %s5549 = int_to_ptr.vmem [resolvable:$true] %s5548
          %5554 = dma.vmem_to_hbm [thread:$0]  %s5549, 4096, %s5547, %s5535, 128, 128, 8
        $region80: #{psp_pooling.1} parent=75 // pred_fallthru
          _
      $region76: #{psp_pooling.1} parent=5 // pred_fallthru
        _
      %p5555 = scmp.le.s32.totalorder 2, %s23
      // Predicated region
      $region81: #{psp_pooling.1} parent=5 // pred_check
        %p5556 = pneg %p5555
      $region82: #{psp_pooling.1} parent=5 // pred_check_branch
        %5558 = sbr.rel (%p5556) target = $region84
      $region83: #{psp_pooling.1} parent=5 // pred_region
        %s5559 = ssub.s32 %s23, 2
        // Predicated region
        $region85: #{psp_pooling.1} parent=83 // pred_check
          %p5560 = pneg %p366
        $region86: #{psp_pooling.1} parent=83 // pred_check_branch
          %5562 = sbr.rel (%p5560) target = $region88
        $region87: #{psp_pooling.1} parent=83 // pred_region
          %s5563 = sand.u32 %s351, 1
          %s5564 = scalar_lea.sflag [#allocation3], %s5563
          %s5565 = sand.u32 %s351, 1
          %s5566 = smul.addr %s5565, 256
          %s5567 = scalar_lea.vmem [#allocation2], %s5566
          %5568 = dma.done %s5564, 4096
        $region88: #{psp_pooling.1} parent=83 // pred_fallthru
          _
      $region84: #{psp_pooling.1} parent=5 // pred_fallthru
        _
    $region6: #{psp_pooling.1} parent=1 // loop_footer
      %s27 = sadd.s32 1, %s23
    $region7: #{psp_pooling.1} parent=1 // loop_footer_branch
      %22 = sbr.rel target = $region3
    $region8: #{psp_pooling.1} parent=1 // loop_exit
      _
    %5569 = vsyncpa [#allocation3], 1
    %s5570 = scalar_lea.sflag [#allocation3], 1
    %5571 = vsyncpa %s5570, 1

</llo_original>
